<compile_context>
chip_gen: v5e
topology: v5e:2x2
jax: 0.10.0
libtpu: 0.0.40
codegen_flags: <defaults>
</compile_context>

<pallas_src>
import numpy as np
import jax
import jax.numpy as jnp
from jax import lax
from jax.experimental import pallas as pl
from jax.experimental.pallas import tpu as pltpu


LANE = 128


def _round_up(x, m):
    return (x + m - 1) // m * m


def _split_to_bf16_pair(x_np):
    """Exact-ish two-term bf16 split of a host matrix: x ~= hi + lo."""
    x = jnp.asarray(np.asarray(x_np, np.float32))
    hi = x.astype(jnp.bfloat16)
    lo = (x - hi.astype(jnp.float32)).astype(jnp.bfloat16)
    return hi, lo


# ---------------------------------------------------------------------------
# Constants mirroring PSDLoss1.__init__ (radial mask + 1/count) plus merged,
# lane-padded DFT matrices (torch.rfft has no Pallas primitive, so the
# onesided 2-D rfft is expressed as two MXU matmuls).
# ---------------------------------------------------------------------------
def build_constants(rows, cols):
    shift_rows = rows // 2
    wo = cols // 2 + 1
    idx = np.indices((rows, wo)) - np.array([[[shift_rows]], [[0]]])
    r = np.sqrt(idx[0] ** 2 + idx[1] ** 2).astype(int)
    r = np.fft.ifftshift(r, axes=0)
    r_max = int(r.max())
    n_radii = r_max + 1
    mask = (np.arange(n_radii)[:, None, None] == r[None]).astype(np.float64)   # (V, rows, wo)
    mask_n = 1.0 / mask.sum(axis=(1, 2))                                        # (V,)

    wo_pad = _round_up(wo, LANE)
    v_pad = _round_up(n_radii, LANE)

    # Radial binning matrix with 1/count folded in, laid out for the flattened
    # (rows * wo_pad) spectrum.  Padded frequencies / padded radii rows & cols
    # are zero, so padding never leaks into the profile.
    weights = mask * mask_n[:, None, None]                                       # (V, rows, wo)
    bin_mat = np.zeros((rows * wo_pad, v_pad), np.float64)
    for h in range(rows):
        bin_mat[h * wo_pad:h * wo_pad + wo, :n_radii] = weights[:, h, :].T

    # Merged onesided column-DFT matrix [c_re | c_im], zero padded to lanes.
    n = np.arange(cols)
    v = np.arange(wo)
    C = np.exp(-2j * np.pi * np.outer(n, v) / cols)                              # (cols, wo)
    c2 = np.zeros((cols, 2 * wo_pad), np.float64)
    c2[:, :wo] = C.real
    c2[:, wo_pad:wo_pad + wo] = C.imag

    # Merged real/imag block row-DFT matrix: [f_re; f_im] = r2 @ [a_re; a_im].
    u = np.arange(rows)
    R = np.exp(-2j * np.pi * np.outer(u, u) / rows)                              # (rows, rows)
    r2 = np.block([[R.real, -R.imag], [R.imag, R.real]])                         # (2*rows, 2*rows)

    c2_hi, c2_lo = _split_to_bf16_pair(c2)
    r2_hi, r2_lo = _split_to_bf16_pair(r2)
    bin_hi, bin_lo = _split_to_bf16_pair(bin_mat)

    return dict(
        c2_hi=c2_hi, c2_lo=c2_lo, r2_hi=r2_hi, r2_lo=r2_lo,
        bin_hi=bin_hi, bin_lo=bin_lo,
        mask=mask, mask_n=mask_n, n_radii=n_radii,
        wo=wo, wo_pad=wo_pad, v_pad=v_pad,
    )


# ---------------------------------------------------------------------------
# Fused kernel: (pred, target) image blocks -> per-step partial SSE of the
# min/max-normalized radial PSD profiles.
# ---------------------------------------------------------------------------
def _make_kernel(TB, TBP, H, W, wo, wo_pad, n_radii, v_pad, eps):
    HWp = H * wo_pad
    log_eps = float(np.log(eps))
    inv_valid = 1.0 / float(TB * H * wo)
    pad_lanes = float(TB * H * (wo_pad - wo))

    def split(x):
        hi = x.astype(jnp.bfloat16)
        lo = (x - hi.astype(jnp.float32)).astype(jnp.bfloat16)
        return hi, lo

    def dot3(a_hi, a_lo, b_hi, b_lo):
        # 3-pass bf16 emulation of an f32 matmul (drops the tiny lo*lo term).
        acc = jnp.dot(a_hi, b_hi, preferred_element_type=jnp.float32)
        acc = acc + jnp.dot(a_lo, b_hi, preferred_element_type=jnp.float32)
        acc = acc + jnp.dot(a_hi, b_lo, preferred_element_type=jnp.float32)
        return acc

    def kernel(pred_ref, targ_ref, c2h_ref, c2l_ref, r2h_ref, r2l_ref,
               binh_ref, binl_ref, o_ref,
               gray_ref, stacked_ref, la_ref, flat_ref):
        c2h = c2h_ref[...]
        c2l = c2l_ref[...]
        r2h = r2h_ref[...]
        r2l = r2l_ref[...]
        binh = binh_ref[...]
        binl = binl_ref[...]
        valid = lax.broadcasted_iota(jnp.int32, (TBP, v_pad), 1) < n_radii

        # Padding rows of the binning matmul stay exactly zero -> their
        # profiles and diffs are exactly zero (no NaN, no loss pollution).
        if TBP > TB:
            flat_ref[TB:TBP, :] = jnp.zeros((TBP - TB, HWp), jnp.float32)

        def profiles(x_ref):
            # Grayscale for all TB images, laid out (TB*H, W) so the column
            # DFT is ONE batched MXU matmul.
            for b in range(TB):
                gray_ref[b * H:(b + 1) * H, :] = (
                    0.299 * x_ref[b, 0] + 0.587 * x_ref[b, 1] + 0.114 * x_ref[b, 2])
            g_hi, g_lo = split(gray_ref[...])
            a = dot3(g_hi, g_lo, c2h, c2l)                     # (TB*H, 2*wo_pad)

            # Scatter per-image [re ; im] blocks into the lane-batched layout
            # (2H, TB*wo_pad) with dense, tile-aligned stores (no concat).
            for b in range(TB):
                col = b * wo_pad
                stacked_ref[0:H, col:col + wo_pad] = a[b * H:(b + 1) * H, 0:wo_pad]
                stacked_ref[H:2 * H, col:col + wo_pad] = (
                    a[b * H:(b + 1) * H, wo_pad:2 * wo_pad])
            s_hi, s_lo = split(stacked_ref[...])
            # Row DFT for all TB images in one matmul (weights pushed once,
            # N = TB*wo_pad fills the MXU).
            f = dot3(r2h, r2l, s_hi, s_lo)                     # (2H, TB*wo_pad)

            power = f[0:H, :] * f[0:H, :] + f[H:2 * H, :] * f[H:2 * H, :] + eps
            # 20*log(.) -> log(.): min/max normalization is scale invariant.
            la = jnp.log(power)                                # (H, TB*wo_pad)
            # Mean-center (shift invariant under min/max norm) so the bf16
            # operands of the binning matmul carry small values.  Padded
            # lanes hold exactly log(eps) -> correct them out of the sum.
            la_mean = (jnp.sum(la) - pad_lanes * log_eps) * inv_valid
            la = la - la_mean
            la_ref[...] = la

            # Relayout to per-image flat rows (TBP, H*wo_pad) for the binning
            # matmul.  TODO(synk): lane-dense 8-row relayout for H >= 64.
            if H * TB <= 512:
                for b in range(TB):
                    col = b * wo_pad
                    for h in range(H):
                        flat_ref[b:b + 1, h * wo_pad:(h + 1) * wo_pad] = (
                            la_ref[h:h + 1, col:col + wo_pad])
            else:
                for b in range(TB):
                    col = b * wo_pad

                    def copy_row(h, carry, _b=b, _col=col):
                        off = pl.multiple_of(h * wo_pad, LANE)
                        flat_ref[pl.ds(_b, 1), pl.ds(off, wo_pad)] = (
                            la_ref[pl.ds(h, 1), pl.ds(_col, wo_pad)])
                        return carry

                    lax.fori_loop(0, H, copy_row, 0)

            flat = flat_ref[...].astype(jnp.bfloat16)
            # Radial binning: bin matrix pre-split to bf16 hi/lo (2 passes).
            # Padded radii columns are zero -> padded profile entries are 0.
            prof = (jnp.dot(flat, binh, preferred_element_type=jnp.float32)
                    + jnp.dot(flat, binl, preferred_element_type=jnp.float32))

            big = jnp.float32(3.0e38)
            pmin = jnp.min(jnp.where(valid, prof, big), axis=1, keepdims=True)
            shifted = prof - pmin
            pmax = jnp.max(jnp.where(valid, shifted, -big), axis=1, keepdims=True)
            pmax = jnp.maximum(pmax, jnp.float32(1e-30))       # degenerate-profile guard
            return jnp.where(valid, shifted / pmax, 0.0)

        p = profiles(pred_ref)
        t = profiles(targ_ref)
        d = p - t
        sse = jnp.sum(d * d)
        o_ref[...] = jnp.broadcast_to(sse, (1, 8, LANE))

    return kernel


def _vmem_estimate(tb, tbp, H, W, wo_pad, v_pad):
    f32 = 4
    img = 2 * 2 * tb * 3 * H * W * f32                                    # pred+target, dbl-buf
    consts = 2 * 2 * 2 * (W * 2 * wo_pad + (2 * H) * (2 * H)
                          + H * wo_pad * v_pad)                           # bf16 hi+lo, dbl-buf
    scratch = (tb * H * W + 2 * H * tb * wo_pad + H * tb * wo_pad
               + tbp * H * wo_pad) * f32
    temps = (3 * tb * H * 2 * wo_pad + 4 * 2 * H * tb * wo_pad
             + 2 * tbp * H * wo_pad) * f32
    return img + consts + scratch + temps + (2 << 20)


def psd_loss1(pred, target, consts, eps=1e-8):
    """Forward of PSDLoss1 with default flags (is_avg=is_thre=is_filter=False)."""
    B, C, H, W = pred.shape
    assert C == 3, "grayscale path of PSDLoss1 expects 3-channel input"
    assert H % 8 == 0 and H % 2 == 0 and W % 2 == 0
    wo, wo_pad = consts["wo"], consts["wo_pad"]
    v_pad, n_radii = consts["v_pad"], consts["n_radii"]

    try:
        cap = int(pltpu.get_tpu_info().vmem_capacity_bytes)
    except Exception:
        cap = 64 * 1024 * 1024
    budget = int(cap * 0.55)

    # Largest divisor of B fitting the VMEM budget, with >= 2 grid steps so
    # the "parallel" batch axis can shard across both v7x TensorCores.
    TB = 1
    for tb in range(1, min(B, 32) + 1):
        if B % tb:
            continue
        if B >= 2 and (B // tb) < 2:
            continue
        if _vmem_estimate(tb, max(tb, 8), H, W, wo_pad, v_pad) <= budget:
            TB = tb
    TBP = max(TB, 8)                 # pad the binning-matmul M dim (zero rows are inert)
    nsteps = B // TB

    est = _vmem_estimate(TB, TBP, H, W, wo_pad, v_pad)
    vmem_limit = int(min(cap * 0.9, max(32 << 20, 2 * est)))

    kernel = _make_kernel(TB, TBP, H, W, wo, wo_pad, n_radii, v_pad, eps)
    part = pl.pallas_call(
        kernel,
        out_shape=jax.ShapeDtypeStruct((nsteps, 8, LANE), jnp.float32),
        grid=(nsteps,),
        in_specs=[
            pl.BlockSpec((TB, 3, H, W), lambda i: (i, 0, 0, 0)),
            pl.BlockSpec((TB, 3, H, W), lambda i: (i, 0, 0, 0)),
            pl.BlockSpec((W, 2 * wo_pad), lambda i: (0, 0)),
            pl.BlockSpec((W, 2 * wo_pad), lambda i: (0, 0)),
            pl.BlockSpec((2 * H, 2 * H), lambda i: (0, 0)),
            pl.BlockSpec((2 * H, 2 * H), lambda i: (0, 0)),
            pl.BlockSpec((H * wo_pad, v_pad), lambda i: (0, 0)),
            pl.BlockSpec((H * wo_pad, v_pad), lambda i: (0, 0)),
        ],
        out_specs=pl.BlockSpec((1, 8, LANE), lambda i: (i, 0, 0)),
        scratch_shapes=[
            pltpu.VMEM((TB * H, W), jnp.float32),            # grayscale slab
            pltpu.VMEM((2 * H, TB * wo_pad), jnp.float32),   # lane-batched [re; im]
            pltpu.VMEM((H, TB * wo_pad), jnp.float32),       # centered log spectrum
            pltpu.VMEM((TBP, H * wo_pad), jnp.float32),      # per-image flat rows
        ],
        compiler_params=pltpu.CompilerParams(
            dimension_semantics=("parallel",),
            vmem_limit_bytes=vmem_limit),
    )(pred, target,
      consts["c2_hi"], consts["c2_lo"],
      consts["r2_hi"], consts["r2_lo"],
      consts["bin_hi"], consts["bin_lo"])
    return jnp.sum(part[:, 0, 0]) / float(B * n_radii)


# ---------------------------------------------------------------------------
# Pure numpy (float64) reference of the PyTorch forward, for verification.
# ---------------------------------------------------------------------------
def reference_loss_np(pred, target, mask, mask_n, eps):
    pred = np.asarray(pred, np.float64)
    target = np.asarray(target, np.float64)

    def profile(x):
        gray = 0.299 * x[:, 0] + 0.587 * x[:, 1] + 0.114 * x[:, 2]
        F = np.fft.rfft2(gray)                      # onesided, unnormalized
        la = 20.0 * np.log(np.abs(F) ** 2 + eps)
        prof = np.einsum("bij,kij->bk", la, mask) * mask_n[None]
        prof = prof - prof.min(axis=1, keepdims=True)
        prof = prof / prof.max(axis=1, keepdims=True)
        return prof

    d = profile(pred) - profile(target)
    return np.mean(d * d)


if __name__ == "__main__":
    B, C, H, W = 2, 3, 16, 16
    key = jax.random.PRNGKey(0)
    kp, kt = jax.random.split(key)
    pred = jax.random.normal(kp, (B, C, H, W), dtype=jnp.float32)
    target = jax.random.normal(kt, (B, C, H, W), dtype=jnp.float32)

    consts = build_constants(H, W)
    loss_fn = jax.jit(lambda p, t: psd_loss1(p, t, consts, eps=1e-8))
    loss = jax.block_until_ready(loss_fn(pred, target))

    ref = reference_loss_np(np.asarray(pred), np.asarray(target),
                            consts["mask"], consts["mask_n"], 1e-8)
    assert np.isfinite(float(loss))
    np.testing.assert_allclose(float(loss), float(ref), rtol=2e-2, atol=1e-4)
    print("KERNEL_OK")
</pallas_src>

<mosaic_0001>
module attributes {stable_mosaic.version = 11 : i64} {
  func.func @kernel(%arg0: i32, %arg1: memref<1x3x16x16xf32, #tpu.memory_space<vmem>>, %arg2: memref<1x3x16x16xf32, #tpu.memory_space<vmem>>, %arg3: memref<16x256xbf16, #tpu.memory_space<vmem>>, %arg4: memref<16x256xbf16, #tpu.memory_space<vmem>>, %arg5: memref<32x32xbf16, #tpu.memory_space<vmem>>, %arg6: memref<32x32xbf16, #tpu.memory_space<vmem>>, %arg7: memref<2048x128xbf16, #tpu.memory_space<vmem>>, %arg8: memref<2048x128xbf16, #tpu.memory_space<vmem>>, %arg9: memref<1x8x128xf32, #tpu.memory_space<vmem>>, %arg10: memref<16x16xf32, #tpu.memory_space<vmem>>, %arg11: memref<32x128xf32, #tpu.memory_space<vmem>>, %arg12: memref<16x128xf32, #tpu.memory_space<vmem>>, %arg13: memref<8x2048xf32, #tpu.memory_space<vmem>>) attributes {dimension_semantics = [#tpu.dimension_semantics<parallel>], iteration_bounds = array<i64: 2>, scalar_prefetch = 0 : i64, scratch_operands = 4 : i64, tpu.core_type = #tpu.core_type<tc>, window_params = [{transform_indices = @transform_0, window_bounds = array<i64: 1, 3, 16, 16>}, {transform_indices = @transform_1, window_bounds = array<i64: 1, 3, 16, 16>}, {pipeline_mode = #tpu.pipeline_mode<synchronous>, transform_indices = @transform_2, window_bounds = array<i64: 16, 256>}, {pipeline_mode = #tpu.pipeline_mode<synchronous>, transform_indices = @transform_3, window_bounds = array<i64: 16, 256>}, {pipeline_mode = #tpu.pipeline_mode<synchronous>, transform_indices = @transform_4, window_bounds = array<i64: 32, 32>}, {pipeline_mode = #tpu.pipeline_mode<synchronous>, transform_indices = @transform_5, window_bounds = array<i64: 32, 32>}, {pipeline_mode = #tpu.pipeline_mode<synchronous>, transform_indices = @transform_6, window_bounds = array<i64: 2048, 128>}, {pipeline_mode = #tpu.pipeline_mode<synchronous>, transform_indices = @transform_7, window_bounds = array<i64: 2048, 128>}, {transform_indices = @transform_8, window_bounds = array<i64: 1, 8, 128>}]} {
    %c0 = arith.constant 0 : index
    %c0_0 = arith.constant 0 : index
    %0 = vector.load %arg3[%c0, %c0_0] : memref<16x256xbf16, #tpu.memory_space<vmem>>, vector<16x256xbf16>
    %c0_1 = arith.constant 0 : index
    %c0_2 = arith.constant 0 : index
    %1 = vector.load %arg4[%c0_1, %c0_2] : memref<16x256xbf16, #tpu.memory_space<vmem>>, vector<16x256xbf16>
    %c0_3 = arith.constant 0 : index
    %c0_4 = arith.constant 0 : index
    %2 = vector.load %arg5[%c0_3, %c0_4] : memref<32x32xbf16, #tpu.memory_space<vmem>>, vector<32x32xbf16>
    %c0_5 = arith.constant 0 : index
    %c0_6 = arith.constant 0 : index
    %3 = vector.load %arg6[%c0_5, %c0_6] : memref<32x32xbf16, #tpu.memory_space<vmem>>, vector<32x32xbf16>
    %c0_7 = arith.constant 0 : index
    %c0_8 = arith.constant 0 : index
    %4 = vector.load %arg7[%c0_7, %c0_8] : memref<2048x128xbf16, #tpu.memory_space<vmem>>, vector<2048x128xbf16>
    %c0_9 = arith.constant 0 : index
    %c0_10 = arith.constant 0 : index
    %5 = vector.load %arg8[%c0_9, %c0_10] : memref<2048x128xbf16, #tpu.memory_space<vmem>>, vector<2048x128xbf16>
    %6 = tpu.iota {dimensions = array<i32: 1>} : vector<8x128xi32>
    %c12_i32 = arith.constant 12 : i32
    %7 = vector.broadcast %c12_i32 : i32 to vector<8x128xi32>
    %8 = arith.cmpi slt, %6, %7 : vector<8x128xi32>
    %cst = arith.constant 0.000000e+00 : f32
    %9 = vector.broadcast %cst : f32 to vector<7x2048xf32>
    %c1 = arith.constant 1 : index
    %c0_11 = arith.constant 0 : index
    %10 = vector.load %arg13[%c1, %c0_11] : memref<8x2048xf32, #tpu.memory_space<vmem>>, vector<7x2048xf32>
    tpu.vector_store %arg13[%c1, %c0_11], %9 {strides = array<i32>} : memref<8x2048xf32, #tpu.memory_space<vmem>>, vector<7x2048xf32>,
    %c0_12 = arith.constant 0 : index
    %c0_13 = arith.constant 0 : index
    %c0_14 = arith.constant 0 : index
    %c0_15 = arith.constant 0 : index
    %11 = vector.load %arg1[%c0_12, %c0_13, %c0_14, %c0_15] : memref<1x3x16x16xf32, #tpu.memory_space<vmem>>, vector<1x1x16x16xf32>
    %12 = vector.shape_cast %11 : vector<1x1x16x16xf32> to vector<16x16xf32>
    %cst_16 = arith.constant 2.990000e-01 : f32
    %13 = vector.broadcast %cst_16 : f32 to vector<16x16xf32>
    %14 = arith.mulf %13, %12 : vector<16x16xf32>
    %c0_17 = arith.constant 0 : index
    %c1_18 = arith.constant 1 : index
    %c0_19 = arith.constant 0 : index
    %c0_20 = arith.constant 0 : index
    %15 = vector.load %arg1[%c0_17, %c1_18, %c0_19, %c0_20] : memref<1x3x16x16xf32, #tpu.memory_space<vmem>>, vector<1x1x16x16xf32>
    %16 = vector.shape_cast %15 : vector<1x1x16x16xf32> to vector<16x16xf32>
    %cst_21 = arith.constant 5.870000e-01 : f32
    %17 = vector.broadcast %cst_21 : f32 to vector<16x16xf32>
    %18 = arith.mulf %17, %16 : vector<16x16xf32>
    %19 = arith.addf %14, %18 : vector<16x16xf32>
    %c0_22 = arith.constant 0 : index
    %c2 = arith.constant 2 : index
    %c0_23 = arith.constant 0 : index
    %c0_24 = arith.constant 0 : index
    %20 = vector.load %arg1[%c0_22, %c2, %c0_23, %c0_24] : memref<1x3x16x16xf32, #tpu.memory_space<vmem>>, vector<1x1x16x16xf32>
    %21 = vector.shape_cast %20 : vector<1x1x16x16xf32> to vector<16x16xf32>
    %cst_25 = arith.constant 1.140000e-01 : f32
    %22 = vector.broadcast %cst_25 : f32 to vector<16x16xf32>
    %23 = arith.mulf %22, %21 : vector<16x16xf32>
    %24 = arith.addf %19, %23 : vector<16x16xf32>
    %c0_26 = arith.constant 0 : index
    %c0_27 = arith.constant 0 : index
    %25 = vector.load %arg10[%c0_26, %c0_27] : memref<16x16xf32, #tpu.memory_space<vmem>>, vector<16x16xf32>
    tpu.vector_store %arg10[%c0_26, %c0_27], %24 {strides = array<i32>} : memref<16x16xf32, #tpu.memory_space<vmem>>, vector<16x16xf32>,
    %c0_28 = arith.constant 0 : index
    %c0_29 = arith.constant 0 : index
    %26 = vector.load %arg10[%c0_28, %c0_29] : memref<16x16xf32, #tpu.memory_space<vmem>>, vector<16x16xf32>
    %27 = arith.truncf %26 : vector<16x16xf32> to vector<16x16xbf16>
    %28 = arith.extf %27 : vector<16x16xbf16> to vector<16x16xf32>
    %29 = arith.subf %26, %28 : vector<16x16xf32>
    %30 = arith.truncf %29 : vector<16x16xf32> to vector<16x16xbf16>
    %cst_30 = arith.constant dense<0.000000e+00> : vector<16x256xf32>
    %31 = tpu.matmul %27, %0, %cst_30 {dimension_numbers = #tpu.dot_dimension_numbers<[1], [0], [0], [1], [0, 0, 1, 1], [], []>} : vector<16x16xbf16>, vector<16x256xbf16>, vector<16x256xf32> -> vector<16x256xf32>
    %cst_31 = arith.constant dense<0.000000e+00> : vector<16x256xf32>
    %32 = tpu.matmul %30, %0, %cst_31 {dimension_numbers = #tpu.dot_dimension_numbers<[1], [0], [0], [1], [0, 0, 1, 1], [], []>} : vector<16x16xbf16>, vector<16x256xbf16>, vector<16x256xf32> -> vector<16x256xf32>
    %33 = arith.addf %31, %32 : vector<16x256xf32>
    %cst_32 = arith.constant dense<0.000000e+00> : vector<16x256xf32>
    %34 = tpu.matmul %27, %1, %cst_32 {dimension_numbers = #tpu.dot_dimension_numbers<[1], [0], [0], [1], [0, 0, 1, 1], [], []>} : vector<16x16xbf16>, vector<16x256xbf16>, vector<16x256xf32> -> vector<16x256xf32>
    %35 = arith.addf %33, %34 : vector<16x256xf32>
    %36 = vector.extract_strided_slice %35 {offsets = [0, 0], sizes = [16, 128], strides = [1, 1]} : vector<16x256xf32> to vector<16x128xf32>
    %c0_33 = arith.constant 0 : index
    %c0_34 = arith.constant 0 : index
    %37 = vector.load %arg11[%c0_33, %c0_34] : memref<32x128xf32, #tpu.memory_space<vmem>>, vector<16x128xf32>
    tpu.vector_store %arg11[%c0_33, %c0_34], %36 {strides = array<i32>} : memref<32x128xf32, #tpu.memory_space<vmem>>, vector<16x128xf32>,
    %38 = vector.extract_strided_slice %35 {offsets = [0, 128], sizes = [16, 128], strides = [1, 1]} : vector<16x256xf32> to vector<16x128xf32>
    %c16 = arith.constant 16 : index
    %c0_35 = arith.constant 0 : index
    %39 = vector.load %arg11[%c16, %c0_35] : memref<32x128xf32, #tpu.memory_space<vmem>>, vector<16x128xf32>
    tpu.vector_store %arg11[%c16, %c0_35], %38 {strides = array<i32>} : memref<32x128xf32, #tpu.memory_space<vmem>>, vector<16x128xf32>,
    %c0_36 = arith.constant 0 : index
    %c0_37 = arith.constant 0 : index
    %40 = vector.load %arg11[%c0_36, %c0_37] : memref<32x128xf32, #tpu.memory_space<vmem>>, vector<32x128xf32>
    %41 = arith.truncf %40 : vector<32x128xf32> to vector<32x128xbf16>
    %42 = arith.extf %41 : vector<32x128xbf16> to vector<32x128xf32>
    %43 = arith.subf %40, %42 : vector<32x128xf32>
    %44 = arith.truncf %43 : vector<32x128xf32> to vector<32x128xbf16>
    %cst_38 = arith.constant dense<0.000000e+00> : vector<32x128xf32>
    %45 = tpu.matmul %2, %41, %cst_38 {dimension_numbers = #tpu.dot_dimension_numbers<[1], [0], [0], [1], [0, 0, 1, 1], [], []>} : vector<32x32xbf16>, vector<32x128xbf16>, vector<32x128xf32> -> vector<32x128xf32>
    %cst_39 = arith.constant dense<0.000000e+00> : vector<32x128xf32>
    %46 = tpu.matmul %3, %41, %cst_39 {dimension_numbers = #tpu.dot_dimension_numbers<[1], [0], [0], [1], [0, 0, 1, 1], [], []>} : vector<32x32xbf16>, vector<32x128xbf16>, vector<32x128xf32> -> vector<32x128xf32>
    %47 = arith.addf %45, %46 : vector<32x128xf32>
    %cst_40 = arith.constant dense<0.000000e+00> : vector<32x128xf32>
    %48 = tpu.matmul %2, %44, %cst_40 {dimension_numbers = #tpu.dot_dimension_numbers<[1], [0], [0], [1], [0, 0, 1, 1], [], []>} : vector<32x32xbf16>, vector<32x128xbf16>, vector<32x128xf32> -> vector<32x128xf32>
    %49 = arith.addf %47, %48 : vector<32x128xf32>
    %50 = vector.extract_strided_slice %49 {offsets = [0, 0], sizes = [16, 128], strides = [1, 1]} : vector<32x128xf32> to vector<16x128xf32>
    %51 = vector.extract_strided_slice %49 {offsets = [0, 0], sizes = [16, 128], strides = [1, 1]} : vector<32x128xf32> to vector<16x128xf32>
    %52 = arith.mulf %50, %51 : vector<16x128xf32>
    %53 = vector.extract_strided_slice %49 {offsets = [16, 0], sizes = [16, 128], strides = [1, 1]} : vector<32x128xf32> to vector<16x128xf32>
    %54 = vector.extract_strided_slice %49 {offsets = [16, 0], sizes = [16, 128], strides = [1, 1]} : vector<32x128xf32> to vector<16x128xf32>
    %55 = arith.mulf %53, %54 : vector<16x128xf32>
    %56 = arith.addf %52, %55 : vector<16x128xf32>
    %cst_41 = arith.constant 9.99999993E-9 : f32
    %57 = vector.broadcast %cst_41 : f32 to vector<16x128xf32>
    %58 = arith.addf %56, %57 : vector<16x128xf32>
    %59 = math.log %58 : vector<16x128xf32>
    %60 = vector.shape_cast %59 : vector<16x128xf32> to vector<1x16x128xf32>
    %cst_42 = arith.constant dense<0.000000e+00> : vector<1xf32>
    %61 = vector.multi_reduction <add>, %60, %cst_42 [1, 2] : vector<1x16x128xf32> to vector<1xf32>
    %62 = vector.shape_cast %61 : vector<1xf32> to vector<1x1x1xf32>
    %63 = vector.extract %62[0, 0, 0] : f32 from vector<1x1x1xf32>
    %cst_43 = arith.constant -35072.9766 : f32
    %64 = arith.subf %63, %cst_43 : f32
    %cst_44 = arith.constant 0.0069444445 : f32
    %65 = arith.mulf %64, %cst_44 : f32
    %66 = vector.broadcast %65 : f32 to vector<16x128xf32>
    %67 = arith.subf %59, %66 : vector<16x128xf32>
    %c0_45 = arith.constant 0 : index
    %c0_46 = arith.constant 0 : index
    %68 = vector.load %arg12[%c0_45, %c0_46] : memref<16x128xf32, #tpu.memory_space<vmem>>, vector<16x128xf32>
    tpu.vector_store %arg12[%c0_45, %c0_46], %67 {strides = array<i32>} : memref<16x128xf32, #tpu.memory_space<vmem>>, vector<16x128xf32>,
    %c0_47 = arith.constant 0 : index
    %c0_48 = arith.constant 0 : index
    %69 = vector.load %arg12[%c0_47, %c0_48] : memref<16x128xf32, #tpu.memory_space<vmem>>, vector<1x128xf32>
    %c0_49 = arith.constant 0 : index
    %c0_50 = arith.constant 0 : index
    %70 = vector.load %arg13[%c0_49, %c0_50] : memref<8x2048xf32, #tpu.memory_space<vmem>>, vector<1x128xf32>
    tpu.vector_store %arg13[%c0_49, %c0_50], %69 {strides = array<i32>} : memref<8x2048xf32, #tpu.memory_space<vmem>>, vector<1x128xf32>,
    %c1_51 = arith.constant 1 : index
    %c0_52 = arith.constant 0 : index
    %71 = vector.load %arg12[%c1_51, %c0_52] : memref<16x128xf32, #tpu.memory_space<vmem>>, vector<1x128xf32>
    %c0_53 = arith.constant 0 : index
    %c128 = arith.constant 128 : index
    %72 = vector.load %arg13[%c0_53, %c128] : memref<8x2048xf32, #tpu.memory_space<vmem>>, vector<1x128xf32>
    tpu.vector_store %arg13[%c0_53, %c128], %71 {strides = array<i32>} : memref<8x2048xf32, #tpu.memory_space<vmem>>, vector<1x128xf32>,
    %c2_54 = arith.constant 2 : index
    %c0_55 = arith.constant 0 : index
    %73 = vector.load %arg12[%c2_54, %c0_55] : memref<16x128xf32, #tpu.memory_space<vmem>>, vector<1x128xf32>
    %c0_56 = arith.constant 0 : index
    %c256 = arith.constant 256 : index
    %74 = vector.load %arg13[%c0_56, %c256] : memref<8x2048xf32, #tpu.memory_space<vmem>>, vector<1x128xf32>
    tpu.vector_store %arg13[%c0_56, %c256], %73 {strides = array<i32>} : memref<8x2048xf32, #tpu.memory_space<vmem>>, vector<1x128xf32>,
    %c3 = arith.constant 3 : index
    %c0_57 = arith.constant 0 : index
    %75 = vector.load %arg12[%c3, %c0_57] : memref<16x128xf32, #tpu.memory_space<vmem>>, vector<1x128xf32>
    %c0_58 = arith.constant 0 : index
    %c384 = arith.constant 384 : index
    %76 = vector.load %arg13[%c0_58, %c384] : memref<8x2048xf32, #tpu.memory_space<vmem>>, vector<1x128xf32>
    tpu.vector_store %arg13[%c0_58, %c384], %75 {strides = array<i32>} : memref<8x2048xf32, #tpu.memory_space<vmem>>, vector<1x128xf32>,
    %c4 = arith.constant 4 : index
    %c0_59 = arith.constant 0 : index
    %77 = vector.load %arg12[%c4, %c0_59] : memref<16x128xf32, #tpu.memory_space<vmem>>, vector<1x128xf32>
    %c0_60 = arith.constant 0 : index
    %c512 = arith.constant 512 : index
    %78 = vector.load %arg13[%c0_60, %c512] : memref<8x2048xf32, #tpu.memory_space<vmem>>, vector<1x128xf32>
    tpu.vector_store %arg13[%c0_60, %c512], %77 {strides = array<i32>} : memref<8x2048xf32, #tpu.memory_space<vmem>>, vector<1x128xf32>,
    %c5 = arith.constant 5 : index
    %c0_61 = arith.constant 0 : index
    %79 = vector.load %arg12[%c5, %c0_61] : memref<16x128xf32, #tpu.memory_space<vmem>>, vector<1x128xf32>
    %c0_62 = arith.constant 0 : index
    %c640 = arith.constant 640 : index
    %80 = vector.load %arg13[%c0_62, %c640] : memref<8x2048xf32, #tpu.memory_space<vmem>>, vector<1x128xf32>
    tpu.vector_store %arg13[%c0_62, %c640], %79 {strides = array<i32>} : memref<8x2048xf32, #tpu.memory_space<vmem>>, vector<1x128xf32>,
    %c6 = arith.constant 6 : index
    %c0_63 = arith.constant 0 : index
    %81 = vector.load %arg12[%c6, %c0_63] : memref<16x128xf32, #tpu.memory_space<vmem>>, vector<1x128xf32>
    %c0_64 = arith.constant 0 : index
    %c768 = arith.constant 768 : index
    %82 = vector.load %arg13[%c0_64, %c768] : memref<8x2048xf32, #tpu.memory_space<vmem>>, vector<1x128xf32>
    tpu.vector_store %arg13[%c0_64, %c768], %81 {strides = array<i32>} : memref<8x2048xf32, #tpu.memory_space<vmem>>, vector<1x128xf32>,
    %c7 = arith.constant 7 : index
    %c0_65 = arith.constant 0 : index
    %83 = vector.load %arg12[%c7, %c0_65] : memref<16x128xf32, #tpu.memory_space<vmem>>, vector<1x128xf32>
    %c0_66 = arith.constant 0 : index
    %c896 = arith.constant 896 : index
    %84 = vector.load %arg13[%c0_66, %c896] : memref<8x2048xf32, #tpu.memory_space<vmem>>, vector<1x128xf32>
    tpu.vector_store %arg13[%c0_66, %c896], %83 {strides = array<i32>} : memref<8x2048xf32, #tpu.memory_space<vmem>>, vector<1x128xf32>,
    %c8 = arith.constant 8 : index
    %c0_67 = arith.constant 0 : index
    %85 = vector.load %arg12[%c8, %c0_67] : memref<16x128xf32, #tpu.memory_space<vmem>>, vector<1x128xf32>
    %c0_68 = arith.constant 0 : index
    %c1024 = arith.constant 1024 : index
    %86 = vector.load %arg13[%c0_68, %c1024] : memref<8x2048xf32, #tpu.memory_space<vmem>>, vector<1x128xf32>
    tpu.vector_store %arg13[%c0_68, %c1024], %85 {strides = array<i32>} : memref<8x2048xf32, #tpu.memory_space<vmem>>, vector<1x128xf32>,
    %c9 = arith.constant 9 : index
    %c0_69 = arith.constant 0 : index
    %87 = vector.load %arg12[%c9, %c0_69] : memref<16x128xf32, #tpu.memory_space<vmem>>, vector<1x128xf32>
    %c0_70 = arith.constant 0 : index
    %c1152 = arith.constant 1152 : index
    %88 = vector.load %arg13[%c0_70, %c1152] : memref<8x2048xf32, #tpu.memory_space<vmem>>, vector<1x128xf32>
    tpu.vector_store %arg13[%c0_70, %c1152], %87 {strides = array<i32>} : memref<8x2048xf32, #tpu.memory_space<vmem>>, vector<1x128xf32>,
    %c10 = arith.constant 10 : index
    %c0_71 = arith.constant 0 : index
    %89 = vector.load %arg12[%c10, %c0_71] : memref<16x128xf32, #tpu.memory_space<vmem>>, vector<1x128xf32>
    %c0_72 = arith.constant 0 : index
    %c1280 = arith.constant 1280 : index
    %90 = vector.load %arg13[%c0_72, %c1280] : memref<8x2048xf32, #tpu.memory_space<vmem>>, vector<1x128xf32>
    tpu.vector_store %arg13[%c0_72, %c1280], %89 {strides = array<i32>} : memref<8x2048xf32, #tpu.memory_space<vmem>>, vector<1x128xf32>,
    %c11 = arith.constant 11 : index
    %c0_73 = arith.constant 0 : index
    %91 = vector.load %arg12[%c11, %c0_73] : memref<16x128xf32, #tpu.memory_space<vmem>>, vector<1x128xf32>
    %c0_74 = arith.constant 0 : index
    %c1408 = arith.constant 1408 : index
    %92 = vector.load %arg13[%c0_74, %c1408] : memref<8x2048xf32, #tpu.memory_space<vmem>>, vector<1x128xf32>
    tpu.vector_store %arg13[%c0_74, %c1408], %91 {strides = array<i32>} : memref<8x2048xf32, #tpu.memory_space<vmem>>, vector<1x128xf32>,
    %c12 = arith.constant 12 : index
    %c0_75 = arith.constant 0 : index
    %93 = vector.load %arg12[%c12, %c0_75] : memref<16x128xf32, #tpu.memory_space<vmem>>, vector<1x128xf32>
    %c0_76 = arith.constant 0 : index
    %c1536 = arith.constant 1536 : index
    %94 = vector.load %arg13[%c0_76, %c1536] : memref<8x2048xf32, #tpu.memory_space<vmem>>, vector<1x128xf32>
    tpu.vector_store %arg13[%c0_76, %c1536], %93 {strides = array<i32>} : memref<8x2048xf32, #tpu.memory_space<vmem>>, vector<1x128xf32>,
    %c13 = arith.constant 13 : index
    %c0_77 = arith.constant 0 : index
    %95 = vector.load %arg12[%c13, %c0_77] : memref<16x128xf32, #tpu.memory_space<vmem>>, vector<1x128xf32>
    %c0_78 = arith.constant 0 : index
    %c1664 = arith.constant 1664 : index
    %96 = vector.load %arg13[%c0_78, %c1664] : memref<8x2048xf32, #tpu.memory_space<vmem>>, vector<1x128xf32>
    tpu.vector_store %arg13[%c0_78, %c1664], %95 {strides = array<i32>} : memref<8x2048xf32, #tpu.memory_space<vmem>>, vector<1x128xf32>,
    %c14 = arith.constant 14 : index
    %c0_79 = arith.constant 0 : index
    %97 = vector.load %arg12[%c14, %c0_79] : memref<16x128xf32, #tpu.memory_space<vmem>>, vector<1x128xf32>
    %c0_80 = arith.constant 0 : index
    %c1792 = arith.constant 1792 : index
    %98 = vector.load %arg13[%c0_80, %c1792] : memref<8x2048xf32, #tpu.memory_space<vmem>>, vector<1x128xf32>
    tpu.vector_store %arg13[%c0_80, %c1792], %97 {strides = array<i32>} : memref<8x2048xf32, #tpu.memory_space<vmem>>, vector<1x128xf32>,
    %c15 = arith.constant 15 : index
    %c0_81 = arith.constant 0 : index
    %99 = vector.load %arg12[%c15, %c0_81] : memref<16x128xf32, #tpu.memory_space<vmem>>, vector<1x128xf32>
    %c0_82 = arith.constant 0 : index
    %c1920 = arith.constant 1920 : index
    %100 = vector.load %arg13[%c0_82, %c1920] : memref<8x2048xf32, #tpu.memory_space<vmem>>, vector<1x128xf32>
    tpu.vector_store %arg13[%c0_82, %c1920], %99 {strides = array<i32>} : memref<8x2048xf32, #tpu.memory_space<vmem>>, vector<1x128xf32>,
    %c0_83 = arith.constant 0 : index
    %c0_84 = arith.constant 0 : index
    %101 = vector.load %arg13[%c0_83, %c0_84] : memref<8x2048xf32, #tpu.memory_space<vmem>>, vector<8x2048xf32>
    %102 = arith.truncf %101 : vector<8x2048xf32> to vector<8x2048xbf16>
    %cst_85 = arith.constant dense<0.000000e+00> : vector<8x128xf32>
    %103 = tpu.matmul %102, %4, %cst_85 {dimension_numbers = #tpu.dot_dimension_numbers<[1], [0], [0], [1], [0, 0, 1, 1], [], []>} : vector<8x2048xbf16>, vector<2048x128xbf16>, vector<8x128xf32> -> vector<8x128xf32>
    %cst_86 = arith.constant dense<0.000000e+00> : vector<8x128xf32>
    %104 = tpu.matmul %102, %5, %cst_86 {dimension_numbers = #tpu.dot_dimension_numbers<[1], [0], [0], [1], [0, 0, 1, 1], [], []>} : vector<8x2048xbf16>, vector<2048x128xbf16>, vector<8x128xf32> -> vector<8x128xf32>
    %105 = arith.addf %103, %104 : vector<8x128xf32>
    %cst_87 = arith.constant 3.000000e+38 : f32
    %106 = vector.broadcast %cst_87 : f32 to vector<8x128xf32>
    %107 = arith.select %8, %105, %106 : vector<8x128xi1>, vector<8x128xf32>
    %cst_88 = arith.constant dense<0x7F800000> : vector<8xf32>
    %108 = vector.multi_reduction <minimumf>, %107, %cst_88 [1] : vector<8x128xf32> to vector<8xf32>
    %109 = vector.shape_cast %108 : vector<8xf32> to vector<8x1xf32>
    %110 = vector.broadcast %109 : vector<8x1xf32> to vector<8x128xf32>
    %111 = arith.subf %105, %110 : vector<8x128xf32>
    %cst_89 = arith.constant 0.000000e+00 : f32
    %cst_90 = arith.constant 3.000000e+38 : f32
    %112 = arith.subf %cst_89, %cst_90 : f32
    %113 = vector.broadcast %112 : f32 to vector<8x128xf32>
    %114 = arith.select %8, %111, %113 : vector<8x128xi1>, vector<8x128xf32>
    %cst_91 = arith.constant dense<0xFF800000> : vector<8xf32>
    %115 = vector.multi_reduction <maximumf>, %114, %cst_91 [1] : vector<8x128xf32> to vector<8xf32>
    %116 = vector.shape_cast %115 : vector<8xf32> to vector<8x1xf32>
    %cst_92 = arith.constant 1.000000e-30 : f32
    %117 = vector.broadcast %cst_92 : f32 to vector<8x1xf32>
    %118 = arith.maximumf %116, %117 : vector<8x1xf32>
    %119 = vector.broadcast %118 : vector<8x1xf32> to vector<8x128xf32>
    %120 = arith.divf %111, %119 : vector<8x128xf32>
    %cst_93 = arith.constant 0.000000e+00 : f32
    %121 = vector.broadcast %cst_93 : f32 to vector<8x128xf32>
    %122 = arith.select %8, %120, %121 : vector<8x128xi1>, vector<8x128xf32>
    %c0_94 = arith.constant 0 : index
    %c0_95 = arith.constant 0 : index
    %c0_96 = arith.constant 0 : index
    %c0_97 = arith.constant 0 : index
    %123 = vector.load %arg2[%c0_94, %c0_95, %c0_96, %c0_97] : memref<1x3x16x16xf32, #tpu.memory_space<vmem>>, vector<1x1x16x16xf32>
    %124 = vector.shape_cast %123 : vector<1x1x16x16xf32> to vector<16x16xf32>
    %cst_98 = arith.constant 2.990000e-01 : f32
    %125 = vector.broadcast %cst_98 : f32 to vector<16x16xf32>
    %126 = arith.mulf %125, %124 : vector<16x16xf32>
    %c0_99 = arith.constant 0 : index
    %c1_100 = arith.constant 1 : index
    %c0_101 = arith.constant 0 : index
    %c0_102 = arith.constant 0 : index
    %127 = vector.load %arg2[%c0_99, %c1_100, %c0_101, %c0_102] : memref<1x3x16x16xf32, #tpu.memory_space<vmem>>, vector<1x1x16x16xf32>
    %128 = vector.shape_cast %127 : vector<1x1x16x16xf32> to vector<16x16xf32>
    %cst_103 = arith.constant 5.870000e-01 : f32
    %129 = vector.broadcast %cst_103 : f32 to vector<16x16xf32>
    %130 = arith.mulf %129, %128 : vector<16x16xf32>
    %131 = arith.addf %126, %130 : vector<16x16xf32>
    %c0_104 = arith.constant 0 : index
    %c2_105 = arith.constant 2 : index
    %c0_106 = arith.constant 0 : index
    %c0_107 = arith.constant 0 : index
    %132 = vector.load %arg2[%c0_104, %c2_105, %c0_106, %c0_107] : memref<1x3x16x16xf32, #tpu.memory_space<vmem>>, vector<1x1x16x16xf32>
    %133 = vector.shape_cast %132 : vector<1x1x16x16xf32> to vector<16x16xf32>
    %cst_108 = arith.constant 1.140000e-01 : f32
    %134 = vector.broadcast %cst_108 : f32 to vector<16x16xf32>
    %135 = arith.mulf %134, %133 : vector<16x16xf32>
    %136 = arith.addf %131, %135 : vector<16x16xf32>
    %c0_109 = arith.constant 0 : index
    %c0_110 = arith.constant 0 : index
    %137 = vector.load %arg10[%c0_109, %c0_110] : memref<16x16xf32, #tpu.memory_space<vmem>>, vector<16x16xf32>
    tpu.vector_store %arg10[%c0_109, %c0_110], %136 {strides = array<i32>} : memref<16x16xf32, #tpu.memory_space<vmem>>, vector<16x16xf32>,
    %c0_111 = arith.constant 0 : index
    %c0_112 = arith.constant 0 : index
    %138 = vector.load %arg10[%c0_111, %c0_112] : memref<16x16xf32, #tpu.memory_space<vmem>>, vector<16x16xf32>
    %139 = arith.truncf %138 : vector<16x16xf32> to vector<16x16xbf16>
    %140 = arith.extf %139 : vector<16x16xbf16> to vector<16x16xf32>
    %141 = arith.subf %138, %140 : vector<16x16xf32>
    %142 = arith.truncf %141 : vector<16x16xf32> to vector<16x16xbf16>
    %cst_113 = arith.constant dense<0.000000e+00> : vector<16x256xf32>
    %143 = tpu.matmul %139, %0, %cst_113 {dimension_numbers = #tpu.dot_dimension_numbers<[1], [0], [0], [1], [0, 0, 1, 1], [], []>} : vector<16x16xbf16>, vector<16x256xbf16>, vector<16x256xf32> -> vector<16x256xf32>
    %cst_114 = arith.constant dense<0.000000e+00> : vector<16x256xf32>
    %144 = tpu.matmul %142, %0, %cst_114 {dimension_numbers = #tpu.dot_dimension_numbers<[1], [0], [0], [1], [0, 0, 1, 1], [], []>} : vector<16x16xbf16>, vector<16x256xbf16>, vector<16x256xf32> -> vector<16x256xf32>
    %145 = arith.addf %143, %144 : vector<16x256xf32>
    %cst_115 = arith.constant dense<0.000000e+00> : vector<16x256xf32>
    %146 = tpu.matmul %139, %1, %cst_115 {dimension_numbers = #tpu.dot_dimension_numbers<[1], [0], [0], [1], [0, 0, 1, 1], [], []>} : vector<16x16xbf16>, vector<16x256xbf16>, vector<16x256xf32> -> vector<16x256xf32>
    %147 = arith.addf %145, %146 : vector<16x256xf32>
    %148 = vector.extract_strided_slice %147 {offsets = [0, 0], sizes = [16, 128], strides = [1, 1]} : vector<16x256xf32> to vector<16x128xf32>
    %c0_116 = arith.constant 0 : index
    %c0_117 = arith.constant 0 : index
    %149 = vector.load %arg11[%c0_116, %c0_117] : memref<32x128xf32, #tpu.memory_space<vmem>>, vector<16x128xf32>
    tpu.vector_store %arg11[%c0_116, %c0_117], %148 {strides = array<i32>} : memref<32x128xf32, #tpu.memory_space<vmem>>, vector<16x128xf32>,
    %150 = vector.extract_strided_slice %147 {offsets = [0, 128], sizes = [16, 128], strides = [1, 1]} : vector<16x256xf32> to vector<16x128xf32>
    %c16_118 = arith.constant 16 : index
    %c0_119 = arith.constant 0 : index
    %151 = vector.load %arg11[%c16_118, %c0_119] : memref<32x128xf32, #tpu.memory_space<vmem>>, vector<16x128xf32>
    tpu.vector_store %arg11[%c16_118, %c0_119], %150 {strides = array<i32>} : memref<32x128xf32, #tpu.memory_space<vmem>>, vector<16x128xf32>,
    %c0_120 = arith.constant 0 : index
    %c0_121 = arith.constant 0 : index
    %152 = vector.load %arg11[%c0_120, %c0_121] : memref<32x128xf32, #tpu.memory_space<vmem>>, vector<32x128xf32>
    %153 = arith.truncf %152 : vector<32x128xf32> to vector<32x128xbf16>
    %154 = arith.extf %153 : vector<32x128xbf16> to vector<32x128xf32>
    %155 = arith.subf %152, %154 : vector<32x128xf32>
    %156 = arith.truncf %155 : vector<32x128xf32> to vector<32x128xbf16>
    %cst_122 = arith.constant dense<0.000000e+00> : vector<32x128xf32>
    %157 = tpu.matmul %2, %153, %cst_122 {dimension_numbers = #tpu.dot_dimension_numbers<[1], [0], [0], [1], [0, 0, 1, 1], [], []>} : vector<32x32xbf16>, vector<32x128xbf16>, vector<32x128xf32> -> vector<32x128xf32>
    %cst_123 = arith.constant dense<0.000000e+00> : vector<32x128xf32>
    %158 = tpu.matmul %3, %153, %cst_123 {dimension_numbers = #tpu.dot_dimension_numbers<[1], [0], [0], [1], [0, 0, 1, 1], [], []>} : vector<32x32xbf16>, vector<32x128xbf16>, vector<32x128xf32> -> vector<32x128xf32>
    %159 = arith.addf %157, %158 : vector<32x128xf32>
    %cst_124 = arith.constant dense<0.000000e+00> : vector<32x128xf32>
    %160 = tpu.matmul %2, %156, %cst_124 {dimension_numbers = #tpu.dot_dimension_numbers<[1], [0], [0], [1], [0, 0, 1, 1], [], []>} : vector<32x32xbf16>, vector<32x128xbf16>, vector<32x128xf32> -> vector<32x128xf32>
    %161 = arith.addf %159, %160 : vector<32x128xf32>
    %162 = vector.extract_strided_slice %161 {offsets = [0, 0], sizes = [16, 128], strides = [1, 1]} : vector<32x128xf32> to vector<16x128xf32>
    %163 = vector.extract_strided_slice %161 {offsets = [0, 0], sizes = [16, 128], strides = [1, 1]} : vector<32x128xf32> to vector<16x128xf32>
    %164 = arith.mulf %162, %163 : vector<16x128xf32>
    %165 = vector.extract_strided_slice %161 {offsets = [16, 0], sizes = [16, 128], strides = [1, 1]} : vector<32x128xf32> to vector<16x128xf32>
    %166 = vector.extract_strided_slice %161 {offsets = [16, 0], sizes = [16, 128], strides = [1, 1]} : vector<32x128xf32> to vector<16x128xf32>
    %167 = arith.mulf %165, %166 : vector<16x128xf32>
    %168 = arith.addf %164, %167 : vector<16x128xf32>
    %cst_125 = arith.constant 9.99999993E-9 : f32
    %169 = vector.broadcast %cst_125 : f32 to vector<16x128xf32>
    %170 = arith.addf %168, %169 : vector<16x128xf32>
    %171 = math.log %170 : vector<16x128xf32>
    %172 = vector.shape_cast %171 : vector<16x128xf32> to vector<1x16x128xf32>
    %cst_126 = arith.constant dense<0.000000e+00> : vector<1xf32>
    %173 = vector.multi_reduction <add>, %172, %cst_126 [1, 2] : vector<1x16x128xf32> to vector<1xf32>
    %174 = vector.shape_cast %173 : vector<1xf32> to vector<1x1x1xf32>
    %175 = vector.extract %174[0, 0, 0] : f32 from vector<1x1x1xf32>
    %cst_127 = arith.constant -35072.9766 : f32
    %176 = arith.subf %175, %cst_127 : f32
    %cst_128 = arith.constant 0.0069444445 : f32
    %177 = arith.mulf %176, %cst_128 : f32
    %178 = vector.broadcast %177 : f32 to vector<16x128xf32>
    %179 = arith.subf %171, %178 : vector<16x128xf32>
    %c0_129 = arith.constant 0 : index
    %c0_130 = arith.constant 0 : index
    %180 = vector.load %arg12[%c0_129, %c0_130] : memref<16x128xf32, #tpu.memory_space<vmem>>, vector<16x128xf32>
    tpu.vector_store %arg12[%c0_129, %c0_130], %179 {strides = array<i32>} : memref<16x128xf32, #tpu.memory_space<vmem>>, vector<16x128xf32>,
    %c0_131 = arith.constant 0 : index
    %c0_132 = arith.constant 0 : index
    %181 = vector.load %arg12[%c0_131, %c0_132] : memref<16x128xf32, #tpu.memory_space<vmem>>, vector<1x128xf32>
    %c0_133 = arith.constant 0 : index
    %c0_134 = arith.constant 0 : index
    %182 = vector.load %arg13[%c0_133, %c0_134] : memref<8x2048xf32, #tpu.memory_space<vmem>>, vector<1x128xf32>
    tpu.vector_store %arg13[%c0_133, %c0_134], %181 {strides = array<i32>} : memref<8x2048xf32, #tpu.memory_space<vmem>>, vector<1x128xf32>,
    %c1_135 = arith.constant 1 : index
    %c0_136 = arith.constant 0 : index
    %183 = vector.load %arg12[%c1_135, %c0_136] : memref<16x128xf32, #tpu.memory_space<vmem>>, vector<1x128xf32>
    %c0_137 = arith.constant 0 : index
    %c128_138 = arith.constant 128 : index
    %184 = vector.load %arg13[%c0_137, %c128_138] : memref<8x2048xf32, #tpu.memory_space<vmem>>, vector<1x128xf32>
    tpu.vector_store %arg13[%c0_137, %c128_138], %183 {strides = array<i32>} : memref<8x2048xf32, #tpu.memory_space<vmem>>, vector<1x128xf32>,
    %c2_139 = arith.constant 2 : index
    %c0_140 = arith.constant 0 : index
    %185 = vector.load %arg12[%c2_139, %c0_140] : memref<16x128xf32, #tpu.memory_space<vmem>>, vector<1x128xf32>
    %c0_141 = arith.constant 0 : index
    %c256_142 = arith.constant 256 : index
    %186 = vector.load %arg13[%c0_141, %c256_142] : memref<8x2048xf32, #tpu.memory_space<vmem>>, vector<1x128xf32>
    tpu.vector_store %arg13[%c0_141, %c256_142], %185 {strides = array<i32>} : memref<8x2048xf32, #tpu.memory_space<vmem>>, vector<1x128xf32>,
    %c3_143 = arith.constant 3 : index
    %c0_144 = arith.constant 0 : index
    %187 = vector.load %arg12[%c3_143, %c0_144] : memref<16x128xf32, #tpu.memory_space<vmem>>, vector<1x128xf32>
    %c0_145 = arith.constant 0 : index
    %c384_146 = arith.constant 384 : index
    %188 = vector.load %arg13[%c0_145, %c384_146] : memref<8x2048xf32, #tpu.memory_space<vmem>>, vector<1x128xf32>
    tpu.vector_store %arg13[%c0_145, %c384_146], %187 {strides = array<i32>} : memref<8x2048xf32, #tpu.memory_space<vmem>>, vector<1x128xf32>,
    %c4_147 = arith.constant 4 : index
    %c0_148 = arith.constant 0 : index
    %189 = vector.load %arg12[%c4_147, %c0_148] : memref<16x128xf32, #tpu.memory_space<vmem>>, vector<1x128xf32>
    %c0_149 = arith.constant 0 : index
    %c512_150 = arith.constant 512 : index
    %190 = vector.load %arg13[%c0_149, %c512_150] : memref<8x2048xf32, #tpu.memory_space<vmem>>, vector<1x128xf32>
    tpu.vector_store %arg13[%c0_149, %c512_150], %189 {strides = array<i32>} : memref<8x2048xf32, #tpu.memory_space<vmem>>, vector<1x128xf32>,
    %c5_151 = arith.constant 5 : index
    %c0_152 = arith.constant 0 : index
    %191 = vector.load %arg12[%c5_151, %c0_152] : memref<16x128xf32, #tpu.memory_space<vmem>>, vector<1x128xf32>
    %c0_153 = arith.constant 0 : index
    %c640_154 = arith.constant 640 : index
    %192 = vector.load %arg13[%c0_153, %c640_154] : memref<8x2048xf32, #tpu.memory_space<vmem>>, vector<1x128xf32>
    tpu.vector_store %arg13[%c0_153, %c640_154], %191 {strides = array<i32>} : memref<8x2048xf32, #tpu.memory_space<vmem>>, vector<1x128xf32>,
    %c6_155 = arith.constant 6 : index
    %c0_156 = arith.constant 0 : index
    %193 = vector.load %arg12[%c6_155, %c0_156] : memref<16x128xf32, #tpu.memory_space<vmem>>, vector<1x128xf32>
    %c0_157 = arith.constant 0 : index
    %c768_158 = arith.constant 768 : index
    %194 = vector.load %arg13[%c0_157, %c768_158] : memref<8x2048xf32, #tpu.memory_space<vmem>>, vector<1x128xf32>
    tpu.vector_store %arg13[%c0_157, %c768_158], %193 {strides = array<i32>} : memref<8x2048xf32, #tpu.memory_space<vmem>>, vector<1x128xf32>,
    %c7_159 = arith.constant 7 : index
    %c0_160 = arith.constant 0 : index
    %195 = vector.load %arg12[%c7_159, %c0_160] : memref<16x128xf32, #tpu.memory_space<vmem>>, vector<1x128xf32>
    %c0_161 = arith.constant 0 : index
    %c896_162 = arith.constant 896 : index
    %196 = vector.load %arg13[%c0_161, %c896_162] : memref<8x2048xf32, #tpu.memory_space<vmem>>, vector<1x128xf32>
    tpu.vector_store %arg13[%c0_161, %c896_162], %195 {strides = array<i32>} : memref<8x2048xf32, #tpu.memory_space<vmem>>, vector<1x128xf32>,
    %c8_163 = arith.constant 8 : index
    %c0_164 = arith.constant 0 : index
    %197 = vector.load %arg12[%c8_163, %c0_164] : memref<16x128xf32, #tpu.memory_space<vmem>>, vector<1x128xf32>
    %c0_165 = arith.constant 0 : index
    %c1024_166 = arith.constant 1024 : index
    %198 = vector.load %arg13[%c0_165, %c1024_166] : memref<8x2048xf32, #tpu.memory_space<vmem>>, vector<1x128xf32>
    tpu.vector_store %arg13[%c0_165, %c1024_166], %197 {strides = array<i32>} : memref<8x2048xf32, #tpu.memory_space<vmem>>, vector<1x128xf32>,
    %c9_167 = arith.constant 9 : index
    %c0_168 = arith.constant 0 : index
    %199 = vector.load %arg12[%c9_167, %c0_168] : memref<16x128xf32, #tpu.memory_space<vmem>>, vector<1x128xf32>
    %c0_169 = arith.constant 0 : index
    %c1152_170 = arith.constant 1152 : index
    %200 = vector.load %arg13[%c0_169, %c1152_170] : memref<8x2048xf32, #tpu.memory_space<vmem>>, vector<1x128xf32>
    tpu.vector_store %arg13[%c0_169, %c1152_170], %199 {strides = array<i32>} : memref<8x2048xf32, #tpu.memory_space<vmem>>, vector<1x128xf32>,
    %c10_171 = arith.constant 10 : index
    %c0_172 = arith.constant 0 : index
    %201 = vector.load %arg12[%c10_171, %c0_172] : memref<16x128xf32, #tpu.memory_space<vmem>>, vector<1x128xf32>
    %c0_173 = arith.constant 0 : index
    %c1280_174 = arith.constant 1280 : index
    %202 = vector.load %arg13[%c0_173, %c1280_174] : memref<8x2048xf32, #tpu.memory_space<vmem>>, vector<1x128xf32>
    tpu.vector_store %arg13[%c0_173, %c1280_174], %201 {strides = array<i32>} : memref<8x2048xf32, #tpu.memory_space<vmem>>, vector<1x128xf32>,
    %c11_175 = arith.constant 11 : index
    %c0_176 = arith.constant 0 : index
    %203 = vector.load %arg12[%c11_175, %c0_176] : memref<16x128xf32, #tpu.memory_space<vmem>>, vector<1x128xf32>
    %c0_177 = arith.constant 0 : index
    %c1408_178 = arith.constant 1408 : index
    %204 = vector.load %arg13[%c0_177, %c1408_178] : memref<8x2048xf32, #tpu.memory_space<vmem>>, vector<1x128xf32>
    tpu.vector_store %arg13[%c0_177, %c1408_178], %203 {strides = array<i32>} : memref<8x2048xf32, #tpu.memory_space<vmem>>, vector<1x128xf32>,
    %c12_179 = arith.constant 12 : index
    %c0_180 = arith.constant 0 : index
    %205 = vector.load %arg12[%c12_179, %c0_180] : memref<16x128xf32, #tpu.memory_space<vmem>>, vector<1x128xf32>
    %c0_181 = arith.constant 0 : index
    %c1536_182 = arith.constant 1536 : index
    %206 = vector.load %arg13[%c0_181, %c1536_182] : memref<8x2048xf32, #tpu.memory_space<vmem>>, vector<1x128xf32>
    tpu.vector_store %arg13[%c0_181, %c1536_182], %205 {strides = array<i32>} : memref<8x2048xf32, #tpu.memory_space<vmem>>, vector<1x128xf32>,
    %c13_183 = arith.constant 13 : index
    %c0_184 = arith.constant 0 : index
    %207 = vector.load %arg12[%c13_183, %c0_184] : memref<16x128xf32, #tpu.memory_space<vmem>>, vector<1x128xf32>
    %c0_185 = arith.constant 0 : index
    %c1664_186 = arith.constant 1664 : index
    %208 = vector.load %arg13[%c0_185, %c1664_186] : memref<8x2048xf32, #tpu.memory_space<vmem>>, vector<1x128xf32>
    tpu.vector_store %arg13[%c0_185, %c1664_186], %207 {strides = array<i32>} : memref<8x2048xf32, #tpu.memory_space<vmem>>, vector<1x128xf32>,
    %c14_187 = arith.constant 14 : index
    %c0_188 = arith.constant 0 : index
    %209 = vector.load %arg12[%c14_187, %c0_188] : memref<16x128xf32, #tpu.memory_space<vmem>>, vector<1x128xf32>
    %c0_189 = arith.constant 0 : index
    %c1792_190 = arith.constant 1792 : index
    %210 = vector.load %arg13[%c0_189, %c1792_190] : memref<8x2048xf32, #tpu.memory_space<vmem>>, vector<1x128xf32>
    tpu.vector_store %arg13[%c0_189, %c1792_190], %209 {strides = array<i32>} : memref<8x2048xf32, #tpu.memory_space<vmem>>, vector<1x128xf32>,
    %c15_191 = arith.constant 15 : index
    %c0_192 = arith.constant 0 : index
    %211 = vector.load %arg12[%c15_191, %c0_192] : memref<16x128xf32, #tpu.memory_space<vmem>>, vector<1x128xf32>
    %c0_193 = arith.constant 0 : index
    %c1920_194 = arith.constant 1920 : index
    %212 = vector.load %arg13[%c0_193, %c1920_194] : memref<8x2048xf32, #tpu.memory_space<vmem>>, vector<1x128xf32>
    tpu.vector_store %arg13[%c0_193, %c1920_194], %211 {strides = array<i32>} : memref<8x2048xf32, #tpu.memory_space<vmem>>, vector<1x128xf32>,
    %c0_195 = arith.constant 0 : index
    %c0_196 = arith.constant 0 : index
    %213 = vector.load %arg13[%c0_195, %c0_196] : memref<8x2048xf32, #tpu.memory_space<vmem>>, vector<8x2048xf32>
    %214 = arith.truncf %213 : vector<8x2048xf32> to vector<8x2048xbf16>
    %cst_197 = arith.constant dense<0.000000e+00> : vector<8x128xf32>
    %215 = tpu.matmul %214, %4, %cst_197 {dimension_numbers = #tpu.dot_dimension_numbers<[1], [0], [0], [1], [0, 0, 1, 1], [], []>} : vector<8x2048xbf16>, vector<2048x128xbf16>, vector<8x128xf32> -> vector<8x128xf32>
    %cst_198 = arith.constant dense<0.000000e+00> : vector<8x128xf32>
    %216 = tpu.matmul %214, %5, %cst_198 {dimension_numbers = #tpu.dot_dimension_numbers<[1], [0], [0], [1], [0, 0, 1, 1], [], []>} : vector<8x2048xbf16>, vector<2048x128xbf16>, vector<8x128xf32> -> vector<8x128xf32>
    %217 = arith.addf %215, %216 : vector<8x128xf32>
    %cst_199 = arith.constant 3.000000e+38 : f32
    %218 = vector.broadcast %cst_199 : f32 to vector<8x128xf32>
    %219 = arith.select %8, %217, %218 : vector<8x128xi1>, vector<8x128xf32>
    %cst_200 = arith.constant dense<0x7F800000> : vector<8xf32>
    %220 = vector.multi_reduction <minimumf>, %219, %cst_200 [1] : vector<8x128xf32> to vector<8xf32>
    %221 = vector.shape_cast %220 : vector<8xf32> to vector<8x1xf32>
    %222 = vector.broadcast %221 : vector<8x1xf32> to vector<8x128xf32>
    %223 = arith.subf %217, %222 : vector<8x128xf32>
    %cst_201 = arith.constant 0.000000e+00 : f32
    %cst_202 = arith.constant 3.000000e+38 : f32
    %224 = arith.subf %cst_201, %cst_202 : f32
    %225 = vector.broadcast %224 : f32 to vector<8x128xf32>
    %226 = arith.select %8, %223, %225 : vector<8x128xi1>, vector<8x128xf32>
    %cst_203 = arith.constant dense<0xFF800000> : vector<8xf32>
    %227 = vector.multi_reduction <maximumf>, %226, %cst_203 [1] : vector<8x128xf32> to vector<8xf32>
    %228 = vector.shape_cast %227 : vector<8xf32> to vector<8x1xf32>
    %cst_204 = arith.constant 1.000000e-30 : f32
    %229 = vector.broadcast %cst_204 : f32 to vector<8x1xf32>
    %230 = arith.maximumf %228, %229 : vector<8x1xf32>
    %231 = vector.broadcast %230 : vector<8x1xf32> to vector<8x128xf32>
    %232 = arith.divf %223, %231 : vector<8x128xf32>
    %cst_205 = arith.constant 0.000000e+00 : f32
    %233 = vector.broadcast %cst_205 : f32 to vector<8x128xf32>
    %234 = arith.select %8, %232, %233 : vector<8x128xi1>, vector<8x128xf32>
    %235 = arith.subf %122, %234 : vector<8x128xf32>
    %236 = arith.mulf %235, %235 : vector<8x128xf32>
    %237 = vector.shape_cast %236 : vector<8x128xf32> to vector<1x8x128xf32>
    %cst_206 = arith.constant dense<0.000000e+00> : vector<1xf32>
    %238 = vector.multi_reduction <add>, %237, %cst_206 [1, 2] : vector<1x8x128xf32> to vector<1xf32>
    %239 = vector.shape_cast %238 : vector<1xf32> to vector<1x1x1xf32>
    %240 = vector.extract %239[0, 0, 0] : f32 from vector<1x1x1xf32>
    %241 = vector.broadcast %240 : f32 to vector<1x8x128xf32>
    %c0_207 = arith.constant 0 : index
    %c0_208 = arith.constant 0 : index
    %c0_209 = arith.constant 0 : index
    %242 = vector.load %arg9[%c0_207, %c0_208, %c0_209] : memref<1x8x128xf32, #tpu.memory_space<vmem>>, vector<1x8x128xf32>
    tpu.vector_store %arg9[%c0_207, %c0_208, %c0_209], %241 {strides = array<i32>} : memref<1x8x128xf32, #tpu.memory_space<vmem>>, vector<1x8x128xf32>,
    return
  }
  func.func @transform_0(%arg0: i32) -> (i32, i32, i32, i32) {
    %c0_i32 = arith.constant 0 : i32
    %c0_i32_0 = arith.constant 0 : i32
    %c0_i32_1 = arith.constant 0 : i32
    %c0_i32_2 = arith.constant 0 : i32
    return %arg0, %c0_i32, %c0_i32_0, %c0_i32_1 : i32, i32, i32, i32
  }
  func.func @transform_1(%arg0: i32) -> (i32, i32, i32, i32) {
    %c0_i32 = arith.constant 0 : i32
    %c0_i32_0 = arith.constant 0 : i32
    %c0_i32_1 = arith.constant 0 : i32
    %c0_i32_2 = arith.constant 0 : i32
    return %arg0, %c0_i32, %c0_i32_0, %c0_i32_1 : i32, i32, i32, i32
  }
  func.func @transform_2(%arg0: i32) -> (i32, i32) {
    %c0_i32 = arith.constant 0 : i32
    %c0_i32_0 = arith.constant 0 : i32
    %c0_i32_1 = arith.constant 0 : i32
    return %c0_i32, %c0_i32_0 : i32, i32
  }
  func.func @transform_3(%arg0: i32) -> (i32, i32) {
    %c0_i32 = arith.constant 0 : i32
    %c0_i32_0 = arith.constant 0 : i32
    %c0_i32_1 = arith.constant 0 : i32
    return %c0_i32, %c0_i32_0 : i32, i32
  }
  func.func @transform_4(%arg0: i32) -> (i32, i32) {
    %c0_i32 = arith.constant 0 : i32
    %c0_i32_0 = arith.constant 0 : i32
    %c0_i32_1 = arith.constant 0 : i32
    return %c0_i32, %c0_i32_0 : i32, i32
  }
  func.func @transform_5(%arg0: i32) -> (i32, i32) {
    %c0_i32 = arith.constant 0 : i32
    %c0_i32_0 = arith.constant 0 : i32
    %c0_i32_1 = arith.constant 0 : i32
    return %c0_i32, %c0_i32_0 : i32, i32
  }
  func.func @transform_6(%arg0: i32) -> (i32, i32) {
    %c0_i32 = arith.constant 0 : i32
    %c0_i32_0 = arith.constant 0 : i32
    %c0_i32_1 = arith.constant 0 : i32
    return %c0_i32, %c0_i32_0 : i32, i32
  }
  func.func @transform_7(%arg0: i32) -> (i32, i32) {
    %c0_i32 = arith.constant 0 : i32
    %c0_i32_0 = arith.constant 0 : i32
    %c0_i32_1 = arith.constant 0 : i32
    return %c0_i32, %c0_i32_0 : i32, i32
  }
  func.func @transform_8(%arg0: i32) -> (i32, i32, i32) {
    %c0_i32 = arith.constant 0 : i32
    %c0_i32_0 = arith.constant 0 : i32
    %c0_i32_1 = arith.constant 0 : i32
    return %arg0, %c0_i32, %c0_i32_0 : i32, i32, i32
  }
}

</mosaic_0001>

<llo_original>
// kernel: _lambda_.1
$region0: #{_lambda_.1}
  #allocation0 [shape = 'u32[]', space=smem, size = 0x4, offset = 0x4, fixed_abs, tag = 'smem constant byte address 0x4 - core index']
  #allocation1 [shape = 'u32[72,128]{1,0:T(1,128)}', space=vmem, size = 0x9000, scoped, tag = 'internal scratch']
  #allocation2 [shape = 'f32[16,16]{1,0:T(8,128)}', space=vmem, size = 0x2000, scoped, tag = 'scratch operand']
  #allocation3 [shape = 'f32[32,128]{1,0:T(8,128)}', space=vmem, size = 0x4000, scoped, tag = 'scratch operand']
  #allocation4 [shape = 'f32[16,128]{1,0:T(8,128)}', space=vmem, size = 0x2000, scoped, tag = 'scratch operand']
  #allocation5 [shape = 'f32[8,2048]{1,0:T(8,128)}', space=vmem, size = 0x10000, scoped, tag = 'scratch operand']
  %s0 = inlined_call_operand.hbm [shape: f32[2,3,16,16], index: 0, kind: input, shape index: {}]
  %s1 = inlined_call_operand.hbm [shape: f32[2,3,16,16], index: 1, kind: input, shape index: {}]
  %s2 = inlined_call_operand.hbm [shape: bf16[16,256], index: 2, kind: input, shape index: {}]
  %s3 = inlined_call_operand.hbm [shape: bf16[16,256], index: 3, kind: input, shape index: {}]
  %s4 = inlined_call_operand.hbm [shape: bf16[32,32], index: 4, kind: input, shape index: {}]
  %s5 = inlined_call_operand.hbm [shape: bf16[32,32], index: 5, kind: input, shape index: {}]
  %s6 = inlined_call_operand.hbm [shape: bf16[2048,128], index: 6, kind: input, shape index: {}]
  %s7 = inlined_call_operand.hbm [shape: bf16[2048,128], index: 7, kind: input, shape index: {}]
  %s8 = inlined_call_operand.vmem [shape: f32[2,8,128], index: 8, kind: output, shape index: {}]
  %s9 = sld [smem:[#allocation0]]
  $region97: #{_lambda_.1} parent=0
    _
  %s11 = ssub.s32 1, %s9
  %s12 = scalar_select 0, %s11, %s9
  $region1: #{_lambda_.1} parent=0
    #allocation6 [shape = 'u8[49152]{0}', space=vmem, size = 0xc000, scoped, tag = 'input window, operand 0']
    #allocation7 [shape = 's32[2]{0}', space=sflag, size = 0x8, scoped, tag = 'scoped memory for _lambda_.1']
    #allocation8 [shape = 'u8[49152]{0}', space=vmem, size = 0xc000, scoped, tag = 'input window, operand 1']
    #allocation9 [shape = 's32[2]{0}', space=sflag, size = 0x8, scoped, tag = 'scoped memory for _lambda_.1']
    #allocation10 [shape = 'u8[8192]{0}', space=vmem, size = 0x2000, scoped, tag = 'input window, operand 2, single buffered']
    #allocation11 [shape = 'u8[8192]{0}', space=vmem, size = 0x2000, scoped, tag = 'input window, operand 3, single buffered']
    #allocation12 [shape = 's32[1]{0}', space=sflag, size = 0x4, scoped, tag = 'scoped memory for _lambda_.1']
    #allocation13 [shape = 'u8[8192]{0}', space=vmem, size = 0x2000, scoped, tag = 'input window, operand 4, single buffered']
    #allocation14 [shape = 'u8[8192]{0}', space=vmem, size = 0x2000, scoped, tag = 'input window, operand 5, single buffered']
    #allocation15 [shape = 's32[1]{0}', space=sflag, size = 0x4, scoped, tag = 'scoped memory for _lambda_.1']
    #allocation16 [shape = 'u8[524288]{0}', space=vmem, size = 0x80000, scoped, tag = 'input window, operand 6, single buffered']
    #allocation17 [shape = 'u8[524288]{0}', space=vmem, size = 0x80000, scoped, tag = 'input window, operand 7, single buffered']
    #allocation18 [shape = 's32[1]{0}', space=sflag, size = 0x4, scoped, tag = 'scoped memory for _lambda_.1']
    %13 = vsyncpa [#allocation7], 0
    %s14 = scalar_lea.sflag [#allocation7], 1
    %15 = vsyncpa %s14, 0
    %16 = vsyncpa [#allocation9], 0
    %s17 = scalar_lea.sflag [#allocation9], 1
    %18 = vsyncpa %s17, 0
    %19 = vsyncpa [#allocation12], 0
    %20 = vsyncpa [#allocation15], 0
    %21 = vsyncpa [#allocation18], 0
    loop: start=0, step=1, limit=4
    $region2: #{_lambda_.1} parent=1 // loop_pre_header
      _
    $region3: #{_lambda_.1} parent=1 // loop_header
      %s23 = sphi 0, %s27
      %p24 = scmp.ge.s32.totalorder %s23, 4
      %s33 = sphi 0, %s35
      %s36 = sphi 0, %s33
      %s37 = sphi 0, %s36
      %s53 = sphi 0, %s37
      %s59 = sphi 0, %s61
      %s62 = sphi 0, %s59
      %s63 = sphi 0, %s62
      %s79 = sphi 0, %s63
      %s83 = sphi 0, %s83
      %s85 = sphi 0, %s83
      %s86 = sphi 0, %s85
      %s100 = sphi 0, %s86
      %s104 = sphi 0, %s104
      %s106 = sphi 0, %s104
      %s107 = sphi 0, %s106
      %s121 = sphi 0, %s107
      %s125 = sphi 0, %s125
      %s127 = sphi 0, %s125
      %s128 = sphi 0, %s127
      %s142 = sphi 0, %s128
      %s146 = sphi 0, %s146
      %s148 = sphi 0, %s146
      %s149 = sphi 0, %s148
      %s163 = sphi 0, %s149
      %s167 = sphi 0, %s167
      %s169 = sphi 0, %s167
      %s170 = sphi 0, %s169
      %s184 = sphi 0, %s170
      %s188 = sphi 0, %s188
      %s190 = sphi 0, %s188
      %s191 = sphi 0, %s190
      %s205 = sphi 0, %s191
      %s211 = sphi 0, %s213
      %s214 = sphi 0, %s211
      %s215 = sphi 0, %s214
      %s231 = sphi 0, %s215
    $region4: #{_lambda_.1} parent=1 // loop_header_branch
      %26 = sbr.rel (%p24) target = $region8
    $region5: #{_lambda_.1} parent=1 // loop_body
      %s28 = ssub.s32 %s23, 1
      %s29 = ssub.s32 %s23, 2
      %s30 = sadd.s32 %s23, 1
      %s31 = ssub.s32 %s23, %s30
      %p32 = scmp.eq.s32.totalorder %s31, 0
      %s34 = sadd.s32 %s33, 1
      %s35 = scalar_select %p32, %s33, %s34
      %p38 = pneg %p32
      %p39 = scmp.eq.s32.totalorder %s23, 1
      %p40 = por %p38, %p39
      %p41 = scmp.ne.s32.totalorder %s33, %s36
      %p42 = scmp.eq.s32.totalorder %s23, 0
      %p43 = por %p41, %p42
      %p44 = scmp.ne.s32.totalorder %s33, %s36
      %p45 = scmp.eq.s32.totalorder %s28, 1
      %p46 = por %p44, %p45
      %p47 = scmp.ne.s32.totalorder %s36, %s37
      %p48 = scmp.eq.s32.totalorder %s28, 0
      %p49 = por %p47, %p48
      %p50 = scmp.ne.s32.totalorder %s36, %s37
      %p51 = scmp.eq.s32.totalorder %s29, 1
      %p52 = por %p50, %p51
      %p54 = scmp.ne.s32.totalorder %s37, %s53
      %p55 = scmp.eq.s32.totalorder %s29, 0
      %p56 = por %p54, %p55
      %s57 = ssub.s32 %s23, %s30
      %p58 = scmp.eq.s32.totalorder %s57, 0
      %s60 = sadd.s32 %s59, 1
      %s61 = scalar_select %p58, %s59, %s60
      %p64 = pneg %p58
      %p65 = scmp.eq.s32.totalorder %s23, 1
      %p66 = por %p64, %p65
      %p67 = scmp.ne.s32.totalorder %s59, %s62
      %p68 = scmp.eq.s32.totalorder %s23, 0
      %p69 = por %p67, %p68
      %p70 = scmp.ne.s32.totalorder %s59, %s62
      %p71 = scmp.eq.s32.totalorder %s28, 1
      %p72 = por %p70, %p71
      %p73 = scmp.ne.s32.totalorder %s62, %s63
      %p74 = scmp.eq.s32.totalorder %s28, 0
      %p75 = por %p73, %p74
      %p76 = scmp.ne.s32.totalorder %s62, %s63
      %p77 = scmp.eq.s32.totalorder %s29, 1
      %p78 = por %p76, %p77
      %p80 = scmp.ne.s32.totalorder %s63, %s79
      %p81 = scmp.eq.s32.totalorder %s29, 0
      %p82 = por %p80, %p81
      %s84 = sadd.s32 %s83, 1
      %p87 = scmp.eq.s32.totalorder %s23, 1
      %p88 = scmp.ne.s32.totalorder %s83, %s85
      %p89 = scmp.eq.s32.totalorder %s23, 0
      %p90 = por %p88, %p89
      %p91 = scmp.ne.s32.totalorder %s83, %s85
      %p92 = scmp.eq.s32.totalorder %s28, 1
      %p93 = por %p91, %p92
      %p94 = scmp.ne.s32.totalorder %s85, %s86
      %p95 = scmp.eq.s32.totalorder %s28, 0
      %p96 = por %p94, %p95
      %p97 = scmp.ne.s32.totalorder %s85, %s86
      %p98 = scmp.eq.s32.totalorder %s29, 1
      %p99 = por %p97, %p98
      %p101 = scmp.ne.s32.totalorder %s86, %s100
      %p102 = scmp.eq.s32.totalorder %s29, 0
      %p103 = por %p101, %p102
      %s105 = sadd.s32 %s104, 1
      %p108 = scmp.eq.s32.totalorder %s23, 1
      %p109 = scmp.ne.s32.totalorder %s104, %s106
      %p110 = scmp.eq.s32.totalorder %s23, 0
      %p111 = por %p109, %p110
      %p112 = scmp.ne.s32.totalorder %s104, %s106
      %p113 = scmp.eq.s32.totalorder %s28, 1
      %p114 = por %p112, %p113
      %p115 = scmp.ne.s32.totalorder %s106, %s107
      %p116 = scmp.eq.s32.totalorder %s28, 0
      %p117 = por %p115, %p116
      %p118 = scmp.ne.s32.totalorder %s106, %s107
      %p119 = scmp.eq.s32.totalorder %s29, 1
      %p120 = por %p118, %p119
      %p122 = scmp.ne.s32.totalorder %s107, %s121
      %p123 = scmp.eq.s32.totalorder %s29, 0
      %p124 = por %p122, %p123
      %s126 = sadd.s32 %s125, 1
      %p129 = scmp.eq.s32.totalorder %s23, 1
      %p130 = scmp.ne.s32.totalorder %s125, %s127
      %p131 = scmp.eq.s32.totalorder %s23, 0
      %p132 = por %p130, %p131
      %p133 = scmp.ne.s32.totalorder %s125, %s127
      %p134 = scmp.eq.s32.totalorder %s28, 1
      %p135 = por %p133, %p134
      %p136 = scmp.ne.s32.totalorder %s127, %s128
      %p137 = scmp.eq.s32.totalorder %s28, 0
      %p138 = por %p136, %p137
      %p139 = scmp.ne.s32.totalorder %s127, %s128
      %p140 = scmp.eq.s32.totalorder %s29, 1
      %p141 = por %p139, %p140
      %p143 = scmp.ne.s32.totalorder %s128, %s142
      %p144 = scmp.eq.s32.totalorder %s29, 0
      %p145 = por %p143, %p144
      %s147 = sadd.s32 %s146, 1
      %p150 = scmp.eq.s32.totalorder %s23, 1
      %p151 = scmp.ne.s32.totalorder %s146, %s148
      %p152 = scmp.eq.s32.totalorder %s23, 0
      %p153 = por %p151, %p152
      %p154 = scmp.ne.s32.totalorder %s146, %s148
      %p155 = scmp.eq.s32.totalorder %s28, 1
      %p156 = por %p154, %p155
      %p157 = scmp.ne.s32.totalorder %s148, %s149
      %p158 = scmp.eq.s32.totalorder %s28, 0
      %p159 = por %p157, %p158
      %p160 = scmp.ne.s32.totalorder %s148, %s149
      %p161 = scmp.eq.s32.totalorder %s29, 1
      %p162 = por %p160, %p161
      %p164 = scmp.ne.s32.totalorder %s149, %s163
      %p165 = scmp.eq.s32.totalorder %s29, 0
      %p166 = por %p164, %p165
      %s168 = sadd.s32 %s167, 1
      %p171 = scmp.eq.s32.totalorder %s23, 1
      %p172 = scmp.ne.s32.totalorder %s167, %s169
      %p173 = scmp.eq.s32.totalorder %s23, 0
      %p174 = por %p172, %p173
      %p175 = scmp.ne.s32.totalorder %s167, %s169
      %p176 = scmp.eq.s32.totalorder %s28, 1
      %p177 = por %p175, %p176
      %p178 = scmp.ne.s32.totalorder %s169, %s170
      %p179 = scmp.eq.s32.totalorder %s28, 0
      %p180 = por %p178, %p179
      %p181 = scmp.ne.s32.totalorder %s169, %s170
      %p182 = scmp.eq.s32.totalorder %s29, 1
      %p183 = por %p181, %p182
      %p185 = scmp.ne.s32.totalorder %s170, %s184
      %p186 = scmp.eq.s32.totalorder %s29, 0
      %p187 = por %p185, %p186
      %s189 = sadd.s32 %s188, 1
      %p192 = scmp.eq.s32.totalorder %s23, 1
      %p193 = scmp.ne.s32.totalorder %s188, %s190
      %p194 = scmp.eq.s32.totalorder %s23, 0
      %p195 = por %p193, %p194
      %p196 = scmp.ne.s32.totalorder %s188, %s190
      %p197 = scmp.eq.s32.totalorder %s28, 1
      %p198 = por %p196, %p197
      %p199 = scmp.ne.s32.totalorder %s190, %s191
      %p200 = scmp.eq.s32.totalorder %s28, 0
      %p201 = por %p199, %p200
      %p202 = scmp.ne.s32.totalorder %s190, %s191
      %p203 = scmp.eq.s32.totalorder %s29, 1
      %p204 = por %p202, %p203
      %p206 = scmp.ne.s32.totalorder %s191, %s205
      %p207 = scmp.eq.s32.totalorder %s29, 0
      %p208 = por %p206, %p207
      %s209 = ssub.s32 %s23, %s30
      %p210 = scmp.eq.s32.totalorder %s209, 0
      %s212 = sadd.s32 %s211, 1
      %s213 = scalar_select %p210, %s211, %s212
      %p216 = pneg %p210
      %p217 = scmp.eq.s32.totalorder %s23, 1
      %p218 = por %p216, %p217
      %p219 = scmp.ne.s32.totalorder %s211, %s214
      %p220 = scmp.eq.s32.totalorder %s23, 0
      %p221 = por %p219, %p220
      %p222 = scmp.ne.s32.totalorder %s211, %s214
      %p223 = scmp.eq.s32.totalorder %s28, 1
      %p224 = por %p222, %p223
      %p225 = scmp.ne.s32.totalorder %s214, %s215
      %p226 = scmp.eq.s32.totalorder %s28, 0
      %p227 = por %p225, %p226
      %p228 = scmp.ne.s32.totalorder %s214, %s215
      %p229 = scmp.eq.s32.totalorder %s29, 1
      %p230 = por %p228, %p229
      %p232 = scmp.ne.s32.totalorder %s215, %s231
      %p233 = scmp.eq.s32.totalorder %s29, 0
      %p234 = por %p232, %p233
      %p235 = scmp.le.s32.totalorder 1, %s23
      %p236 = scmp.lt.s32.totalorder %s23, 3
      %p237 = pnand %p235, %p236
      %p238 = pneg %p237
      // Predicated region
      $region9: #{_lambda_.1} parent=5 // pred_check
        _
      $region10: #{_lambda_.1} parent=5 // pred_check_branch
        %240 = sbr.rel (%p237) target = $region12
      $region11: #{_lambda_.1} parent=5 // pred_region
        %s241 = ssub.s32 %s23, 1
        // Predicated region
        $region13: #{_lambda_.1} parent=11 // pred_check
          %p242 = pneg %p96
        $region14: #{_lambda_.1} parent=11 // pred_check_branch
          %244 = sbr.rel (%p242) target = $region16
        $region15: #{_lambda_.1} parent=11 // pred_region
          %246 = vsyncadd [#allocation9], 0
          %s247 = sshll.u32 %s2, 4
          %s248 = int_to_ptr.hbm [resolvable:$true] %s247
          %s249 = sshll.u32 [#allocation10], 4
          %s250 = int_to_ptr.vmem [resolvable:$true] %s249
          %255 = dma.hbm_to_vmem [thread:$0]  %s248, 256, %s250, [#allocation9], 128, 128, 8
        $region16: #{_lambda_.1} parent=11 // pred_fallthru
          _
        // Predicated region
        $region17: #{_lambda_.1} parent=11 // pred_check
          %p256 = pneg %p117
        $region18: #{_lambda_.1} parent=11 // pred_check_branch
          %258 = sbr.rel (%p256) target = $region20
        $region19: #{_lambda_.1} parent=11 // pred_region
          %260 = vsyncadd [#allocation12], 0
          %s261 = sshll.u32 %s3, 4
          %s262 = int_to_ptr.hbm [resolvable:$true] %s261
          %s263 = sshll.u32 [#allocation11], 4
          %s264 = int_to_ptr.vmem [resolvable:$true] %s263
          %269 = dma.hbm_to_vmem [thread:$0]  %s262, 256, %s264, [#allocation12], 128, 128, 8
        $region20: #{_lambda_.1} parent=11 // pred_fallthru
          _
        // Predicated region
        $region21: #{_lambda_.1} parent=11 // pred_check
          %p270 = pneg %p138
        $region22: #{_lambda_.1} parent=11 // pred_check_branch
          %272 = sbr.rel (%p270) target = $region24
        $region23: #{_lambda_.1} parent=11 // pred_region
          %274 = vsyncadd [#allocation12], 0
          %s275 = sshll.u32 %s4, 4
          %s276 = int_to_ptr.hbm [resolvable:$true] %s275
          %s277 = sshll.u32 [#allocation13], 4
          %s278 = int_to_ptr.vmem [resolvable:$true] %s277
          %283 = dma.hbm_to_vmem [thread:$0]  %s276, 256, %s278, [#allocation12], 64, 64, 4
        $region24: #{_lambda_.1} parent=11 // pred_fallthru
          _
        // Predicated region
        $region25: #{_lambda_.1} parent=11 // pred_check
          %p284 = pneg %p159
        $region26: #{_lambda_.1} parent=11 // pred_check_branch
          %286 = sbr.rel (%p284) target = $region28
        $region27: #{_lambda_.1} parent=11 // pred_region
          %288 = vsyncadd [#allocation15], 0
          %s289 = sshll.u32 %s5, 4
          %s290 = int_to_ptr.hbm [resolvable:$true] %s289
          %s291 = sshll.u32 [#allocation14], 4
          %s292 = int_to_ptr.vmem [resolvable:$true] %s291
          %297 = dma.hbm_to_vmem [thread:$0]  %s290, 256, %s292, [#allocation15], 64, 64, 4
        $region28: #{_lambda_.1} parent=11 // pred_fallthru
          _
        // Predicated region
        $region29: #{_lambda_.1} parent=11 // pred_check
          %p298 = pneg %p180
        $region30: #{_lambda_.1} parent=11 // pred_check_branch
          %300 = sbr.rel (%p298) target = $region32
        $region31: #{_lambda_.1} parent=11 // pred_region
          %302 = vsyncadd [#allocation15], 0
          %s303 = sshll.u32 %s6, 4
          %s304 = int_to_ptr.hbm [resolvable:$true] %s303
          %s305 = sshll.u32 [#allocation16], 4
          %s306 = int_to_ptr.vmem [resolvable:$true] %s305
          %311 = dma.hbm_to_vmem [thread:$0]  %s304, 16384, %s306, [#allocation15], 64, 64, 4
        $region32: #{_lambda_.1} parent=11 // pred_fallthru
          _
        // Predicated region
        $region33: #{_lambda_.1} parent=11 // pred_check
          %p312 = pneg %p201
        $region34: #{_lambda_.1} parent=11 // pred_check_branch
          %314 = sbr.rel (%p312) target = $region36
        $region35: #{_lambda_.1} parent=11 // pred_region
          %316 = vsyncadd [#allocation18], 0
          %s317 = sshll.u32 %s7, 4
          %s318 = int_to_ptr.hbm [resolvable:$true] %s317
          %s319 = sshll.u32 [#allocation17], 4
          %s320 = int_to_ptr.vmem [resolvable:$true] %s319
          %325 = dma.hbm_to_vmem [thread:$0]  %s318, 16384, %s320, [#allocation18], 64, 64, 4
        $region36: #{_lambda_.1} parent=11 // pred_fallthru
          _
      $region12: #{_lambda_.1} parent=5 // pred_fallthru
        _
      %p326 = scmp.lt.s32.totalorder %s23, 2
      // Predicated region
      $region37: #{_lambda_.1} parent=5 // pred_check
        %p327 = pneg %p326
      $region38: #{_lambda_.1} parent=5 // pred_check_branch
        %329 = sbr.rel (%p327) target = $region40
      $region39: #{_lambda_.1} parent=5 // pred_region
        // Predicated region
        $region41: #{_lambda_.1} parent=39 // pred_check
          %p330 = pneg %p43
        $region42: #{_lambda_.1} parent=39 // pred_check_branch
          %332 = sbr.rel (%p330) target = $region44
        $region43: #{_lambda_.1} parent=39 // pred_region
          %s333 = sand.u32 %s33, 1
          %s334 = scalar_lea.sflag [#allocation7], %s333
          %s335 = sand.u32 %s33, 1
          %s336 = smul.addr %s335, 48
          %s337 = scalar_lea.vmem [#allocation6], %s336
          %339 = vsyncadd %s334, 0
          %s340 = smul.addr %s23, 6
          %s341 = smul.addr %s340, 8
          %s342 = scalar_lea.hbm %s0, %s341
          %s343 = sshll.u32 %s342, 4
          %s344 = int_to_ptr.hbm [resolvable:$true] %s343
          %s345 = sshll.u32 %s337, 4
          %s346 = int_to_ptr.vmem [resolvable:$true] %s345
          %351 = dma.hbm_to_vmem [thread:$0]  %s344, 768, %s346, %s334, 128, 128, 8
        $region44: #{_lambda_.1} parent=39 // pred_fallthru
          _
        // Predicated region
        $region45: #{_lambda_.1} parent=39 // pred_check
          %p352 = pneg %p69
        $region46: #{_lambda_.1} parent=39 // pred_check_branch
          %354 = sbr.rel (%p352) target = $region48
        $region47: #{_lambda_.1} parent=39 // pred_region
          %s355 = sand.u32 %s23, 1
          %s356 = scalar_lea.sflag [#allocation9], %s355
          %s357 = sand.u32 %s59, 1
          %s358 = smul.addr %s357, 48
          %s359 = scalar_lea.vmem [#allocation8], %s358
          %361 = vsyncadd %s356, 0
          %s362 = smul.addr %s23, 6
          %s363 = smul.addr %s362, 8
          %s364 = scalar_lea.hbm %s1, %s363
          %s365 = sshll.u32 %s364, 4
          %s366 = int_to_ptr.hbm [resolvable:$true] %s365
          %s367 = sshll.u32 %s359, 4
          %s368 = int_to_ptr.vmem [resolvable:$true] %s367
          %373 = dma.hbm_to_vmem [thread:$0]  %s366, 768, %s368, %s356, 128, 128, 8
        $region48: #{_lambda_.1} parent=39 // pred_fallthru
          _
      $region40: #{_lambda_.1} parent=5 // pred_fallthru
        _
      %p374 = scmp.le.s32.totalorder 1, %s23
      %p375 = scmp.lt.s32.totalorder %s23, 3
      %p376 = pnand %p374, %p375
      %p377 = pneg %p376
      // Predicated region
      $region49: #{_lambda_.1} parent=5 // pred_check
        _
      $region50: #{_lambda_.1} parent=5 // pred_check_branch
        %379 = sbr.rel (%p376) target = $region52
      $region51: #{_lambda_.1} parent=5 // pred_region
        %s380 = ssub.s32 %s23, 1
        %s381 = sand.u32 %s36, 1
        %s382 = scalar_lea.sflag [#allocation7], %s381
        %s383 = sand.u32 %s36, 1
        %s384 = smul.addr %s383, 48
        %s385 = scalar_lea.vmem [#allocation6], %s384
        // Predicated region
        $region53: #{_lambda_.1} parent=51 // pred_check
          %p386 = pneg %p49
        $region54: #{_lambda_.1} parent=51 // pred_check_branch
          %388 = sbr.rel (%p386) target = $region56
        $region55: #{_lambda_.1} parent=51 // pred_region
          %390 = dma.done %s382, 768
        $region56: #{_lambda_.1} parent=51 // pred_fallthru
          _
        %s391 = sand.u32 %s28, 1
        %s392 = scalar_lea.sflag [#allocation9], %s391
        %s393 = sand.u32 %s62, 1
        %s394 = smul.addr %s393, 48
        %s395 = scalar_lea.vmem [#allocation8], %s394
        // Predicated region
        $region57: #{_lambda_.1} parent=51 // pred_check
          %p396 = pneg %p75
        $region58: #{_lambda_.1} parent=51 // pred_check_branch
          %398 = sbr.rel (%p396) target = $region60
        $region59: #{_lambda_.1} parent=51 // pred_region
          %400 = dma.done %s392, 768
        $region60: #{_lambda_.1} parent=51 // pred_fallthru
          _
        // Predicated region
        $region61: #{_lambda_.1} parent=51 // pred_check
          %p401 = pneg %p96
        $region62: #{_lambda_.1} parent=51 // pred_check_branch
          %403 = sbr.rel (%p401) target = $region64
        $region63: #{_lambda_.1} parent=51 // pred_region
          %405 = dma.done [#allocation9], 256
        $region64: #{_lambda_.1} parent=51 // pred_fallthru
          _
        // Predicated region
        $region65: #{_lambda_.1} parent=51 // pred_check
          %p406 = pneg %p117
        $region66: #{_lambda_.1} parent=51 // pred_check_branch
          %408 = sbr.rel (%p406) target = $region68
        $region67: #{_lambda_.1} parent=51 // pred_region
          %410 = dma.done [#allocation12], 256
        $region68: #{_lambda_.1} parent=51 // pred_fallthru
          _
        // Predicated region
        $region69: #{_lambda_.1} parent=51 // pred_check
          %p411 = pneg %p138
        $region70: #{_lambda_.1} parent=51 // pred_check_branch
          %413 = sbr.rel (%p411) target = $region72
        $region71: #{_lambda_.1} parent=51 // pred_region
          %415 = dma.done [#allocation12], 256
        $region72: #{_lambda_.1} parent=51 // pred_fallthru
          _
        // Predicated region
        $region73: #{_lambda_.1} parent=51 // pred_check
          %p416 = pneg %p159
        $region74: #{_lambda_.1} parent=51 // pred_check_branch
          %418 = sbr.rel (%p416) target = $region76
        $region75: #{_lambda_.1} parent=51 // pred_region
          %420 = dma.done [#allocation15], 256
        $region76: #{_lambda_.1} parent=51 // pred_fallthru
          _
        // Predicated region
        $region77: #{_lambda_.1} parent=51 // pred_check
          %p421 = pneg %p180
        $region78: #{_lambda_.1} parent=51 // pred_check_branch
          %423 = sbr.rel (%p421) target = $region80
        $region79: #{_lambda_.1} parent=51 // pred_region
          %425 = dma.done [#allocation15], 16384
        $region80: #{_lambda_.1} parent=51 // pred_fallthru
          _
        // Predicated region
        $region81: #{_lambda_.1} parent=51 // pred_check
          %p426 = pneg %p201
        $region82: #{_lambda_.1} parent=51 // pred_check_branch
          %428 = sbr.rel (%p426) target = $region84
        $region83: #{_lambda_.1} parent=51 // pred_region
          %430 = dma.done [#allocation18], 16384
        $region84: #{_lambda_.1} parent=51 // pred_fallthru
          _
        %s431 = sand.u32 %s36, 1
        %s432 = scalar_lea.sflag [#allocation7], %s431
        %s433 = sand.u32 %s36, 1
        %s434 = smul.addr %s433, 48
        %s435 = scalar_lea.vmem [#allocation6], %s434
        %p436 = pneg %p49
        %p437 = pneg %p46
        %s438 = sand.u32 %s28, 1
        %s439 = scalar_lea.sflag [#allocation9], %s438
        %s440 = sand.u32 %s62, 1
        %s441 = smul.addr %s440, 48
        %s442 = scalar_lea.vmem [#allocation8], %s441
        %p443 = pneg %p75
        %p444 = pneg %p72
        %p445 = pneg %p96
        %p446 = pneg %p93
        %p447 = pneg %p117
        %p448 = pneg %p114
        %p449 = pneg %p138
        %p450 = pneg %p135
        %p451 = pneg %p159
        %p452 = pneg %p156
        %p453 = pneg %p180
        %p454 = pneg %p177
        %p455 = pneg %p201
        %p456 = pneg %p198
        %p457 = pneg %p227
        %p458 = pneg %p224
        %p459 = scmp.lt.s32.totalorder %s28, 1
        %s460 = scalar_select %p459, %s28, 1
        %s461 = smul.addr %s460, 8
        %s462 = scalar_lea.vmem %s8, %s461
        %p463 = scmp.lt.s32.totalorder %s28, 1
        %s464 = scalar_select %p463, %s28, 1
        %s465 = smul.addr %s464, 8
        %s466 = scalar_lea.vmem %s8, %s465
        %v468 = vld [vmem:[#allocation10] sm:$0xff]
        %v469 = vld [vmem:[#allocation10 + $0x8] sm:$0xff]
        %v470 = vld [vmem:[#allocation11] sm:$0xff]
        %v471 = vld [vmem:[#allocation11 + $0x8] sm:$0xff]
        %v472 = vld [vmem:[#allocation13] sm:$0xf]
        %v473 = vld [vmem:[#allocation13 + $0x4] sm:$0xf]
        %v474 = vld [vmem:[#allocation13 + $0x8] sm:$0xf]
        %v475 = vld [vmem:[#allocation13 + $0xc] sm:$0xf]
        %v476 = vld [vmem:[#allocation14] sm:$0xf]
        %v477 = vld [vmem:[#allocation14 + $0x4] sm:$0xf]
        %v478 = vld [vmem:[#allocation14 + $0x8] sm:$0xf]
        %v479 = vld [vmem:[#allocation14 + $0xc] sm:$0xf]
        %v480 = vld [vmem:[#allocation16] sm:$0xf]
        %v481 = vld [vmem:[#allocation16 + $0x4] sm:$0xf]
        %v482 = vld [vmem:[#allocation16 + $0x8] sm:$0xf]
        %v483 = vld [vmem:[#allocation16 + $0xc] sm:$0xf]
        %v484 = vld [vmem:[#allocation16 + $0x10] sm:$0xf]
        %v485 = vld [vmem:[#allocation16 + $0x14] sm:$0xf]
        %v486 = vld [vmem:[#allocation16 + $0x18] sm:$0xf]
        %v487 = vld [vmem:[#allocation16 + $0x1c] sm:$0xf]
        %v488 = vld [vmem:[#allocation16 + $0x20] sm:$0xf]
        %v489 = vld [vmem:[#allocation16 + $0x24] sm:$0xf]
        %v490 = vld [vmem:[#allocation16 + $0x28] sm:$0xf]
        %v491 = vld [vmem:[#allocation16 + $0x2c] sm:$0xf]
        %v492 = vld [vmem:[#allocation16 + $0x30] sm:$0xf]
        %v493 = vld [vmem:[#allocation16 + $0x34] sm:$0xf]
        %v494 = vld [vmem:[#allocation16 + $0x38] sm:$0xf]
        %v495 = vld [vmem:[#allocation16 + $0x3c] sm:$0xf]
        %v496 = vld [vmem:[#allocation16 + $0x40] sm:$0xf]
        %v497 = vld [vmem:[#allocation16 + $0x44] sm:$0xf]
        %v498 = vld [vmem:[#allocation16 + $0x48] sm:$0xf]
        %v499 = vld [vmem:[#allocation16 + $0x4c] sm:$0xf]
        %v500 = vld [vmem:[#allocation16 + $0x50] sm:$0xf]
        %v501 = vld [vmem:[#allocation16 + $0x54] sm:$0xf]
        %v502 = vld [vmem:[#allocation16 + $0x58] sm:$0xf]
        %v503 = vld [vmem:[#allocation16 + $0x5c] sm:$0xf]
        %v504 = vld [vmem:[#allocation16 + $0x60] sm:$0xf]
        %v505 = vld [vmem:[#allocation16 + $0x64] sm:$0xf]
        %v506 = vld [vmem:[#allocation16 + $0x68] sm:$0xf]
        %v507 = vld [vmem:[#allocation16 + $0x6c] sm:$0xf]
        %v508 = vld [vmem:[#allocation16 + $0x70] sm:$0xf]
        %v509 = vld [vmem:[#allocation16 + $0x74] sm:$0xf]
        %v510 = vld [vmem:[#allocation16 + $0x78] sm:$0xf]
        %v511 = vld [vmem:[#allocation16 + $0x7c] sm:$0xf]
        %v512 = vld [vmem:[#allocation16 + $0x80] sm:$0xf]
        %v513 = vld [vmem:[#allocation16 + $0x84] sm:$0xf]
        %v514 = vld [vmem:[#allocation16 + $0x88] sm:$0xf]
        %v515 = vld [vmem:[#allocation16 + $0x8c] sm:$0xf]
        %v516 = vld [vmem:[#allocation16 + $0x90] sm:$0xf]
        %v517 = vld [vmem:[#allocation16 + $0x94] sm:$0xf]
        %v518 = vld [vmem:[#allocation16 + $0x98] sm:$0xf]
        %v519 = vld [vmem:[#allocation16 + $0x9c] sm:$0xf]
        %v520 = vld [vmem:[#allocation16 + $0xa0] sm:$0xf]
        %v521 = vld [vmem:[#allocation16 + $0xa4] sm:$0xf]
        %v522 = vld [vmem:[#allocation16 + $0xa8] sm:$0xf]
        %v523 = vld [vmem:[#allocation16 + $0xac] sm:$0xf]
        %v524 = vld [vmem:[#allocation16 + $0xb0] sm:$0xf]
        %v525 = vld [vmem:[#allocation16 + $0xb4] sm:$0xf]
        %v526 = vld [vmem:[#allocation16 + $0xb8] sm:$0xf]
        %v527 = vld [vmem:[#allocation16 + $0xbc] sm:$0xf]
        %v528 = vld [vmem:[#allocation16 + $0xc0] sm:$0xf]
        %v529 = vld [vmem:[#allocation16 + $0xc4] sm:$0xf]
        %v530 = vld [vmem:[#allocation16 + $0xc8] sm:$0xf]
        %v531 = vld [vmem:[#allocation16 + $0xcc] sm:$0xf]
        %v532 = vld [vmem:[#allocation16 + $0xd0] sm:$0xf]
        %v533 = vld [vmem:[#allocation16 + $0xd4] sm:$0xf]
        %v534 = vld [vmem:[#allocation16 + $0xd8] sm:$0xf]
        %v535 = vld [vmem:[#allocation16 + $0xdc] sm:$0xf]
        %v536 = vld [vmem:[#allocation16 + $0xe0] sm:$0xf]
        %v537 = vld [vmem:[#allocation16 + $0xe4] sm:$0xf]
        %v538 = vld [vmem:[#allocation16 + $0xe8] sm:$0xf]
        %v539 = vld [vmem:[#allocation16 + $0xec] sm:$0xf]
        %v540 = vld [vmem:[#allocation16 + $0xf0] sm:$0xf]
        %v541 = vld [vmem:[#allocation16 + $0xf4] sm:$0xf]
        %v542 = vld [vmem:[#allocation16 + $0xf8] sm:$0xf]
        %v543 = vld [vmem:[#allocation16 + $0xfc] sm:$0xf]
        %v544 = vld [vmem:[#allocation16 + $0x100] sm:$0xf]
        %v545 = vld [vmem:[#allocation16 + $0x104] sm:$0xf]
        %v546 = vld [vmem:[#allocation16 + $0x108] sm:$0xf]
        %v547 = vld [vmem:[#allocation16 + $0x10c] sm:$0xf]
        %v548 = vld [vmem:[#allocation16 + $0x110] sm:$0xf]
        %v549 = vld [vmem:[#allocation16 + $0x114] sm:$0xf]
        %v550 = vld [vmem:[#allocation16 + $0x118] sm:$0xf]
        %v551 = vld [vmem:[#allocation16 + $0x11c] sm:$0xf]
        %v552 = vld [vmem:[#allocation16 + $0x120] sm:$0xf]
        %v553 = vld [vmem:[#allocation16 + $0x124] sm:$0xf]
        %v554 = vld [vmem:[#allocation16 + $0x128] sm:$0xf]
        %v555 = vld [vmem:[#allocation16 + $0x12c] sm:$0xf]
        %v556 = vld [vmem:[#allocation16 + $0x130] sm:$0xf]
        %v557 = vld [vmem:[#allocation16 + $0x134] sm:$0xf]
        %v558 = vld [vmem:[#allocation16 + $0x138] sm:$0xf]
        %v559 = vld [vmem:[#allocation16 + $0x13c] sm:$0xf]
        %v560 = vld [vmem:[#allocation16 + $0x140] sm:$0xf]
        %v561 = vld [vmem:[#allocation16 + $0x144] sm:$0xf]
        %v562 = vld [vmem:[#allocation16 + $0x148] sm:$0xf]
        %v563 = vld [vmem:[#allocation16 + $0x14c] sm:$0xf]
        %v564 = vld [vmem:[#allocation16 + $0x150] sm:$0xf]
        %v565 = vld [vmem:[#allocation16 + $0x154] sm:$0xf]
        %v566 = vld [vmem:[#allocation16 + $0x158] sm:$0xf]
        %v567 = vld [vmem:[#allocation16 + $0x15c] sm:$0xf]
        %v568 = vld [vmem:[#allocation16 + $0x160] sm:$0xf]
        %v569 = vld [vmem:[#allocation16 + $0x164] sm:$0xf]
        %v570 = vld [vmem:[#allocation16 + $0x168] sm:$0xf]
        %v571 = vld [vmem:[#allocation16 + $0x16c] sm:$0xf]
        %v572 = vld [vmem:[#allocation16 + $0x170] sm:$0xf]
        %v573 = vld [vmem:[#allocation16 + $0x174] sm:$0xf]
        %v574 = vld [vmem:[#allocation16 + $0x178] sm:$0xf]
        %v575 = vld [vmem:[#allocation16 + $0x17c] sm:$0xf]
        %v576 = vld [vmem:[#allocation16 + $0x180] sm:$0xf]
        %v577 = vld [vmem:[#allocation16 + $0x184] sm:$0xf]
        %v578 = vld [vmem:[#allocation16 + $0x188] sm:$0xf]
        %v579 = vld [vmem:[#allocation16 + $0x18c] sm:$0xf]
        %v580 = vld [vmem:[#allocation16 + $0x190] sm:$0xf]
        %v581 = vld [vmem:[#allocation16 + $0x194] sm:$0xf]
        %v582 = vld [vmem:[#allocation16 + $0x198] sm:$0xf]
        %v583 = vld [vmem:[#allocation16 + $0x19c] sm:$0xf]
        %v584 = vld [vmem:[#allocation16 + $0x1a0] sm:$0xf]
        %v585 = vld [vmem:[#allocation16 + $0x1a4] sm:$0xf]
        %v586 = vld [vmem:[#allocation16 + $0x1a8] sm:$0xf]
        %v587 = vld [vmem:[#allocation16 + $0x1ac] sm:$0xf]
        %v588 = vld [vmem:[#allocation16 + $0x1b0] sm:$0xf]
        %v589 = vld [vmem:[#allocation16 + $0x1b4] sm:$0xf]
        %v590 = vld [vmem:[#allocation16 + $0x1b8] sm:$0xf]
        %v591 = vld [vmem:[#allocation16 + $0x1bc] sm:$0xf]
        %v592 = vld [vmem:[#allocation16 + $0x1c0] sm:$0xf]
        %v593 = vld [vmem:[#allocation16 + $0x1c4] sm:$0xf]
        %v594 = vld [vmem:[#allocation16 + $0x1c8] sm:$0xf]
        %v595 = vld [vmem:[#allocation16 + $0x1cc] sm:$0xf]
        %v596 = vld [vmem:[#allocation16 + $0x1d0] sm:$0xf]
        %v597 = vld [vmem:[#allocation16 + $0x1d4] sm:$0xf]
        %v598 = vld [vmem:[#allocation16 + $0x1d8] sm:$0xf]
        %v599 = vld [vmem:[#allocation16 + $0x1dc] sm:$0xf]
        %v600 = vld [vmem:[#allocation16 + $0x1e0] sm:$0xf]
        %v601 = vld [vmem:[#allocation16 + $0x1e4] sm:$0xf]
        %v602 = vld [vmem:[#allocation16 + $0x1e8] sm:$0xf]
        %v603 = vld [vmem:[#allocation16 + $0x1ec] sm:$0xf]
        %v604 = vld [vmem:[#allocation16 + $0x1f0] sm:$0xf]
        %v605 = vld [vmem:[#allocation16 + $0x1f4] sm:$0xf]
        %v606 = vld [vmem:[#allocation16 + $0x1f8] sm:$0xf]
        %v607 = vld [vmem:[#allocation16 + $0x1fc] sm:$0xf]
        %v608 = vld [vmem:[#allocation16 + $0x200] sm:$0xf]
        %v609 = vld [vmem:[#allocation16 + $0x204] sm:$0xf]
        %v610 = vld [vmem:[#allocation16 + $0x208] sm:$0xf]
        %v611 = vld [vmem:[#allocation16 + $0x20c] sm:$0xf]
        %v612 = vld [vmem:[#allocation16 + $0x210] sm:$0xf]
        %v613 = vld [vmem:[#allocation16 + $0x214] sm:$0xf]
        %v614 = vld [vmem:[#allocation16 + $0x218] sm:$0xf]
        %v615 = vld [vmem:[#allocation16 + $0x21c] sm:$0xf]
        %v616 = vld [vmem:[#allocation16 + $0x220] sm:$0xf]
        %v617 = vld [vmem:[#allocation16 + $0x224] sm:$0xf]
        %v618 = vld [vmem:[#allocation16 + $0x228] sm:$0xf]
        %v619 = vld [vmem:[#allocation16 + $0x22c] sm:$0xf]
        %v620 = vld [vmem:[#allocation16 + $0x230] sm:$0xf]
        %v621 = vld [vmem:[#allocation16 + $0x234] sm:$0xf]
        %v622 = vld [vmem:[#allocation16 + $0x238] sm:$0xf]
        %v623 = vld [vmem:[#allocation16 + $0x23c] sm:$0xf]
        %v624 = vld [vmem:[#allocation16 + $0x240] sm:$0xf]
        %v625 = vld [vmem:[#allocation16 + $0x244] sm:$0xf]
        %v626 = vld [vmem:[#allocation16 + $0x248] sm:$0xf]
        %v627 = vld [vmem:[#allocation16 + $0x24c] sm:$0xf]
        %v628 = vld [vmem:[#allocation16 + $0x250] sm:$0xf]
        %v629 = vld [vmem:[#allocation16 + $0x254] sm:$0xf]
        %v630 = vld [vmem:[#allocation16 + $0x258] sm:$0xf]
        %v631 = vld [vmem:[#allocation16 + $0x25c] sm:$0xf]
        %v632 = vld [vmem:[#allocation16 + $0x260] sm:$0xf]
        %v633 = vld [vmem:[#allocation16 + $0x264] sm:$0xf]
        %v634 = vld [vmem:[#allocation16 + $0x268] sm:$0xf]
        %v635 = vld [vmem:[#allocation16 + $0x26c] sm:$0xf]
        %v636 = vld [vmem:[#allocation16 + $0x270] sm:$0xf]
        %v637 = vld [vmem:[#allocation16 + $0x274] sm:$0xf]
        %v638 = vld [vmem:[#allocation16 + $0x278] sm:$0xf]
        %v639 = vld [vmem:[#allocation16 + $0x27c] sm:$0xf]
        %v640 = vld [vmem:[#allocation16 + $0x280] sm:$0xf]
        %v641 = vld [vmem:[#allocation16 + $0x284] sm:$0xf]
        %v642 = vld [vmem:[#allocation16 + $0x288] sm:$0xf]
        %v643 = vld [vmem:[#allocation16 + $0x28c] sm:$0xf]
        %v644 = vld [vmem:[#allocation16 + $0x290] sm:$0xf]
        %v645 = vld [vmem:[#allocation16 + $0x294] sm:$0xf]
        %v646 = vld [vmem:[#allocation16 + $0x298] sm:$0xf]
        %v647 = vld [vmem:[#allocation16 + $0x29c] sm:$0xf]
        %v648 = vld [vmem:[#allocation16 + $0x2a0] sm:$0xf]
        %v649 = vld [vmem:[#allocation16 + $0x2a4] sm:$0xf]
        %v650 = vld [vmem:[#allocation16 + $0x2a8] sm:$0xf]
        %v651 = vld [vmem:[#allocation16 + $0x2ac] sm:$0xf]
        %v652 = vld [vmem:[#allocation16 + $0x2b0] sm:$0xf]
        %v653 = vld [vmem:[#allocation16 + $0x2b4] sm:$0xf]
        %v654 = vld [vmem:[#allocation16 + $0x2b8] sm:$0xf]
        %v655 = vld [vmem:[#allocation16 + $0x2bc] sm:$0xf]
        %v656 = vld [vmem:[#allocation16 + $0x2c0] sm:$0xf]
        %v657 = vld [vmem:[#allocation16 + $0x2c4] sm:$0xf]
        %v658 = vld [vmem:[#allocation16 + $0x2c8] sm:$0xf]
        %v659 = vld [vmem:[#allocation16 + $0x2cc] sm:$0xf]
        %v660 = vld [vmem:[#allocation16 + $0x2d0] sm:$0xf]
        %v661 = vld [vmem:[#allocation16 + $0x2d4] sm:$0xf]
        %v662 = vld [vmem:[#allocation16 + $0x2d8] sm:$0xf]
        %v663 = vld [vmem:[#allocation16 + $0x2dc] sm:$0xf]
        %v664 = vld [vmem:[#allocation16 + $0x2e0] sm:$0xf]
        %v665 = vld [vmem:[#allocation16 + $0x2e4] sm:$0xf]
        %v666 = vld [vmem:[#allocation16 + $0x2e8] sm:$0xf]
        %v667 = vld [vmem:[#allocation16 + $0x2ec] sm:$0xf]
        %v668 = vld [vmem:[#allocation16 + $0x2f0] sm:$0xf]
        %v669 = vld [vmem:[#allocation16 + $0x2f4] sm:$0xf]
        %v670 = vld [vmem:[#allocation16 + $0x2f8] sm:$0xf]
        %v671 = vld [vmem:[#allocation16 + $0x2fc] sm:$0xf]
        %v672 = vld [vmem:[#allocation16 + $0x300] sm:$0xf]
        %v673 = vld [vmem:[#allocation16 + $0x304] sm:$0xf]
        %v674 = vld [vmem:[#allocation16 + $0x308] sm:$0xf]
        %v675 = vld [vmem:[#allocation16 + $0x30c] sm:$0xf]
        %v676 = vld [vmem:[#allocation16 + $0x310] sm:$0xf]
        %v677 = vld [vmem:[#allocation16 + $0x314] sm:$0xf]
        %v678 = vld [vmem:[#allocation16 + $0x318] sm:$0xf]
        %v679 = vld [vmem:[#allocation16 + $0x31c] sm:$0xf]
        %v680 = vld [vmem:[#allocation16 + $0x320] sm:$0xf]
        %v681 = vld [vmem:[#allocation16 + $0x324] sm:$0xf]
        %v682 = vld [vmem:[#allocation16 + $0x328] sm:$0xf]
        %v683 = vld [vmem:[#allocation16 + $0x32c] sm:$0xf]
        %v684 = vld [vmem:[#allocation16 + $0x330] sm:$0xf]
        %v685 = vld [vmem:[#allocation16 + $0x334] sm:$0xf]
        %v686 = vld [vmem:[#allocation16 + $0x338] sm:$0xf]
        %v687 = vld [vmem:[#allocation16 + $0x33c] sm:$0xf]
        %v688 = vld [vmem:[#allocation16 + $0x340] sm:$0xf]
        %v689 = vld [vmem:[#allocation16 + $0x344] sm:$0xf]
        %v690 = vld [vmem:[#allocation16 + $0x348] sm:$0xf]
        %v691 = vld [vmem:[#allocation16 + $0x34c] sm:$0xf]
        %v692 = vld [vmem:[#allocation16 + $0x350] sm:$0xf]
        %v693 = vld [vmem:[#allocation16 + $0x354] sm:$0xf]
        %v694 = vld [vmem:[#allocation16 + $0x358] sm:$0xf]
        %v695 = vld [vmem:[#allocation16 + $0x35c] sm:$0xf]
        %v696 = vld [vmem:[#allocation16 + $0x360] sm:$0xf]
        %v697 = vld [vmem:[#allocation16 + $0x364] sm:$0xf]
        %v698 = vld [vmem:[#allocation16 + $0x368] sm:$0xf]
        %v699 = vld [vmem:[#allocation16 + $0x36c] sm:$0xf]
        %v700 = vld [vmem:[#allocation16 + $0x370] sm:$0xf]
        %v701 = vld [vmem:[#allocation16 + $0x374] sm:$0xf]
        %v702 = vld [vmem:[#allocation16 + $0x378] sm:$0xf]
        %v703 = vld [vmem:[#allocation16 + $0x37c] sm:$0xf]
        %v704 = vld [vmem:[#allocation16 + $0x380] sm:$0xf]
        %v705 = vld [vmem:[#allocation16 + $0x384] sm:$0xf]
        %v706 = vld [vmem:[#allocation16 + $0x388] sm:$0xf]
        %v707 = vld [vmem:[#allocation16 + $0x38c] sm:$0xf]
        %v708 = vld [vmem:[#allocation16 + $0x390] sm:$0xf]
        %v709 = vld [vmem:[#allocation16 + $0x394] sm:$0xf]
        %v710 = vld [vmem:[#allocation16 + $0x398] sm:$0xf]
        %v711 = vld [vmem:[#allocation16 + $0x39c] sm:$0xf]
        %v712 = vld [vmem:[#allocation16 + $0x3a0] sm:$0xf]
        %v713 = vld [vmem:[#allocation16 + $0x3a4] sm:$0xf]
        %v714 = vld [vmem:[#allocation16 + $0x3a8] sm:$0xf]
        %v715 = vld [vmem:[#allocation16 + $0x3ac] sm:$0xf]
        %v716 = vld [vmem:[#allocation16 + $0x3b0] sm:$0xf]
        %v717 = vld [vmem:[#allocation16 + $0x3b4] sm:$0xf]
        %v718 = vld [vmem:[#allocation16 + $0x3b8] sm:$0xf]
        %v719 = vld [vmem:[#allocation16 + $0x3bc] sm:$0xf]
        %v720 = vld [vmem:[#allocation16 + $0x3c0] sm:$0xf]
        %v721 = vld [vmem:[#allocation16 + $0x3c4] sm:$0xf]
        %v722 = vld [vmem:[#allocation16 + $0x3c8] sm:$0xf]
        %v723 = vld [vmem:[#allocation16 + $0x3cc] sm:$0xf]
        %v724 = vld [vmem:[#allocation16 + $0x3d0] sm:$0xf]
        %v725 = vld [vmem:[#allocation16 + $0x3d4] sm:$0xf]
        %v726 = vld [vmem:[#allocation16 + $0x3d8] sm:$0xf]
        %v727 = vld [vmem:[#allocation16 + $0x3dc] sm:$0xf]
        %v728 = vld [vmem:[#allocation16 + $0x3e0] sm:$0xf]
        %v729 = vld [vmem:[#allocation16 + $0x3e4] sm:$0xf]
        %v730 = vld [vmem:[#allocation16 + $0x3e8] sm:$0xf]
        %v731 = vld [vmem:[#allocation16 + $0x3ec] sm:$0xf]
        %v732 = vld [vmem:[#allocation16 + $0x3f0] sm:$0xf]
        %v733 = vld [vmem:[#allocation16 + $0x3f4] sm:$0xf]
        %v734 = vld [vmem:[#allocation16 + $0x3f8] sm:$0xf]
        %v735 = vld [vmem:[#allocation16 + $0x3fc] sm:$0xf]
        %v736 = vld [vmem:[#allocation17] sm:$0xf]
        %v737 = vld [vmem:[#allocation17 + $0x4] sm:$0xf]
        %v738 = vld [vmem:[#allocation17 + $0x8] sm:$0xf]
        %v739 = vld [vmem:[#allocation17 + $0xc] sm:$0xf]
        %v740 = vld [vmem:[#allocation17 + $0x10] sm:$0xf]
        %v741 = vld [vmem:[#allocation17 + $0x14] sm:$0xf]
        %v742 = vld [vmem:[#allocation17 + $0x18] sm:$0xf]
        %v743 = vld [vmem:[#allocation17 + $0x1c] sm:$0xf]
        %v744 = vld [vmem:[#allocation17 + $0x20] sm:$0xf]
        %v745 = vld [vmem:[#allocation17 + $0x24] sm:$0xf]
        %v746 = vld [vmem:[#allocation17 + $0x28] sm:$0xf]
        %v747 = vld [vmem:[#allocation17 + $0x2c] sm:$0xf]
        %v748 = vld [vmem:[#allocation17 + $0x30] sm:$0xf]
        %v749 = vld [vmem:[#allocation17 + $0x34] sm:$0xf]
        %v750 = vld [vmem:[#allocation17 + $0x38] sm:$0xf]
        %v751 = vld [vmem:[#allocation17 + $0x3c] sm:$0xf]
        %v752 = vld [vmem:[#allocation17 + $0x40] sm:$0xf]
        %v753 = vld [vmem:[#allocation17 + $0x44] sm:$0xf]
        %v754 = vld [vmem:[#allocation17 + $0x48] sm:$0xf]
        %v755 = vld [vmem:[#allocation17 + $0x4c] sm:$0xf]
        %v756 = vld [vmem:[#allocation17 + $0x50] sm:$0xf]
        %v757 = vld [vmem:[#allocation17 + $0x54] sm:$0xf]
        %v758 = vld [vmem:[#allocation17 + $0x58] sm:$0xf]
        %v759 = vld [vmem:[#allocation17 + $0x5c] sm:$0xf]
        %v760 = vld [vmem:[#allocation17 + $0x60] sm:$0xf]
        %v761 = vld [vmem:[#allocation17 + $0x64] sm:$0xf]
        %v762 = vld [vmem:[#allocation17 + $0x68] sm:$0xf]
        %v763 = vld [vmem:[#allocation17 + $0x6c] sm:$0xf]
        %v764 = vld [vmem:[#allocation17 + $0x70] sm:$0xf]
        %v765 = vld [vmem:[#allocation17 + $0x74] sm:$0xf]
        %v766 = vld [vmem:[#allocation17 + $0x78] sm:$0xf]
        %v767 = vld [vmem:[#allocation17 + $0x7c] sm:$0xf]
        %v768 = vld [vmem:[#allocation17 + $0x80] sm:$0xf]
        %v769 = vld [vmem:[#allocation17 + $0x84] sm:$0xf]
        %v770 = vld [vmem:[#allocation17 + $0x88] sm:$0xf]
        %v771 = vld [vmem:[#allocation17 + $0x8c] sm:$0xf]
        %v772 = vld [vmem:[#allocation17 + $0x90] sm:$0xf]
        %v773 = vld [vmem:[#allocation17 + $0x94] sm:$0xf]
        %v774 = vld [vmem:[#allocation17 + $0x98] sm:$0xf]
        %v775 = vld [vmem:[#allocation17 + $0x9c] sm:$0xf]
        %v776 = vld [vmem:[#allocation17 + $0xa0] sm:$0xf]
        %v777 = vld [vmem:[#allocation17 + $0xa4] sm:$0xf]
        %v778 = vld [vmem:[#allocation17 + $0xa8] sm:$0xf]
        %v779 = vld [vmem:[#allocation17 + $0xac] sm:$0xf]
        %v780 = vld [vmem:[#allocation17 + $0xb0] sm:$0xf]
        %v781 = vld [vmem:[#allocation17 + $0xb4] sm:$0xf]
        %v782 = vld [vmem:[#allocation17 + $0xb8] sm:$0xf]
        %v783 = vld [vmem:[#allocation17 + $0xbc] sm:$0xf]
        %v784 = vld [vmem:[#allocation17 + $0xc0] sm:$0xf]
        %v785 = vld [vmem:[#allocation17 + $0xc4] sm:$0xf]
        %v786 = vld [vmem:[#allocation17 + $0xc8] sm:$0xf]
        %v787 = vld [vmem:[#allocation17 + $0xcc] sm:$0xf]
        %v788 = vld [vmem:[#allocation17 + $0xd0] sm:$0xf]
        %v789 = vld [vmem:[#allocation17 + $0xd4] sm:$0xf]
        %v790 = vld [vmem:[#allocation17 + $0xd8] sm:$0xf]
        %v791 = vld [vmem:[#allocation17 + $0xdc] sm:$0xf]
        %v792 = vld [vmem:[#allocation17 + $0xe0] sm:$0xf]
        %v793 = vld [vmem:[#allocation17 + $0xe4] sm:$0xf]
        %v794 = vld [vmem:[#allocation17 + $0xe8] sm:$0xf]
        %v795 = vld [vmem:[#allocation17 + $0xec] sm:$0xf]
        %v796 = vld [vmem:[#allocation17 + $0xf0] sm:$0xf]
        %v797 = vld [vmem:[#allocation17 + $0xf4] sm:$0xf]
        %v798 = vld [vmem:[#allocation17 + $0xf8] sm:$0xf]
        %v799 = vld [vmem:[#allocation17 + $0xfc] sm:$0xf]
        %v800 = vld [vmem:[#allocation17 + $0x100] sm:$0xf]
        %v801 = vld [vmem:[#allocation17 + $0x104] sm:$0xf]
        %v802 = vld [vmem:[#allocation17 + $0x108] sm:$0xf]
        %v803 = vld [vmem:[#allocation17 + $0x10c] sm:$0xf]
        %v804 = vld [vmem:[#allocation17 + $0x110] sm:$0xf]
        %v805 = vld [vmem:[#allocation17 + $0x114] sm:$0xf]
        %v806 = vld [vmem:[#allocation17 + $0x118] sm:$0xf]
        %v807 = vld [vmem:[#allocation17 + $0x11c] sm:$0xf]
        %v808 = vld [vmem:[#allocation17 + $0x120] sm:$0xf]
        %v809 = vld [vmem:[#allocation17 + $0x124] sm:$0xf]
        %v810 = vld [vmem:[#allocation17 + $0x128] sm:$0xf]
        %v811 = vld [vmem:[#allocation17 + $0x12c] sm:$0xf]
        %v812 = vld [vmem:[#allocation17 + $0x130] sm:$0xf]
        %v813 = vld [vmem:[#allocation17 + $0x134] sm:$0xf]
        %v814 = vld [vmem:[#allocation17 + $0x138] sm:$0xf]
        %v815 = vld [vmem:[#allocation17 + $0x13c] sm:$0xf]
        %v816 = vld [vmem:[#allocation17 + $0x140] sm:$0xf]
        %v817 = vld [vmem:[#allocation17 + $0x144] sm:$0xf]
        %v818 = vld [vmem:[#allocation17 + $0x148] sm:$0xf]
        %v819 = vld [vmem:[#allocation17 + $0x14c] sm:$0xf]
        %v820 = vld [vmem:[#allocation17 + $0x150] sm:$0xf]
        %v821 = vld [vmem:[#allocation17 + $0x154] sm:$0xf]
        %v822 = vld [vmem:[#allocation17 + $0x158] sm:$0xf]
        %v823 = vld [vmem:[#allocation17 + $0x15c] sm:$0xf]
        %v824 = vld [vmem:[#allocation17 + $0x160] sm:$0xf]
        %v825 = vld [vmem:[#allocation17 + $0x164] sm:$0xf]
        %v826 = vld [vmem:[#allocation17 + $0x168] sm:$0xf]
        %v827 = vld [vmem:[#allocation17 + $0x16c] sm:$0xf]
        %v828 = vld [vmem:[#allocation17 + $0x170] sm:$0xf]
        %v829 = vld [vmem:[#allocation17 + $0x174] sm:$0xf]
        %v830 = vld [vmem:[#allocation17 + $0x178] sm:$0xf]
        %v831 = vld [vmem:[#allocation17 + $0x17c] sm:$0xf]
        %v832 = vld [vmem:[#allocation17 + $0x180] sm:$0xf]
        %v833 = vld [vmem:[#allocation17 + $0x184] sm:$0xf]
        %v834 = vld [vmem:[#allocation17 + $0x188] sm:$0xf]
        %v835 = vld [vmem:[#allocation17 + $0x18c] sm:$0xf]
        %v836 = vld [vmem:[#allocation17 + $0x190] sm:$0xf]
        %v837 = vld [vmem:[#allocation17 + $0x194] sm:$0xf]
        %v838 = vld [vmem:[#allocation17 + $0x198] sm:$0xf]
        %v839 = vld [vmem:[#allocation17 + $0x19c] sm:$0xf]
        %v840 = vld [vmem:[#allocation17 + $0x1a0] sm:$0xf]
        %v841 = vld [vmem:[#allocation17 + $0x1a4] sm:$0xf]
        %v842 = vld [vmem:[#allocation17 + $0x1a8] sm:$0xf]
        %v843 = vld [vmem:[#allocation17 + $0x1ac] sm:$0xf]
        %v844 = vld [vmem:[#allocation17 + $0x1b0] sm:$0xf]
        %v845 = vld [vmem:[#allocation17 + $0x1b4] sm:$0xf]
        %v846 = vld [vmem:[#allocation17 + $0x1b8] sm:$0xf]
        %v847 = vld [vmem:[#allocation17 + $0x1bc] sm:$0xf]
        %v848 = vld [vmem:[#allocation17 + $0x1c0] sm:$0xf]
        %v849 = vld [vmem:[#allocation17 + $0x1c4] sm:$0xf]
        %v850 = vld [vmem:[#allocation17 + $0x1c8] sm:$0xf]
        %v851 = vld [vmem:[#allocation17 + $0x1cc] sm:$0xf]
        %v852 = vld [vmem:[#allocation17 + $0x1d0] sm:$0xf]
        %v853 = vld [vmem:[#allocation17 + $0x1d4] sm:$0xf]
        %v854 = vld [vmem:[#allocation17 + $0x1d8] sm:$0xf]
        %v855 = vld [vmem:[#allocation17 + $0x1dc] sm:$0xf]
        %v856 = vld [vmem:[#allocation17 + $0x1e0] sm:$0xf]
        %v857 = vld [vmem:[#allocation17 + $0x1e4] sm:$0xf]
        %v858 = vld [vmem:[#allocation17 + $0x1e8] sm:$0xf]
        %v859 = vld [vmem:[#allocation17 + $0x1ec] sm:$0xf]
        %v860 = vld [vmem:[#allocation17 + $0x1f0] sm:$0xf]
        %v861 = vld [vmem:[#allocation17 + $0x1f4] sm:$0xf]
        %v862 = vld [vmem:[#allocation17 + $0x1f8] sm:$0xf]
        %v863 = vld [vmem:[#allocation17 + $0x1fc] sm:$0xf]
        %v864 = vld [vmem:[#allocation17 + $0x200] sm:$0xf]
        %v865 = vld [vmem:[#allocation17 + $0x204] sm:$0xf]
        %v866 = vld [vmem:[#allocation17 + $0x208] sm:$0xf]
        %v867 = vld [vmem:[#allocation17 + $0x20c] sm:$0xf]
        %v868 = vld [vmem:[#allocation17 + $0x210] sm:$0xf]
        %v869 = vld [vmem:[#allocation17 + $0x214] sm:$0xf]
        %v870 = vld [vmem:[#allocation17 + $0x218] sm:$0xf]
        %v871 = vld [vmem:[#allocation17 + $0x21c] sm:$0xf]
        %v872 = vld [vmem:[#allocation17 + $0x220] sm:$0xf]
        %v873 = vld [vmem:[#allocation17 + $0x224] sm:$0xf]
        %v874 = vld [vmem:[#allocation17 + $0x228] sm:$0xf]
        %v875 = vld [vmem:[#allocation17 + $0x22c] sm:$0xf]
        %v876 = vld [vmem:[#allocation17 + $0x230] sm:$0xf]
        %v877 = vld [vmem:[#allocation17 + $0x234] sm:$0xf]
        %v878 = vld [vmem:[#allocation17 + $0x238] sm:$0xf]
        %v879 = vld [vmem:[#allocation17 + $0x23c] sm:$0xf]
        %v880 = vld [vmem:[#allocation17 + $0x240] sm:$0xf]
        %v881 = vld [vmem:[#allocation17 + $0x244] sm:$0xf]
        %v882 = vld [vmem:[#allocation17 + $0x248] sm:$0xf]
        %v883 = vld [vmem:[#allocation17 + $0x24c] sm:$0xf]
        %v884 = vld [vmem:[#allocation17 + $0x250] sm:$0xf]
        %v885 = vld [vmem:[#allocation17 + $0x254] sm:$0xf]
        %v886 = vld [vmem:[#allocation17 + $0x258] sm:$0xf]
        %v887 = vld [vmem:[#allocation17 + $0x25c] sm:$0xf]
        %v888 = vld [vmem:[#allocation17 + $0x260] sm:$0xf]
        %v889 = vld [vmem:[#allocation17 + $0x264] sm:$0xf]
        %v890 = vld [vmem:[#allocation17 + $0x268] sm:$0xf]
        %v891 = vld [vmem:[#allocation17 + $0x26c] sm:$0xf]
        %v892 = vld [vmem:[#allocation17 + $0x270] sm:$0xf]
        %v893 = vld [vmem:[#allocation17 + $0x274] sm:$0xf]
        %v894 = vld [vmem:[#allocation17 + $0x278] sm:$0xf]
        %v895 = vld [vmem:[#allocation17 + $0x27c] sm:$0xf]
        %v896 = vld [vmem:[#allocation17 + $0x280] sm:$0xf]
        %v897 = vld [vmem:[#allocation17 + $0x284] sm:$0xf]
        %v898 = vld [vmem:[#allocation17 + $0x288] sm:$0xf]
        %v899 = vld [vmem:[#allocation17 + $0x28c] sm:$0xf]
        %v900 = vld [vmem:[#allocation17 + $0x290] sm:$0xf]
        %v901 = vld [vmem:[#allocation17 + $0x294] sm:$0xf]
        %v902 = vld [vmem:[#allocation17 + $0x298] sm:$0xf]
        %v903 = vld [vmem:[#allocation17 + $0x29c] sm:$0xf]
        %v904 = vld [vmem:[#allocation17 + $0x2a0] sm:$0xf]
        %v905 = vld [vmem:[#allocation17 + $0x2a4] sm:$0xf]
        %v906 = vld [vmem:[#allocation17 + $0x2a8] sm:$0xf]
        %v907 = vld [vmem:[#allocation17 + $0x2ac] sm:$0xf]
        %v908 = vld [vmem:[#allocation17 + $0x2b0] sm:$0xf]
        %v909 = vld [vmem:[#allocation17 + $0x2b4] sm:$0xf]
        %v910 = vld [vmem:[#allocation17 + $0x2b8] sm:$0xf]
        %v911 = vld [vmem:[#allocation17 + $0x2bc] sm:$0xf]
        %v912 = vld [vmem:[#allocation17 + $0x2c0] sm:$0xf]
        %v913 = vld [vmem:[#allocation17 + $0x2c4] sm:$0xf]
        %v914 = vld [vmem:[#allocation17 + $0x2c8] sm:$0xf]
        %v915 = vld [vmem:[#allocation17 + $0x2cc] sm:$0xf]
        %v916 = vld [vmem:[#allocation17 + $0x2d0] sm:$0xf]
        %v917 = vld [vmem:[#allocation17 + $0x2d4] sm:$0xf]
        %v918 = vld [vmem:[#allocation17 + $0x2d8] sm:$0xf]
        %v919 = vld [vmem:[#allocation17 + $0x2dc] sm:$0xf]
        %v920 = vld [vmem:[#allocation17 + $0x2e0] sm:$0xf]
        %v921 = vld [vmem:[#allocation17 + $0x2e4] sm:$0xf]
        %v922 = vld [vmem:[#allocation17 + $0x2e8] sm:$0xf]
        %v923 = vld [vmem:[#allocation17 + $0x2ec] sm:$0xf]
        %v924 = vld [vmem:[#allocation17 + $0x2f0] sm:$0xf]
        %v925 = vld [vmem:[#allocation17 + $0x2f4] sm:$0xf]
        %v926 = vld [vmem:[#allocation17 + $0x2f8] sm:$0xf]
        %v927 = vld [vmem:[#allocation17 + $0x2fc] sm:$0xf]
        %v928 = vld [vmem:[#allocation17 + $0x300] sm:$0xf]
        %v929 = vld [vmem:[#allocation17 + $0x304] sm:$0xf]
        %v930 = vld [vmem:[#allocation17 + $0x308] sm:$0xf]
        %v931 = vld [vmem:[#allocation17 + $0x30c] sm:$0xf]
        %v932 = vld [vmem:[#allocation17 + $0x310] sm:$0xf]
        %v933 = vld [vmem:[#allocation17 + $0x314] sm:$0xf]
        %v934 = vld [vmem:[#allocation17 + $0x318] sm:$0xf]
        %v935 = vld [vmem:[#allocation17 + $0x31c] sm:$0xf]
        %v936 = vld [vmem:[#allocation17 + $0x320] sm:$0xf]
        %v937 = vld [vmem:[#allocation17 + $0x324] sm:$0xf]
        %v938 = vld [vmem:[#allocation17 + $0x328] sm:$0xf]
        %v939 = vld [vmem:[#allocation17 + $0x32c] sm:$0xf]
        %v940 = vld [vmem:[#allocation17 + $0x330] sm:$0xf]
        %v941 = vld [vmem:[#allocation17 + $0x334] sm:$0xf]
        %v942 = vld [vmem:[#allocation17 + $0x338] sm:$0xf]
        %v943 = vld [vmem:[#allocation17 + $0x33c] sm:$0xf]
        %v944 = vld [vmem:[#allocation17 + $0x340] sm:$0xf]
        %v945 = vld [vmem:[#allocation17 + $0x344] sm:$0xf]
        %v946 = vld [vmem:[#allocation17 + $0x348] sm:$0xf]
        %v947 = vld [vmem:[#allocation17 + $0x34c] sm:$0xf]
        %v948 = vld [vmem:[#allocation17 + $0x350] sm:$0xf]
        %v949 = vld [vmem:[#allocation17 + $0x354] sm:$0xf]
        %v950 = vld [vmem:[#allocation17 + $0x358] sm:$0xf]
        %v951 = vld [vmem:[#allocation17 + $0x35c] sm:$0xf]
        %v952 = vld [vmem:[#allocation17 + $0x360] sm:$0xf]
        %v953 = vld [vmem:[#allocation17 + $0x364] sm:$0xf]
        %v954 = vld [vmem:[#allocation17 + $0x368] sm:$0xf]
        %v955 = vld [vmem:[#allocation17 + $0x36c] sm:$0xf]
        %v956 = vld [vmem:[#allocation17 + $0x370] sm:$0xf]
        %v957 = vld [vmem:[#allocation17 + $0x374] sm:$0xf]
        %v958 = vld [vmem:[#allocation17 + $0x378] sm:$0xf]
        %v959 = vld [vmem:[#allocation17 + $0x37c] sm:$0xf]
        %v960 = vld [vmem:[#allocation17 + $0x380] sm:$0xf]
        %v961 = vld [vmem:[#allocation17 + $0x384] sm:$0xf]
        %v962 = vld [vmem:[#allocation17 + $0x388] sm:$0xf]
        %v963 = vld [vmem:[#allocation17 + $0x38c] sm:$0xf]
        %v964 = vld [vmem:[#allocation17 + $0x390] sm:$0xf]
        %v965 = vld [vmem:[#allocation17 + $0x394] sm:$0xf]
        %v966 = vld [vmem:[#allocation17 + $0x398] sm:$0xf]
        %v967 = vld [vmem:[#allocation17 + $0x39c] sm:$0xf]
        %v968 = vld [vmem:[#allocation17 + $0x3a0] sm:$0xf]
        %v969 = vld [vmem:[#allocation17 + $0x3a4] sm:$0xf]
        %v970 = vld [vmem:[#allocation17 + $0x3a8] sm:$0xf]
        %v971 = vld [vmem:[#allocation17 + $0x3ac] sm:$0xf]
        %v972 = vld [vmem:[#allocation17 + $0x3b0] sm:$0xf]
        %v973 = vld [vmem:[#allocation17 + $0x3b4] sm:$0xf]
        %v974 = vld [vmem:[#allocation17 + $0x3b8] sm:$0xf]
        %v975 = vld [vmem:[#allocation17 + $0x3bc] sm:$0xf]
        %v976 = vld [vmem:[#allocation17 + $0x3c0] sm:$0xf]
        %v977 = vld [vmem:[#allocation17 + $0x3c4] sm:$0xf]
        %v978 = vld [vmem:[#allocation17 + $0x3c8] sm:$0xf]
        %v979 = vld [vmem:[#allocation17 + $0x3cc] sm:$0xf]
        %v980 = vld [vmem:[#allocation17 + $0x3d0] sm:$0xf]
        %v981 = vld [vmem:[#allocation17 + $0x3d4] sm:$0xf]
        %v982 = vld [vmem:[#allocation17 + $0x3d8] sm:$0xf]
        %v983 = vld [vmem:[#allocation17 + $0x3dc] sm:$0xf]
        %v984 = vld [vmem:[#allocation17 + $0x3e0] sm:$0xf]
        %v985 = vld [vmem:[#allocation17 + $0x3e4] sm:$0xf]
        %v986 = vld [vmem:[#allocation17 + $0x3e8] sm:$0xf]
        %v987 = vld [vmem:[#allocation17 + $0x3ec] sm:$0xf]
        %v988 = vld [vmem:[#allocation17 + $0x3f0] sm:$0xf]
        %v989 = vld [vmem:[#allocation17 + $0x3f4] sm:$0xf]
        %v990 = vld [vmem:[#allocation17 + $0x3f8] sm:$0xf]
        %v991 = vld [vmem:[#allocation17 + $0x3fc] sm:$0xf]
        %v992 = vlaneseq
        %v993 = vand.u32 %v992, 127
        %vm994 = vcmp.lt.s32.totalorder %v993, 12
        %995 = vst [vmem:[#allocation5] sm:$0xfe] 0.0
        %996 = vst [vmem:[#allocation5 + $0x8] sm:$0xfe] 0.0
        %997 = vst [vmem:[#allocation5 + $0x10] sm:$0xfe] 0.0
        %998 = vst [vmem:[#allocation5 + $0x18] sm:$0xfe] 0.0
        %999 = vst [vmem:[#allocation5 + $0x20] sm:$0xfe] 0.0
        %1000 = vst [vmem:[#allocation5 + $0x28] sm:$0xfe] 0.0
        %1001 = vst [vmem:[#allocation5 + $0x30] sm:$0xfe] 0.0
        %1002 = vst [vmem:[#allocation5 + $0x38] sm:$0xfe] 0.0
        %1003 = vst [vmem:[#allocation5 + $0x40] sm:$0xfe] 0.0
        %1004 = vst [vmem:[#allocation5 + $0x48] sm:$0xfe] 0.0
        %1005 = vst [vmem:[#allocation5 + $0x50] sm:$0xfe] 0.0
        %1006 = vst [vmem:[#allocation5 + $0x58] sm:$0xfe] 0.0
        %1007 = vst [vmem:[#allocation5 + $0x60] sm:$0xfe] 0.0
        %1008 = vst [vmem:[#allocation5 + $0x68] sm:$0xfe] 0.0
        %1009 = vst [vmem:[#allocation5 + $0x70] sm:$0xfe] 0.0
        %1010 = vst [vmem:[#allocation5 + $0x78] sm:$0xfe] 0.0
        %v1011 = vld [vmem:[%s385] sm:$0xff]
        %v1012 = vld [vmem:[%s385 + $0x8] sm:$0xff]
        %v1013 = vmul.f32 %v1011, 0.299
        %v1014 = vmul.f32 %v1012, 0.299
        %s1015 = scalar_lea.vmem %s385, 16 [#allocation6]
        %v1016 = vld [vmem:[%s1015] sm:$0xff]
        %v1017 = vld [vmem:[%s1015 + $0x8] sm:$0xff]
        %v1018 = vmul.f32 %v1016, 0.587
        %v1019 = vmul.f32 %v1017, 0.587
        %v1020 = vadd.f32 %v1013, %v1018
        %v1021 = vadd.f32 %v1014, %v1019
        %s1022 = scalar_lea.vmem %s385, 32 [#allocation6]
        %v1023 = vld [vmem:[%s1022] sm:$0xff]
        %v1024 = vld [vmem:[%s1022 + $0x8] sm:$0xff]
        %v1025 = vmul.f32 %v1023, 0.114
        %v1026 = vmul.f32 %v1024, 0.114
        %v1027 = vadd.f32 %v1020, %v1025
        %v1028 = vadd.f32 %v1021, %v1026
        %vm1029 = vcmask 130048
        %1030 = vst.msk [vmem:[#allocation2] sm:$0xff] %vm1029, %v1027
        %1031 = vst.msk [vmem:[#allocation2 + $0x8] sm:$0xff] %vm1029, %v1028
        %v1032 = vld [vmem:[#allocation2] sm:$0xff]
        %v1033 = vld [vmem:[#allocation2 + $0x8] sm:$0xff]
        %v1034 = vpack.c.bf16 %v1032, %v1032
        %v1035 = vpack.c.bf16 %v1033, %v1033
        %v1036 = vunpack.c.l.bf16 %v1034
        %v1037 = vunpack.c.l.bf16 %v1035
        %v1038 = vsub.f32 %v1032, %v1036
        %v1039 = vsub.f32 %v1033, %v1037
        %v1040 = vpack.c.bf16 %v1039, %v1038
        %v1043 = vunpack.c.l.b16 %v468
        %v1044 = vunpack.c.h.b16 %v468
        %v1045 = vunpack.c.l.b16 %v469
        %v1046 = vunpack.c.h.b16 %v469
        %v1047 = vpack.c.b16 %v1045, %v1043
        %v1048 = vpack.c.b16 %v1046, %v1044
        %v1052 = vsel %vm1029, %v1040, 0
        %1054 = vmatpush.bf16.msra.mxu0 0
        %1055 = vmatpush.bf16.msra.mxu0 0
        %1056 = vmatpush.bf16.msra.mxu0 0
        %1057 = vmatpush.bf16.msra.mxu0 0
        %1058 = vmatpush.bf16.msra.mxu0 0
        %1059 = vmatpush.bf16.msra.mxu0 0
        %1060 = vmatpush.bf16.msra.mxu0 0
        %1061 = vmatpush.bf16.msra.mxu0 %v1047
        %1062 = vmatmul.bf16.gmra.mxu0 %v1052
        %v1063 = vpop.f32.mrf.mxu0
        %v1064 = vadd.f32 0.0, %v1063
        %v1065 = vpop.f32.mrf.mxu0
        %v1066 = vadd.f32 0.0, %v1065
        %1067 = vdwg.mxu0
        %1068 = vmatpush.bf16.msra.mxu0 0
        %1069 = vmatpush.bf16.msra.mxu0 0
        %1070 = vmatpush.bf16.msra.mxu0 0
        %1071 = vmatpush.bf16.msra.mxu0 0
        %1072 = vmatpush.bf16.msra.mxu0 0
        %1073 = vmatpush.bf16.msra.mxu0 0
        %1074 = vmatpush.bf16.msra.mxu0 0
        %1075 = vmatpush.bf16.msra.mxu0 %v1048
        %1076 = vmatmul.bf16.gmra.mxu0 %v1052
        %v1077 = vpop.f32.mrf.mxu0
        %v1078 = vadd.f32 0.0, %v1077
        %v1079 = vpop.f32.mrf.mxu0
        %v1080 = vadd.f32 0.0, %v1079
        %1081 = vdwg.mxu0
        %v1084 = vunpack.c.l.b16 %v1034
        %v1085 = vunpack.c.l.b16 %v1035
        %v1086 = vpack.c.b16 %v1085, %v1084
        %v1088 = vsel %vm1029, %v1086, 0
        %1090 = vmatpush.bf16.msra.mxu0 0
        %1091 = vmatpush.bf16.msra.mxu0 0
        %1092 = vmatpush.bf16.msra.mxu0 0
        %1093 = vmatpush.bf16.msra.mxu0 0
        %1094 = vmatpush.bf16.msra.mxu0 0
        %1095 = vmatpush.bf16.msra.mxu0 0
        %1096 = vmatpush.bf16.msra.mxu0 0
        %1097 = vmatpush.bf16.msra.mxu0 %v1047
        %1098 = vmatmul.bf16.gmra.mxu0 %v1088
        %v1099 = vpop.f32.mrf.mxu0
        %v1100 = vadd.f32 %v1064, %v1099
        %v1101 = vpop.f32.mrf.mxu0
        %v1102 = vadd.f32 %v1066, %v1101
        %1103 = vdwg.mxu0
        %1104 = vmatpush.bf16.msra.mxu0 0
        %1105 = vmatpush.bf16.msra.mxu0 0
        %1106 = vmatpush.bf16.msra.mxu0 0
        %1107 = vmatpush.bf16.msra.mxu0 0
        %1108 = vmatpush.bf16.msra.mxu0 0
        %1109 = vmatpush.bf16.msra.mxu0 0
        %1110 = vmatpush.bf16.msra.mxu0 0
        %1111 = vmatpush.bf16.msra.mxu0 %v1048
        %1112 = vmatmul.bf16.gmra.mxu0 %v1088
        %v1113 = vpop.f32.mrf.mxu0
        %v1114 = vadd.f32 %v1078, %v1113
        %v1115 = vpop.f32.mrf.mxu0
        %v1116 = vadd.f32 %v1080, %v1115
        %1117 = vdwg.mxu0
        %v1120 = vunpack.c.l.b16 %v470
        %v1121 = vunpack.c.h.b16 %v470
        %v1122 = vunpack.c.l.b16 %v471
        %v1123 = vunpack.c.h.b16 %v471
        %v1124 = vpack.c.b16 %v1122, %v1120
        %v1125 = vpack.c.b16 %v1123, %v1121
        %1128 = vmatpush.bf16.msra.mxu0 0
        %1129 = vmatpush.bf16.msra.mxu0 0
        %1130 = vmatpush.bf16.msra.mxu0 0
        %1131 = vmatpush.bf16.msra.mxu0 0
        %1132 = vmatpush.bf16.msra.mxu0 0
        %1133 = vmatpush.bf16.msra.mxu0 0
        %1134 = vmatpush.bf16.msra.mxu0 0
        %1135 = vmatpush.bf16.msra.mxu0 %v1124
        %1136 = vmatmul.bf16.gmra.mxu0 %v1088
        %v1137 = vpop.f32.mrf.mxu0
        %v1138 = vadd.f32 0.0, %v1137
        %v1139 = vpop.f32.mrf.mxu0
        %v1140 = vadd.f32 0.0, %v1139
        %1141 = vdwg.mxu0
        %1142 = vmatpush.bf16.msra.mxu0 0
        %1143 = vmatpush.bf16.msra.mxu0 0
        %1144 = vmatpush.bf16.msra.mxu0 0
        %1145 = vmatpush.bf16.msra.mxu0 0
        %1146 = vmatpush.bf16.msra.mxu0 0
        %1147 = vmatpush.bf16.msra.mxu0 0
        %1148 = vmatpush.bf16.msra.mxu0 0
        %1149 = vmatpush.bf16.msra.mxu0 %v1125
        %1150 = vmatmul.bf16.gmra.mxu0 %v1088
        %v1151 = vpop.f32.mrf.mxu0
        %v1152 = vadd.f32 0.0, %v1151
        %v1153 = vpop.f32.mrf.mxu0
        %v1154 = vadd.f32 0.0, %v1153
        %1155 = vdwg.mxu0
        %v1156 = vadd.f32 %v1100, %v1138
        %v1157 = vadd.f32 %v1114, %v1152
        %v1158 = vadd.f32 %v1102, %v1140
        %v1159 = vadd.f32 %v1116, %v1154
        %1160 = vst [vmem:[#allocation3] sm:$0xff] %v1156
        %1161 = vst [vmem:[#allocation3 + $0x8] sm:$0xff] %v1158
        %1162 = vst [vmem:[#allocation3 + $0x10] sm:$0xff] %v1157
        %1163 = vst [vmem:[#allocation3 + $0x18] sm:$0xff] %v1159
        %v1164 = vld [vmem:[#allocation3] sm:$0xff]
        %v1165 = vld [vmem:[#allocation3 + $0x8] sm:$0xff]
        %v1166 = vld [vmem:[#allocation3 + $0x10] sm:$0xff]
        %v1167 = vld [vmem:[#allocation3 + $0x18] sm:$0xff]
        %v1168 = vpack.c.bf16 %v1164, %v1164
        %v1169 = vpack.c.bf16 %v1165, %v1165
        %v1170 = vpack.c.bf16 %v1166, %v1166
        %v1171 = vpack.c.bf16 %v1167, %v1167
        %v1172 = vunpack.c.l.bf16 %v1168
        %v1173 = vunpack.c.l.bf16 %v1169
        %v1174 = vunpack.c.l.bf16 %v1170
        %v1175 = vunpack.c.l.bf16 %v1171
        %v1176 = vsub.f32 %v1164, %v1172
        %v1177 = vsub.f32 %v1165, %v1173
        %v1178 = vsub.f32 %v1166, %v1174
        %v1179 = vsub.f32 %v1167, %v1175
        %v1180 = vpack.c.bf16 %v1177, %v1176
        %v1181 = vpack.c.bf16 %v1179, %v1178
        %v1186 = vunpack.c.l.b16 %v476
        %v1187 = vunpack.c.l.b16 %v477
        %v1188 = vunpack.c.l.b16 %v478
        %v1189 = vunpack.c.l.b16 %v479
        %v1190 = vpack.c.b16 %v1187, %v1186
        %v1191 = vpack.c.b16 %v1189, %v1188
        %v1196 = vunpack.c.l.b16 %v1168
        %v1197 = vunpack.c.l.b16 %v1169
        %v1198 = vunpack.c.l.b16 %v1170
        %v1199 = vunpack.c.l.b16 %v1171
        %v1200 = vpack.c.b16 %v1197, %v1196
        %v1201 = vpack.c.b16 %v1199, %v1198
        %vm1204 = vcmask 261120
        %v1206 = vsel %vm1204, %v1190, 0
        %v1209 = vsel %vm1204, %v1191, 0
        %1211 = vmatpush.bf16.msra.mxu0 0
        %1212 = vmatpush.bf16.msra.mxu0 0
        %1213 = vmatpush.bf16.msra.mxu0 0
        %1214 = vmatpush.bf16.msra.mxu0 0
        %1215 = vmatpush.bf16.msra.mxu0 0
        %1216 = vmatpush.bf16.msra.mxu0 0
        %1217 = vmatpush.bf16.msra.mxu0 %v1201
        %1218 = vmatpush.bf16.msra.mxu0 %v1200
        %1219 = vmatmul.bf16.gmra.mxu0 %v1206
        %v1220 = vpop.f32.mrf.mxu0
        %v1221 = vadd.f32 0.0, %v1220
        %v1222 = vpop.f32.mrf.mxu0
        %v1223 = vadd.f32 0.0, %v1222
        %1224 = vmatmul.bf16.gmra.mxu0 %v1209
        %v1225 = vpop.f32.mrf.mxu0
        %v1226 = vadd.f32 0.0, %v1225
        %v1227 = vpop.f32.mrf.mxu0
        %v1228 = vadd.f32 0.0, %v1227
        %1229 = vdwg.mxu0
        %v1234 = vunpack.c.l.b16 %v472
        %v1235 = vunpack.c.l.b16 %v473
        %v1236 = vunpack.c.l.b16 %v474
        %v1237 = vunpack.c.l.b16 %v475
        %v1238 = vpack.c.b16 %v1235, %v1234
        %v1239 = vpack.c.b16 %v1237, %v1236
        %v1241 = vsel %vm1204, %v1238, 0
        %v1244 = vsel %vm1204, %v1239, 0
        %1246 = vmatpush.bf16.msra.mxu0 0
        %1247 = vmatpush.bf16.msra.mxu0 0
        %1248 = vmatpush.bf16.msra.mxu0 0
        %1249 = vmatpush.bf16.msra.mxu0 0
        %1250 = vmatpush.bf16.msra.mxu0 0
        %1251 = vmatpush.bf16.msra.mxu0 0
        %1252 = vmatpush.bf16.msra.mxu0 %v1201
        %1253 = vmatpush.bf16.msra.mxu0 %v1200
        %1254 = vmatmul.bf16.gmra.mxu0 %v1241
        %v1255 = vpop.f32.mrf.mxu0
        %v1256 = vadd.f32 %v1221, %v1255
        %v1257 = vpop.f32.mrf.mxu0
        %v1258 = vadd.f32 %v1223, %v1257
        %1259 = vmatmul.bf16.gmra.mxu0 %v1244
        %v1260 = vpop.f32.mrf.mxu0
        %v1261 = vadd.f32 %v1226, %v1260
        %v1262 = vpop.f32.mrf.mxu0
        %v1263 = vadd.f32 %v1228, %v1262
        %1264 = vdwg.mxu0
        %1265 = vmatpush.bf16.msra.mxu0 0
        %1266 = vmatpush.bf16.msra.mxu0 0
        %1267 = vmatpush.bf16.msra.mxu0 0
        %1268 = vmatpush.bf16.msra.mxu0 0
        %1269 = vmatpush.bf16.msra.mxu0 0
        %1270 = vmatpush.bf16.msra.mxu0 0
        %1271 = vmatpush.bf16.msra.mxu0 %v1181
        %1272 = vmatpush.bf16.msra.mxu0 %v1180
        %1273 = vmatmul.bf16.gmra.mxu0 %v1241
        %v1274 = vpop.f32.mrf.mxu0
        %v1275 = vadd.f32 0.0, %v1274
        %v1276 = vpop.f32.mrf.mxu0
        %v1277 = vadd.f32 0.0, %v1276
        %1278 = vmatmul.bf16.gmra.mxu0 %v1244
        %v1279 = vpop.f32.mrf.mxu0
        %v1280 = vadd.f32 0.0, %v1279
        %v1281 = vpop.f32.mrf.mxu0
        %v1282 = vadd.f32 0.0, %v1281
        %1283 = vdwg.mxu0
        %v1284 = vadd.f32 %v1256, %v1275
        %v1285 = vadd.f32 %v1258, %v1277
        %v1286 = vadd.f32 %v1261, %v1280
        %v1287 = vadd.f32 %v1263, %v1282
        %v1288 = vmul.f32 %v1284, %v1284
        %v1289 = vmul.f32 %v1285, %v1285
        %v1290 = vmul.f32 %v1286, %v1286
        %v1291 = vmul.f32 %v1287, %v1287
        %v1292 = vadd.f32 %v1288, %v1290
        %v1293 = vadd.f32 %v1289, %v1291
        %v1294 = vadd.f32 %v1292, 1e-08
        %v1295 = vadd.f32 %v1293, 1e-08
        %v1296 = vlog2.pop %v1294
        %v1297 = vmul.f32 %v1296, 0.6931472
        %v1298 = vlog2.pop %v1295
        %v1299 = vmul.f32 %v1298, 0.6931472
        %v1300 = vadd.f32 %v1297, %v1299
        %1301 = vadd.xlane.f32.xlu0 %v1300
        %v1302 = vpop.xlane.xlu0 %1301
        %v1303 = vrot.slane %v1302, 4
        %v1304 = vadd.f32 %v1302, %v1303
        %v1305 = vrot.slane %v1304, 2
        %v1306 = vadd.f32 %v1304, %v1305
        %v1307 = vrot.slane %v1306, 1
        %v1308 = vadd.f32 %v1306, %v1307
        %s1309 = vtos %v1308
        %s1310 = ssub.f32 %s1309, -35072.977
        %s1311 = smul.f32 %s1310, 0.0069444445
        %v1312 = vstv %s1311
        %v1313 = vsub.f32 %v1297, %v1312
        %v1314 = vsub.f32 %v1299, %v1312
        %1315 = vst [vmem:[#allocation4] sm:$0xff] %v1313
        %1316 = vst [vmem:[#allocation4 + $0x8] sm:$0xff] %v1314
        %v1317 = vld [vmem:[#allocation4] sm:$0x1]
        %1318 = vst [vmem:[#allocation5] sm:$0x1] %v1317
        %v1319 = vld [vmem:[#allocation4 + $0x1] sm:$0x1]
        %1320 = vst [vmem:[#allocation5 + $0x8] sm:$0x1] %v1319
        %v1321 = vld [vmem:[#allocation4 + $0x2] sm:$0x1]
        %1322 = vst [vmem:[#allocation5 + $0x10] sm:$0x1] %v1321
        %v1323 = vld [vmem:[#allocation4 + $0x3] sm:$0x1]
        %1324 = vst [vmem:[#allocation5 + $0x18] sm:$0x1] %v1323
        %v1325 = vld [vmem:[#allocation4 + $0x4] sm:$0x1]
        %1326 = vst [vmem:[#allocation5 + $0x20] sm:$0x1] %v1325
        %v1327 = vld [vmem:[#allocation4 + $0x5] sm:$0x1]
        %1328 = vst [vmem:[#allocation5 + $0x28] sm:$0x1] %v1327
        %v1329 = vld [vmem:[#allocation4 + $0x6] sm:$0x1]
        %1330 = vst [vmem:[#allocation5 + $0x30] sm:$0x1] %v1329
        %v1331 = vld [vmem:[#allocation4 + $0x7] sm:$0x1]
        %1332 = vst [vmem:[#allocation5 + $0x38] sm:$0x1] %v1331
        %v1333 = vld [vmem:[#allocation4 + $0x8] sm:$0x1]
        %1334 = vst [vmem:[#allocation5 + $0x40] sm:$0x1] %v1333
        %v1335 = vld [vmem:[#allocation4 + $0x9] sm:$0x1]
        %1336 = vst [vmem:[#allocation5 + $0x48] sm:$0x1] %v1335
        %v1337 = vld [vmem:[#allocation4 + $0xa] sm:$0x1]
        %1338 = vst [vmem:[#allocation5 + $0x50] sm:$0x1] %v1337
        %v1339 = vld [vmem:[#allocation4 + $0xb] sm:$0x1]
        %1340 = vst [vmem:[#allocation5 + $0x58] sm:$0x1] %v1339
        %v1341 = vld [vmem:[#allocation4 + $0xc] sm:$0x1]
        %1342 = vst [vmem:[#allocation5 + $0x60] sm:$0x1] %v1341
        %v1343 = vld [vmem:[#allocation4 + $0xd] sm:$0x1]
        %1344 = vst [vmem:[#allocation5 + $0x68] sm:$0x1] %v1343
        %v1345 = vld [vmem:[#allocation4 + $0xe] sm:$0x1]
        %1346 = vst [vmem:[#allocation5 + $0x70] sm:$0x1] %v1345
        %v1347 = vld [vmem:[#allocation4 + $0xf] sm:$0x1]
        %1348 = vst [vmem:[#allocation5 + $0x78] sm:$0x1] %v1347
        %v1349 = vld [vmem:[#allocation5] sm:$0xff]
        %v1350 = vld [vmem:[#allocation5 + $0x8] sm:$0xff]
        %v1351 = vld [vmem:[#allocation5 + $0x10] sm:$0xff]
        %v1352 = vld [vmem:[#allocation5 + $0x18] sm:$0xff]
        %v1353 = vld [vmem:[#allocation5 + $0x20] sm:$0xff]
        %v1354 = vld [vmem:[#allocation5 + $0x28] sm:$0xff]
        %v1355 = vld [vmem:[#allocation5 + $0x30] sm:$0xff]
        %v1356 = vld [vmem:[#allocation5 + $0x38] sm:$0xff]
        %v1357 = vld [vmem:[#allocation5 + $0x40] sm:$0xff]
        %v1358 = vld [vmem:[#allocation5 + $0x48] sm:$0xff]
        %v1359 = vld [vmem:[#allocation5 + $0x50] sm:$0xff]
        %v1360 = vld [vmem:[#allocation5 + $0x58] sm:$0xff]
        %v1361 = vld [vmem:[#allocation5 + $0x60] sm:$0xff]
        %v1362 = vld [vmem:[#allocation5 + $0x68] sm:$0xff]
        %v1363 = vld [vmem:[#allocation5 + $0x70] sm:$0xff]
        %v1364 = vld [vmem:[#allocation5 + $0x78] sm:$0xff]
        %v1365 = vpack.c.bf16 %v1349, %v1349
        %v1366 = vpack.c.bf16 %v1350, %v1350
        %v1367 = vpack.c.bf16 %v1351, %v1351
        %v1368 = vpack.c.bf16 %v1352, %v1352
        %v1369 = vpack.c.bf16 %v1353, %v1353
        %v1370 = vpack.c.bf16 %v1354, %v1354
        %v1371 = vpack.c.bf16 %v1355, %v1355
        %v1372 = vpack.c.bf16 %v1356, %v1356
        %v1373 = vpack.c.bf16 %v1357, %v1357
        %v1374 = vpack.c.bf16 %v1358, %v1358
        %v1375 = vpack.c.bf16 %v1359, %v1359
        %v1376 = vpack.c.bf16 %v1360, %v1360
        %v1377 = vpack.c.bf16 %v1361, %v1361
        %v1378 = vpack.c.bf16 %v1362, %v1362
        %v1379 = vpack.c.bf16 %v1363, %v1363
        %v1380 = vpack.c.bf16 %v1364, %v1364
        %v1637 = vunpack.c.l.b16 %v736
        %v1638 = vunpack.c.l.b16 %v737
        %v1639 = vunpack.c.l.b16 %v738
        %v1640 = vunpack.c.l.b16 %v739
        %v1641 = vunpack.c.l.b16 %v740
        %v1642 = vunpack.c.l.b16 %v741
        %v1643 = vunpack.c.l.b16 %v742
        %v1644 = vunpack.c.l.b16 %v743
        %v1645 = vunpack.c.l.b16 %v744
        %v1646 = vunpack.c.l.b16 %v745
        %v1647 = vunpack.c.l.b16 %v746
        %v1648 = vunpack.c.l.b16 %v747
        %v1649 = vunpack.c.l.b16 %v748
        %v1650 = vunpack.c.l.b16 %v749
        %v1651 = vunpack.c.l.b16 %v750
        %v1652 = vunpack.c.l.b16 %v751
        %v1653 = vunpack.c.l.b16 %v752
        %v1654 = vunpack.c.l.b16 %v753
        %v1655 = vunpack.c.l.b16 %v754
        %v1656 = vunpack.c.l.b16 %v755
        %v1657 = vunpack.c.l.b16 %v756
        %v1658 = vunpack.c.l.b16 %v757
        %v1659 = vunpack.c.l.b16 %v758
        %v1660 = vunpack.c.l.b16 %v759
        %v1661 = vunpack.c.l.b16 %v760
        %v1662 = vunpack.c.l.b16 %v761
        %v1663 = vunpack.c.l.b16 %v762
        %v1664 = vunpack.c.l.b16 %v763
        %v1665 = vunpack.c.l.b16 %v764
        %v1666 = vunpack.c.l.b16 %v765
        %v1667 = vunpack.c.l.b16 %v766
        %v1668 = vunpack.c.l.b16 %v767
        %v1669 = vunpack.c.l.b16 %v768
        %v1670 = vunpack.c.l.b16 %v769
        %v1671 = vunpack.c.l.b16 %v770
        %v1672 = vunpack.c.l.b16 %v771
        %v1673 = vunpack.c.l.b16 %v772
        %v1674 = vunpack.c.l.b16 %v773
        %v1675 = vunpack.c.l.b16 %v774
        %v1676 = vunpack.c.l.b16 %v775
        %v1677 = vunpack.c.l.b16 %v776
        %v1678 = vunpack.c.l.b16 %v777
        %v1679 = vunpack.c.l.b16 %v778
        %v1680 = vunpack.c.l.b16 %v779
        %v1681 = vunpack.c.l.b16 %v780
        %v1682 = vunpack.c.l.b16 %v781
        %v1683 = vunpack.c.l.b16 %v782
        %v1684 = vunpack.c.l.b16 %v783
        %v1685 = vunpack.c.l.b16 %v784
        %v1686 = vunpack.c.l.b16 %v785
        %v1687 = vunpack.c.l.b16 %v786
        %v1688 = vunpack.c.l.b16 %v787
        %v1689 = vunpack.c.l.b16 %v788
        %v1690 = vunpack.c.l.b16 %v789
        %v1691 = vunpack.c.l.b16 %v790
        %v1692 = vunpack.c.l.b16 %v791
        %v1693 = vunpack.c.l.b16 %v792
        %v1694 = vunpack.c.l.b16 %v793
        %v1695 = vunpack.c.l.b16 %v794
        %v1696 = vunpack.c.l.b16 %v795
        %v1697 = vunpack.c.l.b16 %v796
        %v1698 = vunpack.c.l.b16 %v797
        %v1699 = vunpack.c.l.b16 %v798
        %v1700 = vunpack.c.l.b16 %v799
        %v1701 = vunpack.c.l.b16 %v800
        %v1702 = vunpack.c.l.b16 %v801
        %v1703 = vunpack.c.l.b16 %v802
        %v1704 = vunpack.c.l.b16 %v803
        %v1705 = vunpack.c.l.b16 %v804
        %v1706 = vunpack.c.l.b16 %v805
        %v1707 = vunpack.c.l.b16 %v806
        %v1708 = vunpack.c.l.b16 %v807
        %v1709 = vunpack.c.l.b16 %v808
        %v1710 = vunpack.c.l.b16 %v809
        %v1711 = vunpack.c.l.b16 %v810
        %v1712 = vunpack.c.l.b16 %v811
        %v1713 = vunpack.c.l.b16 %v812
        %v1714 = vunpack.c.l.b16 %v813
        %v1715 = vunpack.c.l.b16 %v814
        %v1716 = vunpack.c.l.b16 %v815
        %v1717 = vunpack.c.l.b16 %v816
        %v1718 = vunpack.c.l.b16 %v817
        %v1719 = vunpack.c.l.b16 %v818
        %v1720 = vunpack.c.l.b16 %v819
        %v1721 = vunpack.c.l.b16 %v820
        %v1722 = vunpack.c.l.b16 %v821
        %v1723 = vunpack.c.l.b16 %v822
        %v1724 = vunpack.c.l.b16 %v823
        %v1725 = vunpack.c.l.b16 %v824
        %v1726 = vunpack.c.l.b16 %v825
        %v1727 = vunpack.c.l.b16 %v826
        %v1728 = vunpack.c.l.b16 %v827
        %v1729 = vunpack.c.l.b16 %v828
        %v1730 = vunpack.c.l.b16 %v829
        %v1731 = vunpack.c.l.b16 %v830
        %v1732 = vunpack.c.l.b16 %v831
        %v1733 = vunpack.c.l.b16 %v832
        %v1734 = vunpack.c.l.b16 %v833
        %v1735 = vunpack.c.l.b16 %v834
        %v1736 = vunpack.c.l.b16 %v835
        %v1737 = vunpack.c.l.b16 %v836
        %v1738 = vunpack.c.l.b16 %v837
        %v1739 = vunpack.c.l.b16 %v838
        %v1740 = vunpack.c.l.b16 %v839
        %v1741 = vunpack.c.l.b16 %v840
        %v1742 = vunpack.c.l.b16 %v841
        %v1743 = vunpack.c.l.b16 %v842
        %v1744 = vunpack.c.l.b16 %v843
        %v1745 = vunpack.c.l.b16 %v844
        %v1746 = vunpack.c.l.b16 %v845
        %v1747 = vunpack.c.l.b16 %v846
        %v1748 = vunpack.c.l.b16 %v847
        %v1749 = vunpack.c.l.b16 %v848
        %v1750 = vunpack.c.l.b16 %v849
        %v1751 = vunpack.c.l.b16 %v850
        %v1752 = vunpack.c.l.b16 %v851
        %v1753 = vunpack.c.l.b16 %v852
        %v1754 = vunpack.c.l.b16 %v853
        %v1755 = vunpack.c.l.b16 %v854
        %v1756 = vunpack.c.l.b16 %v855
        %v1757 = vunpack.c.l.b16 %v856
        %v1758 = vunpack.c.l.b16 %v857
        %v1759 = vunpack.c.l.b16 %v858
        %v1760 = vunpack.c.l.b16 %v859
        %v1761 = vunpack.c.l.b16 %v860
        %v1762 = vunpack.c.l.b16 %v861
        %v1763 = vunpack.c.l.b16 %v862
        %v1764 = vunpack.c.l.b16 %v863
        %v1765 = vunpack.c.l.b16 %v864
        %v1766 = vunpack.c.l.b16 %v865
        %v1767 = vunpack.c.l.b16 %v866
        %v1768 = vunpack.c.l.b16 %v867
        %v1769 = vunpack.c.l.b16 %v868
        %v1770 = vunpack.c.l.b16 %v869
        %v1771 = vunpack.c.l.b16 %v870
        %v1772 = vunpack.c.l.b16 %v871
        %v1773 = vunpack.c.l.b16 %v872
        %v1774 = vunpack.c.l.b16 %v873
        %v1775 = vunpack.c.l.b16 %v874
        %v1776 = vunpack.c.l.b16 %v875
        %v1777 = vunpack.c.l.b16 %v876
        %v1778 = vunpack.c.l.b16 %v877
        %v1779 = vunpack.c.l.b16 %v878
        %v1780 = vunpack.c.l.b16 %v879
        %v1781 = vunpack.c.l.b16 %v880
        %v1782 = vunpack.c.l.b16 %v881
        %v1783 = vunpack.c.l.b16 %v882
        %v1784 = vunpack.c.l.b16 %v883
        %v1785 = vunpack.c.l.b16 %v884
        %v1786 = vunpack.c.l.b16 %v885
        %v1787 = vunpack.c.l.b16 %v886
        %v1788 = vunpack.c.l.b16 %v887
        %v1789 = vunpack.c.l.b16 %v888
        %v1790 = vunpack.c.l.b16 %v889
        %v1791 = vunpack.c.l.b16 %v890
        %v1792 = vunpack.c.l.b16 %v891
        %v1793 = vunpack.c.l.b16 %v892
        %v1794 = vunpack.c.l.b16 %v893
        %v1795 = vunpack.c.l.b16 %v894
        %v1796 = vunpack.c.l.b16 %v895
        %v1797 = vunpack.c.l.b16 %v896
        %v1798 = vunpack.c.l.b16 %v897
        %v1799 = vunpack.c.l.b16 %v898
        %v1800 = vunpack.c.l.b16 %v899
        %v1801 = vunpack.c.l.b16 %v900
        %v1802 = vunpack.c.l.b16 %v901
        %v1803 = vunpack.c.l.b16 %v902
        %v1804 = vunpack.c.l.b16 %v903
        %v1805 = vunpack.c.l.b16 %v904
        %v1806 = vunpack.c.l.b16 %v905
        %v1807 = vunpack.c.l.b16 %v906
        %v1808 = vunpack.c.l.b16 %v907
        %v1809 = vunpack.c.l.b16 %v908
        %v1810 = vunpack.c.l.b16 %v909
        %v1811 = vunpack.c.l.b16 %v910
        %v1812 = vunpack.c.l.b16 %v911
        %v1813 = vunpack.c.l.b16 %v912
        %v1814 = vunpack.c.l.b16 %v913
        %v1815 = vunpack.c.l.b16 %v914
        %v1816 = vunpack.c.l.b16 %v915
        %v1817 = vunpack.c.l.b16 %v916
        %v1818 = vunpack.c.l.b16 %v917
        %v1819 = vunpack.c.l.b16 %v918
        %v1820 = vunpack.c.l.b16 %v919
        %v1821 = vunpack.c.l.b16 %v920
        %v1822 = vunpack.c.l.b16 %v921
        %v1823 = vunpack.c.l.b16 %v922
        %v1824 = vunpack.c.l.b16 %v923
        %v1825 = vunpack.c.l.b16 %v924
        %v1826 = vunpack.c.l.b16 %v925
        %v1827 = vunpack.c.l.b16 %v926
        %v1828 = vunpack.c.l.b16 %v927
        %v1829 = vunpack.c.l.b16 %v928
        %v1830 = vunpack.c.l.b16 %v929
        %v1831 = vunpack.c.l.b16 %v930
        %v1832 = vunpack.c.l.b16 %v931
        %v1833 = vunpack.c.l.b16 %v932
        %v1834 = vunpack.c.l.b16 %v933
        %v1835 = vunpack.c.l.b16 %v934
        %v1836 = vunpack.c.l.b16 %v935
        %v1837 = vunpack.c.l.b16 %v936
        %v1838 = vunpack.c.l.b16 %v937
        %v1839 = vunpack.c.l.b16 %v938
        %v1840 = vunpack.c.l.b16 %v939
        %v1841 = vunpack.c.l.b16 %v940
        %v1842 = vunpack.c.l.b16 %v941
        %v1843 = vunpack.c.l.b16 %v942
        %v1844 = vunpack.c.l.b16 %v943
        %v1845 = vunpack.c.l.b16 %v944
        %v1846 = vunpack.c.l.b16 %v945
        %v1847 = vunpack.c.l.b16 %v946
        %v1848 = vunpack.c.l.b16 %v947
        %v1849 = vunpack.c.l.b16 %v948
        %v1850 = vunpack.c.l.b16 %v949
        %v1851 = vunpack.c.l.b16 %v950
        %v1852 = vunpack.c.l.b16 %v951
        %v1853 = vunpack.c.l.b16 %v952
        %v1854 = vunpack.c.l.b16 %v953
        %v1855 = vunpack.c.l.b16 %v954
        %v1856 = vunpack.c.l.b16 %v955
        %v1857 = vunpack.c.l.b16 %v956
        %v1858 = vunpack.c.l.b16 %v957
        %v1859 = vunpack.c.l.b16 %v958
        %v1860 = vunpack.c.l.b16 %v959
        %v1861 = vunpack.c.l.b16 %v960
        %v1862 = vunpack.c.l.b16 %v961
        %v1863 = vunpack.c.l.b16 %v962
        %v1864 = vunpack.c.l.b16 %v963
        %v1865 = vunpack.c.l.b16 %v964
        %v1866 = vunpack.c.l.b16 %v965
        %v1867 = vunpack.c.l.b16 %v966
        %v1868 = vunpack.c.l.b16 %v967
        %v1869 = vunpack.c.l.b16 %v968
        %v1870 = vunpack.c.l.b16 %v969
        %v1871 = vunpack.c.l.b16 %v970
        %v1872 = vunpack.c.l.b16 %v971
        %v1873 = vunpack.c.l.b16 %v972
        %v1874 = vunpack.c.l.b16 %v973
        %v1875 = vunpack.c.l.b16 %v974
        %v1876 = vunpack.c.l.b16 %v975
        %v1877 = vunpack.c.l.b16 %v976
        %v1878 = vunpack.c.l.b16 %v977
        %v1879 = vunpack.c.l.b16 %v978
        %v1880 = vunpack.c.l.b16 %v979
        %v1881 = vunpack.c.l.b16 %v980
        %v1882 = vunpack.c.l.b16 %v981
        %v1883 = vunpack.c.l.b16 %v982
        %v1884 = vunpack.c.l.b16 %v983
        %v1885 = vunpack.c.l.b16 %v984
        %v1886 = vunpack.c.l.b16 %v985
        %v1887 = vunpack.c.l.b16 %v986
        %v1888 = vunpack.c.l.b16 %v987
        %v1889 = vunpack.c.l.b16 %v988
        %v1890 = vunpack.c.l.b16 %v989
        %v1891 = vunpack.c.l.b16 %v990
        %v1892 = vunpack.c.l.b16 %v991
        %v1893 = vpack.c.b16 %v1638, %v1637
        %v1894 = vpack.c.b16 %v1640, %v1639
        %v1895 = vpack.c.b16 %v1642, %v1641
        %v1896 = vpack.c.b16 %v1644, %v1643
        %v1897 = vpack.c.b16 %v1646, %v1645
        %v1898 = vpack.c.b16 %v1648, %v1647
        %v1899 = vpack.c.b16 %v1650, %v1649
        %v1900 = vpack.c.b16 %v1652, %v1651
        %v1901 = vpack.c.b16 %v1654, %v1653
        %v1902 = vpack.c.b16 %v1656, %v1655
        %v1903 = vpack.c.b16 %v1658, %v1657
        %v1904 = vpack.c.b16 %v1660, %v1659
        %v1905 = vpack.c.b16 %v1662, %v1661
        %v1906 = vpack.c.b16 %v1664, %v1663
        %v1907 = vpack.c.b16 %v1666, %v1665
        %v1908 = vpack.c.b16 %v1668, %v1667
        %v1909 = vpack.c.b16 %v1670, %v1669
        %v1910 = vpack.c.b16 %v1672, %v1671
        %v1911 = vpack.c.b16 %v1674, %v1673
        %v1912 = vpack.c.b16 %v1676, %v1675
        %v1913 = vpack.c.b16 %v1678, %v1677
        %v1914 = vpack.c.b16 %v1680, %v1679
        %v1915 = vpack.c.b16 %v1682, %v1681
        %v1916 = vpack.c.b16 %v1684, %v1683
        %v1917 = vpack.c.b16 %v1686, %v1685
        %v1918 = vpack.c.b16 %v1688, %v1687
        %v1919 = vpack.c.b16 %v1690, %v1689
        %v1920 = vpack.c.b16 %v1692, %v1691
        %v1921 = vpack.c.b16 %v1694, %v1693
        %v1922 = vpack.c.b16 %v1696, %v1695
        %v1923 = vpack.c.b16 %v1698, %v1697
        %v1924 = vpack.c.b16 %v1700, %v1699
        %v1925 = vpack.c.b16 %v1702, %v1701
        %v1926 = vpack.c.b16 %v1704, %v1703
        %v1927 = vpack.c.b16 %v1706, %v1705
        %v1928 = vpack.c.b16 %v1708, %v1707
        %v1929 = vpack.c.b16 %v1710, %v1709
        %v1930 = vpack.c.b16 %v1712, %v1711
        %v1931 = vpack.c.b16 %v1714, %v1713
        %v1932 = vpack.c.b16 %v1716, %v1715
        %v1933 = vpack.c.b16 %v1718, %v1717
        %v1934 = vpack.c.b16 %v1720, %v1719
        %v1935 = vpack.c.b16 %v1722, %v1721
        %v1936 = vpack.c.b16 %v1724, %v1723
        %v1937 = vpack.c.b16 %v1726, %v1725
        %v1938 = vpack.c.b16 %v1728, %v1727
        %v1939 = vpack.c.b16 %v1730, %v1729
        %v1940 = vpack.c.b16 %v1732, %v1731
        %v1941 = vpack.c.b16 %v1734, %v1733
        %v1942 = vpack.c.b16 %v1736, %v1735
        %v1943 = vpack.c.b16 %v1738, %v1737
        %v1944 = vpack.c.b16 %v1740, %v1739
        %v1945 = vpack.c.b16 %v1742, %v1741
        %v1946 = vpack.c.b16 %v1744, %v1743
        %v1947 = vpack.c.b16 %v1746, %v1745
        %v1948 = vpack.c.b16 %v1748, %v1747
        %v1949 = vpack.c.b16 %v1750, %v1749
        %v1950 = vpack.c.b16 %v1752, %v1751
        %v1951 = vpack.c.b16 %v1754, %v1753
        %v1952 = vpack.c.b16 %v1756, %v1755
        %v1953 = vpack.c.b16 %v1758, %v1757
        %v1954 = vpack.c.b16 %v1760, %v1759
        %v1955 = vpack.c.b16 %v1762, %v1761
        %v1956 = vpack.c.b16 %v1764, %v1763
        %v1957 = vpack.c.b16 %v1766, %v1765
        %v1958 = vpack.c.b16 %v1768, %v1767
        %v1959 = vpack.c.b16 %v1770, %v1769
        %v1960 = vpack.c.b16 %v1772, %v1771
        %v1961 = vpack.c.b16 %v1774, %v1773
        %v1962 = vpack.c.b16 %v1776, %v1775
        %v1963 = vpack.c.b16 %v1778, %v1777
        %v1964 = vpack.c.b16 %v1780, %v1779
        %v1965 = vpack.c.b16 %v1782, %v1781
        %v1966 = vpack.c.b16 %v1784, %v1783
        %v1967 = vpack.c.b16 %v1786, %v1785
        %v1968 = vpack.c.b16 %v1788, %v1787
        %v1969 = vpack.c.b16 %v1790, %v1789
        %v1970 = vpack.c.b16 %v1792, %v1791
        %v1971 = vpack.c.b16 %v1794, %v1793
        %v1972 = vpack.c.b16 %v1796, %v1795
        %v1973 = vpack.c.b16 %v1798, %v1797
        %v1974 = vpack.c.b16 %v1800, %v1799
        %v1975 = vpack.c.b16 %v1802, %v1801
        %v1976 = vpack.c.b16 %v1804, %v1803
        %v1977 = vpack.c.b16 %v1806, %v1805
        %v1978 = vpack.c.b16 %v1808, %v1807
        %v1979 = vpack.c.b16 %v1810, %v1809
        %v1980 = vpack.c.b16 %v1812, %v1811
        %v1981 = vpack.c.b16 %v1814, %v1813
        %v1982 = vpack.c.b16 %v1816, %v1815
        %v1983 = vpack.c.b16 %v1818, %v1817
        %v1984 = vpack.c.b16 %v1820, %v1819
        %v1985 = vpack.c.b16 %v1822, %v1821
        %v1986 = vpack.c.b16 %v1824, %v1823
        %v1987 = vpack.c.b16 %v1826, %v1825
        %v1988 = vpack.c.b16 %v1828, %v1827
        %v1989 = vpack.c.b16 %v1830, %v1829
        %v1990 = vpack.c.b16 %v1832, %v1831
        %v1991 = vpack.c.b16 %v1834, %v1833
        %v1992 = vpack.c.b16 %v1836, %v1835
        %v1993 = vpack.c.b16 %v1838, %v1837
        %v1994 = vpack.c.b16 %v1840, %v1839
        %v1995 = vpack.c.b16 %v1842, %v1841
        %v1996 = vpack.c.b16 %v1844, %v1843
        %v1997 = vpack.c.b16 %v1846, %v1845
        %v1998 = vpack.c.b16 %v1848, %v1847
        %v1999 = vpack.c.b16 %v1850, %v1849
        %v2000 = vpack.c.b16 %v1852, %v1851
        %v2001 = vpack.c.b16 %v1854, %v1853
        %v2002 = vpack.c.b16 %v1856, %v1855
        %v2003 = vpack.c.b16 %v1858, %v1857
        %v2004 = vpack.c.b16 %v1860, %v1859
        %v2005 = vpack.c.b16 %v1862, %v1861
        %v2006 = vpack.c.b16 %v1864, %v1863
        %v2007 = vpack.c.b16 %v1866, %v1865
        %v2008 = vpack.c.b16 %v1868, %v1867
        %v2009 = vpack.c.b16 %v1870, %v1869
        %v2010 = vpack.c.b16 %v1872, %v1871
        %v2011 = vpack.c.b16 %v1874, %v1873
        %v2012 = vpack.c.b16 %v1876, %v1875
        %v2013 = vpack.c.b16 %v1878, %v1877
        %v2014 = vpack.c.b16 %v1880, %v1879
        %v2015 = vpack.c.b16 %v1882, %v1881
        %v2016 = vpack.c.b16 %v1884, %v1883
        %v2017 = vpack.c.b16 %v1886, %v1885
        %v2018 = vpack.c.b16 %v1888, %v1887
        %v2019 = vpack.c.b16 %v1890, %v1889
        %v2020 = vpack.c.b16 %v1892, %v1891
        %2149 = vmatpush.bf16.msra.mxu0 %v1900
        %2150 = vmatpush.bf16.msra.mxu0 %v1899
        %2151 = vmatpush.bf16.msra.mxu0 %v1898
        %2152 = vmatpush.bf16.msra.mxu0 %v1897
        %2153 = vmatpush.bf16.msra.mxu0 %v1896
        %2154 = vmatpush.bf16.msra.mxu0 %v1895
        %2155 = vmatpush.bf16.msra.mxu0 %v1894
        %2156 = vmatpush.bf16.msra.mxu0 %v1893
        %2157 = vmatmul.bf16.gmra.mxu0 %v1365
        %v2158 = vpop.f32.mrf.mxu0
        %v2159 = vadd.f32 0.0, %v2158
        %v2160 = vpop.f32.mrf.mxu0
        %2161 = vdwg.mxu0
        %2162 = vmatpush.bf16.msra.mxu0 %v1908
        %2163 = vmatpush.bf16.msra.mxu0 %v1907
        %2164 = vmatpush.bf16.msra.mxu0 %v1906
        %2165 = vmatpush.bf16.msra.mxu0 %v1905
        %2166 = vmatpush.bf16.msra.mxu0 %v1904
        %2167 = vmatpush.bf16.msra.mxu0 %v1903
        %2168 = vmatpush.bf16.msra.mxu0 %v1902
        %2169 = vmatpush.bf16.msra.mxu0 %v1901
        %2170 = vmatmul.bf16.gmra.mxu0 %v1366
        %v2171 = vpop.f32.mrf.mxu0
        %v2172 = vadd.f32 %v2159, %v2171
        %v2173 = vpop.f32.mrf.mxu0
        %2174 = vdwg.mxu0
        %2175 = vmatpush.bf16.msra.mxu0 %v1916
        %2176 = vmatpush.bf16.msra.mxu0 %v1915
        %2177 = vmatpush.bf16.msra.mxu0 %v1914
        %2178 = vmatpush.bf16.msra.mxu0 %v1913
        %2179 = vmatpush.bf16.msra.mxu0 %v1912
        %2180 = vmatpush.bf16.msra.mxu0 %v1911
        %2181 = vmatpush.bf16.msra.mxu0 %v1910
        %2182 = vmatpush.bf16.msra.mxu0 %v1909
        %2183 = vmatmul.bf16.gmra.mxu0 %v1367
        %v2184 = vpop.f32.mrf.mxu0
        %v2185 = vadd.f32 %v2172, %v2184
        %v2186 = vpop.f32.mrf.mxu0
        %2187 = vdwg.mxu0
        %2188 = vmatpush.bf16.msra.mxu0 %v1924
        %2189 = vmatpush.bf16.msra.mxu0 %v1923
        %2190 = vmatpush.bf16.msra.mxu0 %v1922
        %2191 = vmatpush.bf16.msra.mxu0 %v1921
        %2192 = vmatpush.bf16.msra.mxu0 %v1920
        %2193 = vmatpush.bf16.msra.mxu0 %v1919
        %2194 = vmatpush.bf16.msra.mxu0 %v1918
        %2195 = vmatpush.bf16.msra.mxu0 %v1917
        %2196 = vmatmul.bf16.gmra.mxu0 %v1368
        %v2197 = vpop.f32.mrf.mxu0
        %v2198 = vadd.f32 %v2185, %v2197
        %v2199 = vpop.f32.mrf.mxu0
        %2200 = vdwg.mxu0
        %2201 = vmatpush.bf16.msra.mxu0 %v1932
        %2202 = vmatpush.bf16.msra.mxu0 %v1931
        %2203 = vmatpush.bf16.msra.mxu0 %v1930
        %2204 = vmatpush.bf16.msra.mxu0 %v1929
        %2205 = vmatpush.bf16.msra.mxu0 %v1928
        %2206 = vmatpush.bf16.msra.mxu0 %v1927
        %2207 = vmatpush.bf16.msra.mxu0 %v1926
        %2208 = vmatpush.bf16.msra.mxu0 %v1925
        %2209 = vmatmul.bf16.gmra.mxu0 %v1369
        %v2210 = vpop.f32.mrf.mxu0
        %v2211 = vadd.f32 %v2198, %v2210
        %v2212 = vpop.f32.mrf.mxu0
        %2213 = vdwg.mxu0
        %2214 = vmatpush.bf16.msra.mxu0 %v1940
        %2215 = vmatpush.bf16.msra.mxu0 %v1939
        %2216 = vmatpush.bf16.msra.mxu0 %v1938
        %2217 = vmatpush.bf16.msra.mxu0 %v1937
        %2218 = vmatpush.bf16.msra.mxu0 %v1936
        %2219 = vmatpush.bf16.msra.mxu0 %v1935
        %2220 = vmatpush.bf16.msra.mxu0 %v1934
        %2221 = vmatpush.bf16.msra.mxu0 %v1933
        %2222 = vmatmul.bf16.gmra.mxu0 %v1370
        %v2223 = vpop.f32.mrf.mxu0
        %v2224 = vadd.f32 %v2211, %v2223
        %v2225 = vpop.f32.mrf.mxu0
        %2226 = vdwg.mxu0
        %2227 = vmatpush.bf16.msra.mxu0 %v1948
        %2228 = vmatpush.bf16.msra.mxu0 %v1947
        %2229 = vmatpush.bf16.msra.mxu0 %v1946
        %2230 = vmatpush.bf16.msra.mxu0 %v1945
        %2231 = vmatpush.bf16.msra.mxu0 %v1944
        %2232 = vmatpush.bf16.msra.mxu0 %v1943
        %2233 = vmatpush.bf16.msra.mxu0 %v1942
        %2234 = vmatpush.bf16.msra.mxu0 %v1941
        %2235 = vmatmul.bf16.gmra.mxu0 %v1371
        %v2236 = vpop.f32.mrf.mxu0
        %v2237 = vadd.f32 %v2224, %v2236
        %v2238 = vpop.f32.mrf.mxu0
        %2239 = vdwg.mxu0
        %2240 = vmatpush.bf16.msra.mxu0 %v1956
        %2241 = vmatpush.bf16.msra.mxu0 %v1955
        %2242 = vmatpush.bf16.msra.mxu0 %v1954
        %2243 = vmatpush.bf16.msra.mxu0 %v1953
        %2244 = vmatpush.bf16.msra.mxu0 %v1952
        %2245 = vmatpush.bf16.msra.mxu0 %v1951
        %2246 = vmatpush.bf16.msra.mxu0 %v1950
        %2247 = vmatpush.bf16.msra.mxu0 %v1949
        %2248 = vmatmul.bf16.gmra.mxu0 %v1372
        %v2249 = vpop.f32.mrf.mxu0
        %v2250 = vadd.f32 %v2237, %v2249
        %v2251 = vpop.f32.mrf.mxu0
        %2252 = vdwg.mxu0
        %2253 = vmatpush.bf16.msra.mxu0 %v1964
        %2254 = vmatpush.bf16.msra.mxu0 %v1963
        %2255 = vmatpush.bf16.msra.mxu0 %v1962
        %2256 = vmatpush.bf16.msra.mxu0 %v1961
        %2257 = vmatpush.bf16.msra.mxu0 %v1960
        %2258 = vmatpush.bf16.msra.mxu0 %v1959
        %2259 = vmatpush.bf16.msra.mxu0 %v1958
        %2260 = vmatpush.bf16.msra.mxu0 %v1957
        %2261 = vmatmul.bf16.gmra.mxu0 %v1373
        %v2262 = vpop.f32.mrf.mxu0
        %v2263 = vadd.f32 %v2250, %v2262
        %v2264 = vpop.f32.mrf.mxu0
        %2265 = vdwg.mxu0
        %2266 = vmatpush.bf16.msra.mxu0 %v1972
        %2267 = vmatpush.bf16.msra.mxu0 %v1971
        %2268 = vmatpush.bf16.msra.mxu0 %v1970
        %2269 = vmatpush.bf16.msra.mxu0 %v1969
        %2270 = vmatpush.bf16.msra.mxu0 %v1968
        %2271 = vmatpush.bf16.msra.mxu0 %v1967
        %2272 = vmatpush.bf16.msra.mxu0 %v1966
        %2273 = vmatpush.bf16.msra.mxu0 %v1965
        %2274 = vmatmul.bf16.gmra.mxu0 %v1374
        %v2275 = vpop.f32.mrf.mxu0
        %v2276 = vadd.f32 %v2263, %v2275
        %v2277 = vpop.f32.mrf.mxu0
        %2278 = vdwg.mxu0
        %2279 = vmatpush.bf16.msra.mxu0 %v1980
        %2280 = vmatpush.bf16.msra.mxu0 %v1979
        %2281 = vmatpush.bf16.msra.mxu0 %v1978
        %2282 = vmatpush.bf16.msra.mxu0 %v1977
        %2283 = vmatpush.bf16.msra.mxu0 %v1976
        %2284 = vmatpush.bf16.msra.mxu0 %v1975
        %2285 = vmatpush.bf16.msra.mxu0 %v1974
        %2286 = vmatpush.bf16.msra.mxu0 %v1973
        %2287 = vmatmul.bf16.gmra.mxu0 %v1375
        %v2288 = vpop.f32.mrf.mxu0
        %v2289 = vadd.f32 %v2276, %v2288
        %v2290 = vpop.f32.mrf.mxu0
        %2291 = vdwg.mxu0
        %2292 = vmatpush.bf16.msra.mxu0 %v1988
        %2293 = vmatpush.bf16.msra.mxu0 %v1987
        %2294 = vmatpush.bf16.msra.mxu0 %v1986
        %2295 = vmatpush.bf16.msra.mxu0 %v1985
        %2296 = vmatpush.bf16.msra.mxu0 %v1984
        %2297 = vmatpush.bf16.msra.mxu0 %v1983
        %2298 = vmatpush.bf16.msra.mxu0 %v1982
        %2299 = vmatpush.bf16.msra.mxu0 %v1981
        %2300 = vmatmul.bf16.gmra.mxu0 %v1376
        %v2301 = vpop.f32.mrf.mxu0
        %v2302 = vadd.f32 %v2289, %v2301
        %v2303 = vpop.f32.mrf.mxu0
        %2304 = vdwg.mxu0
        %2305 = vmatpush.bf16.msra.mxu0 %v1996
        %2306 = vmatpush.bf16.msra.mxu0 %v1995
        %2307 = vmatpush.bf16.msra.mxu0 %v1994
        %2308 = vmatpush.bf16.msra.mxu0 %v1993
        %2309 = vmatpush.bf16.msra.mxu0 %v1992
        %2310 = vmatpush.bf16.msra.mxu0 %v1991
        %2311 = vmatpush.bf16.msra.mxu0 %v1990
        %2312 = vmatpush.bf16.msra.mxu0 %v1989
        %2313 = vmatmul.bf16.gmra.mxu0 %v1377
        %v2314 = vpop.f32.mrf.mxu0
        %v2315 = vadd.f32 %v2302, %v2314
        %v2316 = vpop.f32.mrf.mxu0
        %2317 = vdwg.mxu0
        %2318 = vmatpush.bf16.msra.mxu0 %v2004
        %2319 = vmatpush.bf16.msra.mxu0 %v2003
        %2320 = vmatpush.bf16.msra.mxu0 %v2002
        %2321 = vmatpush.bf16.msra.mxu0 %v2001
        %2322 = vmatpush.bf16.msra.mxu0 %v2000
        %2323 = vmatpush.bf16.msra.mxu0 %v1999
        %2324 = vmatpush.bf16.msra.mxu0 %v1998
        %2325 = vmatpush.bf16.msra.mxu0 %v1997
        %2326 = vmatmul.bf16.gmra.mxu0 %v1378
        %v2327 = vpop.f32.mrf.mxu0
        %v2328 = vadd.f32 %v2315, %v2327
        %v2329 = vpop.f32.mrf.mxu0
        %2330 = vdwg.mxu0
        %2331 = vmatpush.bf16.msra.mxu0 %v2012
        %2332 = vmatpush.bf16.msra.mxu0 %v2011
        %2333 = vmatpush.bf16.msra.mxu0 %v2010
        %2334 = vmatpush.bf16.msra.mxu0 %v2009
        %2335 = vmatpush.bf16.msra.mxu0 %v2008
        %2336 = vmatpush.bf16.msra.mxu0 %v2007
        %2337 = vmatpush.bf16.msra.mxu0 %v2006
        %2338 = vmatpush.bf16.msra.mxu0 %v2005
        %2339 = vmatmul.bf16.gmra.mxu0 %v1379
        %v2340 = vpop.f32.mrf.mxu0
        %v2341 = vadd.f32 %v2328, %v2340
        %v2342 = vpop.f32.mrf.mxu0
        %2343 = vdwg.mxu0
        %2344 = vmatpush.bf16.msra.mxu0 %v2020
        %2345 = vmatpush.bf16.msra.mxu0 %v2019
        %2346 = vmatpush.bf16.msra.mxu0 %v2018
        %2347 = vmatpush.bf16.msra.mxu0 %v2017
        %2348 = vmatpush.bf16.msra.mxu0 %v2016
        %2349 = vmatpush.bf16.msra.mxu0 %v2015
        %2350 = vmatpush.bf16.msra.mxu0 %v2014
        %2351 = vmatpush.bf16.msra.mxu0 %v2013
        %2352 = vmatmul.bf16.gmra.mxu0 %v1380
        %v2353 = vpop.f32.mrf.mxu0
        %v2354 = vadd.f32 %v2341, %v2353
        %v2355 = vpop.f32.mrf.mxu0
        %2356 = vdwg.mxu0
        %v2613 = vunpack.c.l.b16 %v480
        %v2614 = vunpack.c.l.b16 %v481
        %v2615 = vunpack.c.l.b16 %v482
        %v2616 = vunpack.c.l.b16 %v483
        %v2617 = vunpack.c.l.b16 %v484
        %v2618 = vunpack.c.l.b16 %v485
        %v2619 = vunpack.c.l.b16 %v486
        %v2620 = vunpack.c.l.b16 %v487
        %v2621 = vunpack.c.l.b16 %v488
        %v2622 = vunpack.c.l.b16 %v489
        %v2623 = vunpack.c.l.b16 %v490
        %v2624 = vunpack.c.l.b16 %v491
        %v2625 = vunpack.c.l.b16 %v492
        %v2626 = vunpack.c.l.b16 %v493
        %v2627 = vunpack.c.l.b16 %v494
        %v2628 = vunpack.c.l.b16 %v495
        %v2629 = vunpack.c.l.b16 %v496
        %v2630 = vunpack.c.l.b16 %v497
        %v2631 = vunpack.c.l.b16 %v498
        %v2632 = vunpack.c.l.b16 %v499
        %v2633 = vunpack.c.l.b16 %v500
        %v2634 = vunpack.c.l.b16 %v501
        %v2635 = vunpack.c.l.b16 %v502
        %v2636 = vunpack.c.l.b16 %v503
        %v2637 = vunpack.c.l.b16 %v504
        %v2638 = vunpack.c.l.b16 %v505
        %v2639 = vunpack.c.l.b16 %v506
        %v2640 = vunpack.c.l.b16 %v507
        %v2641 = vunpack.c.l.b16 %v508
        %v2642 = vunpack.c.l.b16 %v509
        %v2643 = vunpack.c.l.b16 %v510
        %v2644 = vunpack.c.l.b16 %v511
        %v2645 = vunpack.c.l.b16 %v512
        %v2646 = vunpack.c.l.b16 %v513
        %v2647 = vunpack.c.l.b16 %v514
        %v2648 = vunpack.c.l.b16 %v515
        %v2649 = vunpack.c.l.b16 %v516
        %v2650 = vunpack.c.l.b16 %v517
        %v2651 = vunpack.c.l.b16 %v518
        %v2652 = vunpack.c.l.b16 %v519
        %v2653 = vunpack.c.l.b16 %v520
        %v2654 = vunpack.c.l.b16 %v521
        %v2655 = vunpack.c.l.b16 %v522
        %v2656 = vunpack.c.l.b16 %v523
        %v2657 = vunpack.c.l.b16 %v524
        %v2658 = vunpack.c.l.b16 %v525
        %v2659 = vunpack.c.l.b16 %v526
        %v2660 = vunpack.c.l.b16 %v527
        %v2661 = vunpack.c.l.b16 %v528
        %v2662 = vunpack.c.l.b16 %v529
        %v2663 = vunpack.c.l.b16 %v530
        %v2664 = vunpack.c.l.b16 %v531
        %v2665 = vunpack.c.l.b16 %v532
        %v2666 = vunpack.c.l.b16 %v533
        %v2667 = vunpack.c.l.b16 %v534
        %v2668 = vunpack.c.l.b16 %v535
        %v2669 = vunpack.c.l.b16 %v536
        %v2670 = vunpack.c.l.b16 %v537
        %v2671 = vunpack.c.l.b16 %v538
        %v2672 = vunpack.c.l.b16 %v539
        %v2673 = vunpack.c.l.b16 %v540
        %v2674 = vunpack.c.l.b16 %v541
        %v2675 = vunpack.c.l.b16 %v542
        %v2676 = vunpack.c.l.b16 %v543
        %v2677 = vunpack.c.l.b16 %v544
        %v2678 = vunpack.c.l.b16 %v545
        %v2679 = vunpack.c.l.b16 %v546
        %v2680 = vunpack.c.l.b16 %v547
        %v2681 = vunpack.c.l.b16 %v548
        %v2682 = vunpack.c.l.b16 %v549
        %v2683 = vunpack.c.l.b16 %v550
        %v2684 = vunpack.c.l.b16 %v551
        %v2685 = vunpack.c.l.b16 %v552
        %v2686 = vunpack.c.l.b16 %v553
        %v2687 = vunpack.c.l.b16 %v554
        %v2688 = vunpack.c.l.b16 %v555
        %v2689 = vunpack.c.l.b16 %v556
        %v2690 = vunpack.c.l.b16 %v557
        %v2691 = vunpack.c.l.b16 %v558
        %v2692 = vunpack.c.l.b16 %v559
        %v2693 = vunpack.c.l.b16 %v560
        %v2694 = vunpack.c.l.b16 %v561
        %v2695 = vunpack.c.l.b16 %v562
        %v2696 = vunpack.c.l.b16 %v563
        %v2697 = vunpack.c.l.b16 %v564
        %v2698 = vunpack.c.l.b16 %v565
        %v2699 = vunpack.c.l.b16 %v566
        %v2700 = vunpack.c.l.b16 %v567
        %v2701 = vunpack.c.l.b16 %v568
        %v2702 = vunpack.c.l.b16 %v569
        %v2703 = vunpack.c.l.b16 %v570
        %v2704 = vunpack.c.l.b16 %v571
        %v2705 = vunpack.c.l.b16 %v572
        %v2706 = vunpack.c.l.b16 %v573
        %v2707 = vunpack.c.l.b16 %v574
        %v2708 = vunpack.c.l.b16 %v575
        %v2709 = vunpack.c.l.b16 %v576
        %v2710 = vunpack.c.l.b16 %v577
        %v2711 = vunpack.c.l.b16 %v578
        %v2712 = vunpack.c.l.b16 %v579
        %v2713 = vunpack.c.l.b16 %v580
        %v2714 = vunpack.c.l.b16 %v581
        %v2715 = vunpack.c.l.b16 %v582
        %v2716 = vunpack.c.l.b16 %v583
        %v2717 = vunpack.c.l.b16 %v584
        %v2718 = vunpack.c.l.b16 %v585
        %v2719 = vunpack.c.l.b16 %v586
        %v2720 = vunpack.c.l.b16 %v587
        %v2721 = vunpack.c.l.b16 %v588
        %v2722 = vunpack.c.l.b16 %v589
        %v2723 = vunpack.c.l.b16 %v590
        %v2724 = vunpack.c.l.b16 %v591
        %v2725 = vunpack.c.l.b16 %v592
        %v2726 = vunpack.c.l.b16 %v593
        %v2727 = vunpack.c.l.b16 %v594
        %v2728 = vunpack.c.l.b16 %v595
        %v2729 = vunpack.c.l.b16 %v596
        %v2730 = vunpack.c.l.b16 %v597
        %v2731 = vunpack.c.l.b16 %v598
        %v2732 = vunpack.c.l.b16 %v599
        %v2733 = vunpack.c.l.b16 %v600
        %v2734 = vunpack.c.l.b16 %v601
        %v2735 = vunpack.c.l.b16 %v602
        %v2736 = vunpack.c.l.b16 %v603
        %v2737 = vunpack.c.l.b16 %v604
        %v2738 = vunpack.c.l.b16 %v605
        %v2739 = vunpack.c.l.b16 %v606
        %v2740 = vunpack.c.l.b16 %v607
        %v2741 = vunpack.c.l.b16 %v608
        %v2742 = vunpack.c.l.b16 %v609
        %v2743 = vunpack.c.l.b16 %v610
        %v2744 = vunpack.c.l.b16 %v611
        %v2745 = vunpack.c.l.b16 %v612
        %v2746 = vunpack.c.l.b16 %v613
        %v2747 = vunpack.c.l.b16 %v614
        %v2748 = vunpack.c.l.b16 %v615
        %v2749 = vunpack.c.l.b16 %v616
        %v2750 = vunpack.c.l.b16 %v617
        %v2751 = vunpack.c.l.b16 %v618
        %v2752 = vunpack.c.l.b16 %v619
        %v2753 = vunpack.c.l.b16 %v620
        %v2754 = vunpack.c.l.b16 %v621
        %v2755 = vunpack.c.l.b16 %v622
        %v2756 = vunpack.c.l.b16 %v623
        %v2757 = vunpack.c.l.b16 %v624
        %v2758 = vunpack.c.l.b16 %v625
        %v2759 = vunpack.c.l.b16 %v626
        %v2760 = vunpack.c.l.b16 %v627
        %v2761 = vunpack.c.l.b16 %v628
        %v2762 = vunpack.c.l.b16 %v629
        %v2763 = vunpack.c.l.b16 %v630
        %v2764 = vunpack.c.l.b16 %v631
        %v2765 = vunpack.c.l.b16 %v632
        %v2766 = vunpack.c.l.b16 %v633
        %v2767 = vunpack.c.l.b16 %v634
        %v2768 = vunpack.c.l.b16 %v635
        %v2769 = vunpack.c.l.b16 %v636
        %v2770 = vunpack.c.l.b16 %v637
        %v2771 = vunpack.c.l.b16 %v638
        %v2772 = vunpack.c.l.b16 %v639
        %v2773 = vunpack.c.l.b16 %v640
        %v2774 = vunpack.c.l.b16 %v641
        %v2775 = vunpack.c.l.b16 %v642
        %v2776 = vunpack.c.l.b16 %v643
        %v2777 = vunpack.c.l.b16 %v644
        %v2778 = vunpack.c.l.b16 %v645
        %v2779 = vunpack.c.l.b16 %v646
        %v2780 = vunpack.c.l.b16 %v647
        %v2781 = vunpack.c.l.b16 %v648
        %v2782 = vunpack.c.l.b16 %v649
        %v2783 = vunpack.c.l.b16 %v650
        %v2784 = vunpack.c.l.b16 %v651
        %v2785 = vunpack.c.l.b16 %v652
        %v2786 = vunpack.c.l.b16 %v653
        %v2787 = vunpack.c.l.b16 %v654
        %v2788 = vunpack.c.l.b16 %v655
        %v2789 = vunpack.c.l.b16 %v656
        %v2790 = vunpack.c.l.b16 %v657
        %v2791 = vunpack.c.l.b16 %v658
        %v2792 = vunpack.c.l.b16 %v659
        %v2793 = vunpack.c.l.b16 %v660
        %v2794 = vunpack.c.l.b16 %v661
        %v2795 = vunpack.c.l.b16 %v662
        %v2796 = vunpack.c.l.b16 %v663
        %v2797 = vunpack.c.l.b16 %v664
        %v2798 = vunpack.c.l.b16 %v665
        %v2799 = vunpack.c.l.b16 %v666
        %v2800 = vunpack.c.l.b16 %v667
        %v2801 = vunpack.c.l.b16 %v668
        %v2802 = vunpack.c.l.b16 %v669
        %v2803 = vunpack.c.l.b16 %v670
        %v2804 = vunpack.c.l.b16 %v671
        %v2805 = vunpack.c.l.b16 %v672
        %v2806 = vunpack.c.l.b16 %v673
        %v2807 = vunpack.c.l.b16 %v674
        %v2808 = vunpack.c.l.b16 %v675
        %v2809 = vunpack.c.l.b16 %v676
        %v2810 = vunpack.c.l.b16 %v677
        %v2811 = vunpack.c.l.b16 %v678
        %v2812 = vunpack.c.l.b16 %v679
        %v2813 = vunpack.c.l.b16 %v680
        %v2814 = vunpack.c.l.b16 %v681
        %v2815 = vunpack.c.l.b16 %v682
        %v2816 = vunpack.c.l.b16 %v683
        %v2817 = vunpack.c.l.b16 %v684
        %v2818 = vunpack.c.l.b16 %v685
        %v2819 = vunpack.c.l.b16 %v686
        %v2820 = vunpack.c.l.b16 %v687
        %v2821 = vunpack.c.l.b16 %v688
        %v2822 = vunpack.c.l.b16 %v689
        %v2823 = vunpack.c.l.b16 %v690
        %v2824 = vunpack.c.l.b16 %v691
        %v2825 = vunpack.c.l.b16 %v692
        %v2826 = vunpack.c.l.b16 %v693
        %v2827 = vunpack.c.l.b16 %v694
        %v2828 = vunpack.c.l.b16 %v695
        %v2829 = vunpack.c.l.b16 %v696
        %v2830 = vunpack.c.l.b16 %v697
        %v2831 = vunpack.c.l.b16 %v698
        %v2832 = vunpack.c.l.b16 %v699
        %v2833 = vunpack.c.l.b16 %v700
        %v2834 = vunpack.c.l.b16 %v701
        %v2835 = vunpack.c.l.b16 %v702
        %v2836 = vunpack.c.l.b16 %v703
        %v2837 = vunpack.c.l.b16 %v704
        %v2838 = vunpack.c.l.b16 %v705
        %v2839 = vunpack.c.l.b16 %v706
        %v2840 = vunpack.c.l.b16 %v707
        %v2841 = vunpack.c.l.b16 %v708
        %v2842 = vunpack.c.l.b16 %v709
        %v2843 = vunpack.c.l.b16 %v710
        %v2844 = vunpack.c.l.b16 %v711
        %v2845 = vunpack.c.l.b16 %v712
        %v2846 = vunpack.c.l.b16 %v713
        %v2847 = vunpack.c.l.b16 %v714
        %v2848 = vunpack.c.l.b16 %v715
        %v2849 = vunpack.c.l.b16 %v716
        %v2850 = vunpack.c.l.b16 %v717
        %v2851 = vunpack.c.l.b16 %v718
        %v2852 = vunpack.c.l.b16 %v719
        %v2853 = vunpack.c.l.b16 %v720
        %v2854 = vunpack.c.l.b16 %v721
        %v2855 = vunpack.c.l.b16 %v722
        %v2856 = vunpack.c.l.b16 %v723
        %v2857 = vunpack.c.l.b16 %v724
        %v2858 = vunpack.c.l.b16 %v725
        %v2859 = vunpack.c.l.b16 %v726
        %v2860 = vunpack.c.l.b16 %v727
        %v2861 = vunpack.c.l.b16 %v728
        %v2862 = vunpack.c.l.b16 %v729
        %v2863 = vunpack.c.l.b16 %v730
        %v2864 = vunpack.c.l.b16 %v731
        %v2865 = vunpack.c.l.b16 %v732
        %v2866 = vunpack.c.l.b16 %v733
        %v2867 = vunpack.c.l.b16 %v734
        %v2868 = vunpack.c.l.b16 %v735
        %v2869 = vpack.c.b16 %v2614, %v2613
        %v2870 = vpack.c.b16 %v2616, %v2615
        %v2871 = vpack.c.b16 %v2618, %v2617
        %v2872 = vpack.c.b16 %v2620, %v2619
        %v2873 = vpack.c.b16 %v2622, %v2621
        %v2874 = vpack.c.b16 %v2624, %v2623
        %v2875 = vpack.c.b16 %v2626, %v2625
        %v2876 = vpack.c.b16 %v2628, %v2627
        %v2877 = vpack.c.b16 %v2630, %v2629
        %v2878 = vpack.c.b16 %v2632, %v2631
        %v2879 = vpack.c.b16 %v2634, %v2633
        %v2880 = vpack.c.b16 %v2636, %v2635
        %v2881 = vpack.c.b16 %v2638, %v2637
        %v2882 = vpack.c.b16 %v2640, %v2639
        %v2883 = vpack.c.b16 %v2642, %v2641
        %v2884 = vpack.c.b16 %v2644, %v2643
        %v2885 = vpack.c.b16 %v2646, %v2645
        %v2886 = vpack.c.b16 %v2648, %v2647
        %v2887 = vpack.c.b16 %v2650, %v2649
        %v2888 = vpack.c.b16 %v2652, %v2651
        %v2889 = vpack.c.b16 %v2654, %v2653
        %v2890 = vpack.c.b16 %v2656, %v2655
        %v2891 = vpack.c.b16 %v2658, %v2657
        %v2892 = vpack.c.b16 %v2660, %v2659
        %v2893 = vpack.c.b16 %v2662, %v2661
        %v2894 = vpack.c.b16 %v2664, %v2663
        %v2895 = vpack.c.b16 %v2666, %v2665
        %v2896 = vpack.c.b16 %v2668, %v2667
        %v2897 = vpack.c.b16 %v2670, %v2669
        %v2898 = vpack.c.b16 %v2672, %v2671
        %v2899 = vpack.c.b16 %v2674, %v2673
        %v2900 = vpack.c.b16 %v2676, %v2675
        %v2901 = vpack.c.b16 %v2678, %v2677
        %v2902 = vpack.c.b16 %v2680, %v2679
        %v2903 = vpack.c.b16 %v2682, %v2681
        %v2904 = vpack.c.b16 %v2684, %v2683
        %v2905 = vpack.c.b16 %v2686, %v2685
        %v2906 = vpack.c.b16 %v2688, %v2687
        %v2907 = vpack.c.b16 %v2690, %v2689
        %v2908 = vpack.c.b16 %v2692, %v2691
        %v2909 = vpack.c.b16 %v2694, %v2693
        %v2910 = vpack.c.b16 %v2696, %v2695
        %v2911 = vpack.c.b16 %v2698, %v2697
        %v2912 = vpack.c.b16 %v2700, %v2699
        %v2913 = vpack.c.b16 %v2702, %v2701
        %v2914 = vpack.c.b16 %v2704, %v2703
        %v2915 = vpack.c.b16 %v2706, %v2705
        %v2916 = vpack.c.b16 %v2708, %v2707
        %v2917 = vpack.c.b16 %v2710, %v2709
        %v2918 = vpack.c.b16 %v2712, %v2711
        %v2919 = vpack.c.b16 %v2714, %v2713
        %v2920 = vpack.c.b16 %v2716, %v2715
        %v2921 = vpack.c.b16 %v2718, %v2717
        %v2922 = vpack.c.b16 %v2720, %v2719
        %v2923 = vpack.c.b16 %v2722, %v2721
        %v2924 = vpack.c.b16 %v2724, %v2723
        %v2925 = vpack.c.b16 %v2726, %v2725
        %v2926 = vpack.c.b16 %v2728, %v2727
        %v2927 = vpack.c.b16 %v2730, %v2729
        %v2928 = vpack.c.b16 %v2732, %v2731
        %v2929 = vpack.c.b16 %v2734, %v2733
        %v2930 = vpack.c.b16 %v2736, %v2735
        %v2931 = vpack.c.b16 %v2738, %v2737
        %v2932 = vpack.c.b16 %v2740, %v2739
        %v2933 = vpack.c.b16 %v2742, %v2741
        %v2934 = vpack.c.b16 %v2744, %v2743
        %v2935 = vpack.c.b16 %v2746, %v2745
        %v2936 = vpack.c.b16 %v2748, %v2747
        %v2937 = vpack.c.b16 %v2750, %v2749
        %v2938 = vpack.c.b16 %v2752, %v2751
        %v2939 = vpack.c.b16 %v2754, %v2753
        %v2940 = vpack.c.b16 %v2756, %v2755
        %v2941 = vpack.c.b16 %v2758, %v2757
        %v2942 = vpack.c.b16 %v2760, %v2759
        %v2943 = vpack.c.b16 %v2762, %v2761
        %v2944 = vpack.c.b16 %v2764, %v2763
        %v2945 = vpack.c.b16 %v2766, %v2765
        %v2946 = vpack.c.b16 %v2768, %v2767
        %v2947 = vpack.c.b16 %v2770, %v2769
        %v2948 = vpack.c.b16 %v2772, %v2771
        %v2949 = vpack.c.b16 %v2774, %v2773
        %v2950 = vpack.c.b16 %v2776, %v2775
        %v2951 = vpack.c.b16 %v2778, %v2777
        %v2952 = vpack.c.b16 %v2780, %v2779
        %v2953 = vpack.c.b16 %v2782, %v2781
        %v2954 = vpack.c.b16 %v2784, %v2783
        %v2955 = vpack.c.b16 %v2786, %v2785
        %v2956 = vpack.c.b16 %v2788, %v2787
        %v2957 = vpack.c.b16 %v2790, %v2789
        %v2958 = vpack.c.b16 %v2792, %v2791
        %v2959 = vpack.c.b16 %v2794, %v2793
        %v2960 = vpack.c.b16 %v2796, %v2795
        %v2961 = vpack.c.b16 %v2798, %v2797
        %v2962 = vpack.c.b16 %v2800, %v2799
        %v2963 = vpack.c.b16 %v2802, %v2801
        %v2964 = vpack.c.b16 %v2804, %v2803
        %v2965 = vpack.c.b16 %v2806, %v2805
        %v2966 = vpack.c.b16 %v2808, %v2807
        %v2967 = vpack.c.b16 %v2810, %v2809
        %v2968 = vpack.c.b16 %v2812, %v2811
        %v2969 = vpack.c.b16 %v2814, %v2813
        %v2970 = vpack.c.b16 %v2816, %v2815
        %v2971 = vpack.c.b16 %v2818, %v2817
        %v2972 = vpack.c.b16 %v2820, %v2819
        %v2973 = vpack.c.b16 %v2822, %v2821
        %v2974 = vpack.c.b16 %v2824, %v2823
        %v2975 = vpack.c.b16 %v2826, %v2825
        %v2976 = vpack.c.b16 %v2828, %v2827
        %v2977 = vpack.c.b16 %v2830, %v2829
        %v2978 = vpack.c.b16 %v2832, %v2831
        %v2979 = vpack.c.b16 %v2834, %v2833
        %v2980 = vpack.c.b16 %v2836, %v2835
        %v2981 = vpack.c.b16 %v2838, %v2837
        %v2982 = vpack.c.b16 %v2840, %v2839
        %v2983 = vpack.c.b16 %v2842, %v2841
        %v2984 = vpack.c.b16 %v2844, %v2843
        %v2985 = vpack.c.b16 %v2846, %v2845
        %v2986 = vpack.c.b16 %v2848, %v2847
        %v2987 = vpack.c.b16 %v2850, %v2849
        %v2988 = vpack.c.b16 %v2852, %v2851
        %v2989 = vpack.c.b16 %v2854, %v2853
        %v2990 = vpack.c.b16 %v2856, %v2855
        %v2991 = vpack.c.b16 %v2858, %v2857
        %v2992 = vpack.c.b16 %v2860, %v2859
        %v2993 = vpack.c.b16 %v2862, %v2861
        %v2994 = vpack.c.b16 %v2864, %v2863
        %v2995 = vpack.c.b16 %v2866, %v2865
        %v2996 = vpack.c.b16 %v2868, %v2867
        %3125 = vmatpush.bf16.msra.mxu0 %v2876
        %3126 = vmatpush.bf16.msra.mxu0 %v2875
        %3127 = vmatpush.bf16.msra.mxu0 %v2874
        %3128 = vmatpush.bf16.msra.mxu0 %v2873
        %3129 = vmatpush.bf16.msra.mxu0 %v2872
        %3130 = vmatpush.bf16.msra.mxu0 %v2871
        %3131 = vmatpush.bf16.msra.mxu0 %v2870
        %3132 = vmatpush.bf16.msra.mxu0 %v2869
        %3133 = vmatmul.bf16.gmra.mxu0 %v1365
        %v3134 = vpop.f32.mrf.mxu0
        %v3135 = vadd.f32 %v2354, %v3134
        %v3136 = vpop.f32.mrf.mxu0
        %3137 = vdwg.mxu0
        %3138 = vmatpush.bf16.msra.mxu0 %v2884
        %3139 = vmatpush.bf16.msra.mxu0 %v2883
        %3140 = vmatpush.bf16.msra.mxu0 %v2882
        %3141 = vmatpush.bf16.msra.mxu0 %v2881
        %3142 = vmatpush.bf16.msra.mxu0 %v2880
        %3143 = vmatpush.bf16.msra.mxu0 %v2879
        %3144 = vmatpush.bf16.msra.mxu0 %v2878
        %3145 = vmatpush.bf16.msra.mxu0 %v2877
        %3146 = vmatmul.bf16.gmra.mxu0 %v1366
        %v3147 = vpop.f32.mrf.mxu0
        %v3148 = vadd.f32 %v3135, %v3147
        %v3149 = vpop.f32.mrf.mxu0
        %3150 = vdwg.mxu0
        %3151 = vmatpush.bf16.msra.mxu0 %v2892
        %3152 = vmatpush.bf16.msra.mxu0 %v2891
        %3153 = vmatpush.bf16.msra.mxu0 %v2890
        %3154 = vmatpush.bf16.msra.mxu0 %v2889
        %3155 = vmatpush.bf16.msra.mxu0 %v2888
        %3156 = vmatpush.bf16.msra.mxu0 %v2887
        %3157 = vmatpush.bf16.msra.mxu0 %v2886
        %3158 = vmatpush.bf16.msra.mxu0 %v2885
        %3159 = vmatmul.bf16.gmra.mxu0 %v1367
        %v3160 = vpop.f32.mrf.mxu0
        %v3161 = vadd.f32 %v3148, %v3160
        %v3162 = vpop.f32.mrf.mxu0
        %3163 = vdwg.mxu0
        %3164 = vmatpush.bf16.msra.mxu0 %v2900
        %3165 = vmatpush.bf16.msra.mxu0 %v2899
        %3166 = vmatpush.bf16.msra.mxu0 %v2898
        %3167 = vmatpush.bf16.msra.mxu0 %v2897
        %3168 = vmatpush.bf16.msra.mxu0 %v2896
        %3169 = vmatpush.bf16.msra.mxu0 %v2895
        %3170 = vmatpush.bf16.msra.mxu0 %v2894
        %3171 = vmatpush.bf16.msra.mxu0 %v2893
        %3172 = vmatmul.bf16.gmra.mxu0 %v1368
        %v3173 = vpop.f32.mrf.mxu0
        %v3174 = vadd.f32 %v3161, %v3173
        %v3175 = vpop.f32.mrf.mxu0
        %3176 = vdwg.mxu0
        %3177 = vmatpush.bf16.msra.mxu0 %v2908
        %3178 = vmatpush.bf16.msra.mxu0 %v2907
        %3179 = vmatpush.bf16.msra.mxu0 %v2906
        %3180 = vmatpush.bf16.msra.mxu0 %v2905
        %3181 = vmatpush.bf16.msra.mxu0 %v2904
        %3182 = vmatpush.bf16.msra.mxu0 %v2903
        %3183 = vmatpush.bf16.msra.mxu0 %v2902
        %3184 = vmatpush.bf16.msra.mxu0 %v2901
        %3185 = vmatmul.bf16.gmra.mxu0 %v1369
        %v3186 = vpop.f32.mrf.mxu0
        %v3187 = vadd.f32 %v3174, %v3186
        %v3188 = vpop.f32.mrf.mxu0
        %3189 = vdwg.mxu0
        %3190 = vmatpush.bf16.msra.mxu0 %v2916
        %3191 = vmatpush.bf16.msra.mxu0 %v2915
        %3192 = vmatpush.bf16.msra.mxu0 %v2914
        %3193 = vmatpush.bf16.msra.mxu0 %v2913
        %3194 = vmatpush.bf16.msra.mxu0 %v2912
        %3195 = vmatpush.bf16.msra.mxu0 %v2911
        %3196 = vmatpush.bf16.msra.mxu0 %v2910
        %3197 = vmatpush.bf16.msra.mxu0 %v2909
        %3198 = vmatmul.bf16.gmra.mxu0 %v1370
        %v3199 = vpop.f32.mrf.mxu0
        %v3200 = vadd.f32 %v3187, %v3199
        %v3201 = vpop.f32.mrf.mxu0
        %3202 = vdwg.mxu0
        %3203 = vmatpush.bf16.msra.mxu0 %v2924
        %3204 = vmatpush.bf16.msra.mxu0 %v2923
        %3205 = vmatpush.bf16.msra.mxu0 %v2922
        %3206 = vmatpush.bf16.msra.mxu0 %v2921
        %3207 = vmatpush.bf16.msra.mxu0 %v2920
        %3208 = vmatpush.bf16.msra.mxu0 %v2919
        %3209 = vmatpush.bf16.msra.mxu0 %v2918
        %3210 = vmatpush.bf16.msra.mxu0 %v2917
        %3211 = vmatmul.bf16.gmra.mxu0 %v1371
        %v3212 = vpop.f32.mrf.mxu0
        %v3213 = vadd.f32 %v3200, %v3212
        %v3214 = vpop.f32.mrf.mxu0
        %3215 = vdwg.mxu0
        %3216 = vmatpush.bf16.msra.mxu0 %v2932
        %3217 = vmatpush.bf16.msra.mxu0 %v2931
        %3218 = vmatpush.bf16.msra.mxu0 %v2930
        %3219 = vmatpush.bf16.msra.mxu0 %v2929
        %3220 = vmatpush.bf16.msra.mxu0 %v2928
        %3221 = vmatpush.bf16.msra.mxu0 %v2927
        %3222 = vmatpush.bf16.msra.mxu0 %v2926
        %3223 = vmatpush.bf16.msra.mxu0 %v2925
        %3224 = vmatmul.bf16.gmra.mxu0 %v1372
        %v3225 = vpop.f32.mrf.mxu0
        %v3226 = vadd.f32 %v3213, %v3225
        %v3227 = vpop.f32.mrf.mxu0
        %3228 = vdwg.mxu0
        %3229 = vmatpush.bf16.msra.mxu0 %v2940
        %3230 = vmatpush.bf16.msra.mxu0 %v2939
        %3231 = vmatpush.bf16.msra.mxu0 %v2938
        %3232 = vmatpush.bf16.msra.mxu0 %v2937
        %3233 = vmatpush.bf16.msra.mxu0 %v2936
        %3234 = vmatpush.bf16.msra.mxu0 %v2935
        %3235 = vmatpush.bf16.msra.mxu0 %v2934
        %3236 = vmatpush.bf16.msra.mxu0 %v2933
        %3237 = vmatmul.bf16.gmra.mxu0 %v1373
        %v3238 = vpop.f32.mrf.mxu0
        %v3239 = vadd.f32 %v3226, %v3238
        %v3240 = vpop.f32.mrf.mxu0
        %3241 = vdwg.mxu0
        %3242 = vmatpush.bf16.msra.mxu0 %v2948
        %3243 = vmatpush.bf16.msra.mxu0 %v2947
        %3244 = vmatpush.bf16.msra.mxu0 %v2946
        %3245 = vmatpush.bf16.msra.mxu0 %v2945
        %3246 = vmatpush.bf16.msra.mxu0 %v2944
        %3247 = vmatpush.bf16.msra.mxu0 %v2943
        %3248 = vmatpush.bf16.msra.mxu0 %v2942
        %3249 = vmatpush.bf16.msra.mxu0 %v2941
        %3250 = vmatmul.bf16.gmra.mxu0 %v1374
        %v3251 = vpop.f32.mrf.mxu0
        %v3252 = vadd.f32 %v3239, %v3251
        %v3253 = vpop.f32.mrf.mxu0
        %3254 = vdwg.mxu0
        %3255 = vmatpush.bf16.msra.mxu0 %v2956
        %3256 = vmatpush.bf16.msra.mxu0 %v2955
        %3257 = vmatpush.bf16.msra.mxu0 %v2954
        %3258 = vmatpush.bf16.msra.mxu0 %v2953
        %3259 = vmatpush.bf16.msra.mxu0 %v2952
        %3260 = vmatpush.bf16.msra.mxu0 %v2951
        %3261 = vmatpush.bf16.msra.mxu0 %v2950
        %3262 = vmatpush.bf16.msra.mxu0 %v2949
        %3263 = vmatmul.bf16.gmra.mxu0 %v1375
        %v3264 = vpop.f32.mrf.mxu0
        %v3265 = vadd.f32 %v3252, %v3264
        %v3266 = vpop.f32.mrf.mxu0
        %3267 = vdwg.mxu0
        %3268 = vmatpush.bf16.msra.mxu0 %v2964
        %3269 = vmatpush.bf16.msra.mxu0 %v2963
        %3270 = vmatpush.bf16.msra.mxu0 %v2962
        %3271 = vmatpush.bf16.msra.mxu0 %v2961
        %3272 = vmatpush.bf16.msra.mxu0 %v2960
        %3273 = vmatpush.bf16.msra.mxu0 %v2959
        %3274 = vmatpush.bf16.msra.mxu0 %v2958
        %3275 = vmatpush.bf16.msra.mxu0 %v2957
        %3276 = vmatmul.bf16.gmra.mxu0 %v1376
        %v3277 = vpop.f32.mrf.mxu0
        %v3278 = vadd.f32 %v3265, %v3277
        %v3279 = vpop.f32.mrf.mxu0
        %3280 = vdwg.mxu0
        %3281 = vmatpush.bf16.msra.mxu0 %v2972
        %3282 = vmatpush.bf16.msra.mxu0 %v2971
        %3283 = vmatpush.bf16.msra.mxu0 %v2970
        %3284 = vmatpush.bf16.msra.mxu0 %v2969
        %3285 = vmatpush.bf16.msra.mxu0 %v2968
        %3286 = vmatpush.bf16.msra.mxu0 %v2967
        %3287 = vmatpush.bf16.msra.mxu0 %v2966
        %3288 = vmatpush.bf16.msra.mxu0 %v2965
        %3289 = vmatmul.bf16.gmra.mxu0 %v1377
        %v3290 = vpop.f32.mrf.mxu0
        %v3291 = vadd.f32 %v3278, %v3290
        %v3292 = vpop.f32.mrf.mxu0
        %3293 = vdwg.mxu0
        %3294 = vmatpush.bf16.msra.mxu0 %v2980
        %3295 = vmatpush.bf16.msra.mxu0 %v2979
        %3296 = vmatpush.bf16.msra.mxu0 %v2978
        %3297 = vmatpush.bf16.msra.mxu0 %v2977
        %3298 = vmatpush.bf16.msra.mxu0 %v2976
        %3299 = vmatpush.bf16.msra.mxu0 %v2975
        %3300 = vmatpush.bf16.msra.mxu0 %v2974
        %3301 = vmatpush.bf16.msra.mxu0 %v2973
        %3302 = vmatmul.bf16.gmra.mxu0 %v1378
        %v3303 = vpop.f32.mrf.mxu0
        %v3304 = vadd.f32 %v3291, %v3303
        %v3305 = vpop.f32.mrf.mxu0
        %3306 = vdwg.mxu0
        %3307 = vmatpush.bf16.msra.mxu0 %v2988
        %3308 = vmatpush.bf16.msra.mxu0 %v2987
        %3309 = vmatpush.bf16.msra.mxu0 %v2986
        %3310 = vmatpush.bf16.msra.mxu0 %v2985
        %3311 = vmatpush.bf16.msra.mxu0 %v2984
        %3312 = vmatpush.bf16.msra.mxu0 %v2983
        %3313 = vmatpush.bf16.msra.mxu0 %v2982
        %3314 = vmatpush.bf16.msra.mxu0 %v2981
        %3315 = vmatmul.bf16.gmra.mxu0 %v1379
        %v3316 = vpop.f32.mrf.mxu0
        %v3317 = vadd.f32 %v3304, %v3316
        %v3318 = vpop.f32.mrf.mxu0
        %3319 = vdwg.mxu0
        %3320 = vmatpush.bf16.msra.mxu0 %v2996
        %3321 = vmatpush.bf16.msra.mxu0 %v2995
        %3322 = vmatpush.bf16.msra.mxu0 %v2994
        %3323 = vmatpush.bf16.msra.mxu0 %v2993
        %3324 = vmatpush.bf16.msra.mxu0 %v2992
        %3325 = vmatpush.bf16.msra.mxu0 %v2991
        %3326 = vmatpush.bf16.msra.mxu0 %v2990
        %3327 = vmatpush.bf16.msra.mxu0 %v2989
        %3328 = vmatmul.bf16.gmra.mxu0 %v1380
        %v3329 = vpop.f32.mrf.mxu0
        %v3330 = vadd.f32 %v3317, %v3329
        %v3331 = vpop.f32.mrf.mxu0
        %3332 = vdwg.mxu0
        %v3333 = vsel %vm994, %v3330, 3e+38
        %3334 = vmin.xlane.f32.xlu0 %v3333
        %v3335 = vpop.xlane.xlu0 %3334
        %v3336 = vsub.f32 %v3330, %v3335
        %v3337 = vsel %vm994, %v3336, -3e+38
        %3338 = vmax.xlane.f32.xlu0 %v3337
        %v3339 = vpop.xlane.xlu0 %3338
        %v3340 = vmax.f32 %v3339, 1e-30
        %v3341 = vrcp.pop %v3340
        %v3342 = vmul.f32 %v3340, %v3341
        %v3343 = vsub.f32 1.0, %v3342
        %v3344 = vmul.f32 %v3341, %v3343
        %v3345 = vadd.f32 %v3341, %v3344
        %vm3346 = vweird.f32 %v3340
        %vm3347 = vweird.f32 %v3341
        %vm3348 = vmor %vm3346, %vm3347
        %v3349 = vsel %vm3348, %v3341, %v3345
        %v3350 = vand.u32 2147483647, %v3340
        %vm3351 = vcmp.eq.f32.partialorder %v3350, 8.507059e+37
        %v3352 = vand.u32 %v3340, 2147483648
        %v3353 = vor.u32 1.1754944e-38, %v3352
        %v3354 = vsel %vm3351, %v3353, %v3349
        %v3355 = vmul.f32 %v3336, %v3354
        %v3356 = vsel %vm994, %v3355, 0.0
        %v3357 = vld [vmem:[%s395] sm:$0xff]
        %v3358 = vld [vmem:[%s395 + $0x8] sm:$0xff]
        %v3359 = vmul.f32 %v3357, 0.299
        %v3360 = vmul.f32 %v3358, 0.299
        %s3361 = scalar_lea.vmem %s395, 16 [#allocation8]
        %v3362 = vld [vmem:[%s3361] sm:$0xff]
        %v3363 = vld [vmem:[%s3361 + $0x8] sm:$0xff]
        %v3364 = vmul.f32 %v3362, 0.587
        %v3365 = vmul.f32 %v3363, 0.587
        %v3366 = vadd.f32 %v3359, %v3364
        %v3367 = vadd.f32 %v3360, %v3365
        %s3368 = scalar_lea.vmem %s395, 32 [#allocation8]
        %v3369 = vld [vmem:[%s3368] sm:$0xff]
        %v3370 = vld [vmem:[%s3368 + $0x8] sm:$0xff]
        %v3371 = vmul.f32 %v3369, 0.114
        %v3372 = vmul.f32 %v3370, 0.114
        %v3373 = vadd.f32 %v3366, %v3371
        %v3374 = vadd.f32 %v3367, %v3372
        %3375 = vst.msk [vmem:[#allocation2] sm:$0xff] %vm1029, %v3373
        %3376 = vst.msk [vmem:[#allocation2 + $0x8] sm:$0xff] %vm1029, %v3374
        %v3377 = vld [vmem:[#allocation2] sm:$0xff]
        %v3378 = vld [vmem:[#allocation2 + $0x8] sm:$0xff]
        %v3379 = vpack.c.bf16 %v3377, %v3377
        %v3380 = vpack.c.bf16 %v3378, %v3378
        %v3381 = vunpack.c.l.bf16 %v3379
        %v3382 = vunpack.c.l.bf16 %v3380
        %v3383 = vsub.f32 %v3377, %v3381
        %v3384 = vsub.f32 %v3378, %v3382
        %v3385 = vpack.c.bf16 %v3384, %v3383
        %v3387 = vsel %vm1029, %v3385, 0
        %3389 = vmatpush.bf16.msra.mxu0 0
        %3390 = vmatpush.bf16.msra.mxu0 0
        %3391 = vmatpush.bf16.msra.mxu0 0
        %3392 = vmatpush.bf16.msra.mxu0 0
        %3393 = vmatpush.bf16.msra.mxu0 0
        %3394 = vmatpush.bf16.msra.mxu0 0
        %3395 = vmatpush.bf16.msra.mxu0 0
        %3396 = vmatpush.bf16.msra.mxu0 %v1047
        %3397 = vmatmul.bf16.gmra.mxu0 %v3387
        %v3398 = vpop.f32.mrf.mxu0
        %v3399 = vadd.f32 0.0, %v3398
        %v3400 = vpop.f32.mrf.mxu0
        %v3401 = vadd.f32 0.0, %v3400
        %3402 = vdwg.mxu0
        %3403 = vmatpush.bf16.msra.mxu0 0
        %3404 = vmatpush.bf16.msra.mxu0 0
        %3405 = vmatpush.bf16.msra.mxu0 0
        %3406 = vmatpush.bf16.msra.mxu0 0
        %3407 = vmatpush.bf16.msra.mxu0 0
        %3408 = vmatpush.bf16.msra.mxu0 0
        %3409 = vmatpush.bf16.msra.mxu0 0
        %3410 = vmatpush.bf16.msra.mxu0 %v1048
        %3411 = vmatmul.bf16.gmra.mxu0 %v3387
        %v3412 = vpop.f32.mrf.mxu0
        %v3413 = vadd.f32 0.0, %v3412
        %v3414 = vpop.f32.mrf.mxu0
        %v3415 = vadd.f32 0.0, %v3414
        %3416 = vdwg.mxu0
        %v3419 = vunpack.c.l.b16 %v3379
        %v3420 = vunpack.c.l.b16 %v3380
        %v3421 = vpack.c.b16 %v3420, %v3419
        %v3423 = vsel %vm1029, %v3421, 0
        %3425 = vmatpush.bf16.msra.mxu0 0
        %3426 = vmatpush.bf16.msra.mxu0 0
        %3427 = vmatpush.bf16.msra.mxu0 0
        %3428 = vmatpush.bf16.msra.mxu0 0
        %3429 = vmatpush.bf16.msra.mxu0 0
        %3430 = vmatpush.bf16.msra.mxu0 0
        %3431 = vmatpush.bf16.msra.mxu0 0
        %3432 = vmatpush.bf16.msra.mxu0 %v1047
        %3433 = vmatmul.bf16.gmra.mxu0 %v3423
        %v3434 = vpop.f32.mrf.mxu0
        %v3435 = vadd.f32 %v3399, %v3434
        %v3436 = vpop.f32.mrf.mxu0
        %v3437 = vadd.f32 %v3401, %v3436
        %3438 = vdwg.mxu0
        %3439 = vmatpush.bf16.msra.mxu0 0
        %3440 = vmatpush.bf16.msra.mxu0 0
        %3441 = vmatpush.bf16.msra.mxu0 0
        %3442 = vmatpush.bf16.msra.mxu0 0
        %3443 = vmatpush.bf16.msra.mxu0 0
        %3444 = vmatpush.bf16.msra.mxu0 0
        %3445 = vmatpush.bf16.msra.mxu0 0
        %3446 = vmatpush.bf16.msra.mxu0 %v1048
        %3447 = vmatmul.bf16.gmra.mxu0 %v3423
        %v3448 = vpop.f32.mrf.mxu0
        %v3449 = vadd.f32 %v3413, %v3448
        %v3450 = vpop.f32.mrf.mxu0
        %v3451 = vadd.f32 %v3415, %v3450
        %3452 = vdwg.mxu0
        %3453 = vmatpush.bf16.msra.mxu0 0
        %3454 = vmatpush.bf16.msra.mxu0 0
        %3455 = vmatpush.bf16.msra.mxu0 0
        %3456 = vmatpush.bf16.msra.mxu0 0
        %3457 = vmatpush.bf16.msra.mxu0 0
        %3458 = vmatpush.bf16.msra.mxu0 0
        %3459 = vmatpush.bf16.msra.mxu0 0
        %3460 = vmatpush.bf16.msra.mxu0 %v1124
        %3461 = vmatmul.bf16.gmra.mxu0 %v3423
        %v3462 = vpop.f32.mrf.mxu0
        %v3463 = vadd.f32 0.0, %v3462
        %v3464 = vpop.f32.mrf.mxu0
        %v3465 = vadd.f32 0.0, %v3464
        %3466 = vdwg.mxu0
        %3467 = vmatpush.bf16.msra.mxu0 0
        %3468 = vmatpush.bf16.msra.mxu0 0
        %3469 = vmatpush.bf16.msra.mxu0 0
        %3470 = vmatpush.bf16.msra.mxu0 0
        %3471 = vmatpush.bf16.msra.mxu0 0
        %3472 = vmatpush.bf16.msra.mxu0 0
        %3473 = vmatpush.bf16.msra.mxu0 0
        %3474 = vmatpush.bf16.msra.mxu0 %v1125
        %3475 = vmatmul.bf16.gmra.mxu0 %v3423
        %v3476 = vpop.f32.mrf.mxu0
        %v3477 = vadd.f32 0.0, %v3476
        %v3478 = vpop.f32.mrf.mxu0
        %v3479 = vadd.f32 0.0, %v3478
        %3480 = vdwg.mxu0
        %v3481 = vadd.f32 %v3435, %v3463
        %v3482 = vadd.f32 %v3449, %v3477
        %v3483 = vadd.f32 %v3437, %v3465
        %v3484 = vadd.f32 %v3451, %v3479
        %3485 = vst [vmem:[#allocation3] sm:$0xff] %v3481
        %3486 = vst [vmem:[#allocation3 + $0x8] sm:$0xff] %v3483
        %3487 = vst [vmem:[#allocation3 + $0x10] sm:$0xff] %v3482
        %3488 = vst [vmem:[#allocation3 + $0x18] sm:$0xff] %v3484
        %v3489 = vld [vmem:[#allocation3] sm:$0xff]
        %v3490 = vld [vmem:[#allocation3 + $0x8] sm:$0xff]
        %v3491 = vld [vmem:[#allocation3 + $0x10] sm:$0xff]
        %v3492 = vld [vmem:[#allocation3 + $0x18] sm:$0xff]
        %v3493 = vpack.c.bf16 %v3489, %v3489
        %v3494 = vpack.c.bf16 %v3490, %v3490
        %v3495 = vpack.c.bf16 %v3491, %v3491
        %v3496 = vpack.c.bf16 %v3492, %v3492
        %v3497 = vunpack.c.l.bf16 %v3493
        %v3498 = vunpack.c.l.bf16 %v3494
        %v3499 = vunpack.c.l.bf16 %v3495
        %v3500 = vunpack.c.l.bf16 %v3496
        %v3501 = vsub.f32 %v3489, %v3497
        %v3502 = vsub.f32 %v3490, %v3498
        %v3503 = vsub.f32 %v3491, %v3499
        %v3504 = vsub.f32 %v3492, %v3500
        %v3505 = vpack.c.bf16 %v3502, %v3501
        %v3506 = vpack.c.bf16 %v3504, %v3503
        %v3511 = vunpack.c.l.b16 %v3493
        %v3512 = vunpack.c.l.b16 %v3494
        %v3513 = vunpack.c.l.b16 %v3495
        %v3514 = vunpack.c.l.b16 %v3496
        %v3515 = vpack.c.b16 %v3512, %v3511
        %v3516 = vpack.c.b16 %v3514, %v3513
        %3519 = vmatpush.bf16.msra.mxu0 0
        %3520 = vmatpush.bf16.msra.mxu0 0
        %3521 = vmatpush.bf16.msra.mxu0 0
        %3522 = vmatpush.bf16.msra.mxu0 0
        %3523 = vmatpush.bf16.msra.mxu0 0
        %3524 = vmatpush.bf16.msra.mxu0 0
        %3525 = vmatpush.bf16.msra.mxu0 %v3516
        %3526 = vmatpush.bf16.msra.mxu0 %v3515
        %3527 = vmatmul.bf16.gmra.mxu0 %v1206
        %v3528 = vpop.f32.mrf.mxu0
        %v3529 = vadd.f32 0.0, %v3528
        %v3530 = vpop.f32.mrf.mxu0
        %v3531 = vadd.f32 0.0, %v3530
        %3532 = vmatmul.bf16.gmra.mxu0 %v1209
        %v3533 = vpop.f32.mrf.mxu0
        %v3534 = vadd.f32 0.0, %v3533
        %v3535 = vpop.f32.mrf.mxu0
        %v3536 = vadd.f32 0.0, %v3535
        %3537 = vdwg.mxu0
        %3538 = vmatpush.bf16.msra.mxu0 0
        %3539 = vmatpush.bf16.msra.mxu0 0
        %3540 = vmatpush.bf16.msra.mxu0 0
        %3541 = vmatpush.bf16.msra.mxu0 0
        %3542 = vmatpush.bf16.msra.mxu0 0
        %3543 = vmatpush.bf16.msra.mxu0 0
        %3544 = vmatpush.bf16.msra.mxu0 %v3516
        %3545 = vmatpush.bf16.msra.mxu0 %v3515
        %3546 = vmatmul.bf16.gmra.mxu0 %v1241
        %v3547 = vpop.f32.mrf.mxu0
        %v3548 = vadd.f32 %v3529, %v3547
        %v3549 = vpop.f32.mrf.mxu0
        %v3550 = vadd.f32 %v3531, %v3549
        %3551 = vmatmul.bf16.gmra.mxu0 %v1244
        %v3552 = vpop.f32.mrf.mxu0
        %v3553 = vadd.f32 %v3534, %v3552
        %v3554 = vpop.f32.mrf.mxu0
        %v3555 = vadd.f32 %v3536, %v3554
        %3556 = vdwg.mxu0
        %3557 = vmatpush.bf16.msra.mxu0 0
        %3558 = vmatpush.bf16.msra.mxu0 0
        %3559 = vmatpush.bf16.msra.mxu0 0
        %3560 = vmatpush.bf16.msra.mxu0 0
        %3561 = vmatpush.bf16.msra.mxu0 0
        %3562 = vmatpush.bf16.msra.mxu0 0
        %3563 = vmatpush.bf16.msra.mxu0 %v3506
        %3564 = vmatpush.bf16.msra.mxu0 %v3505
        %3565 = vmatmul.bf16.gmra.mxu0 %v1241
        %v3566 = vpop.f32.mrf.mxu0
        %v3567 = vadd.f32 0.0, %v3566
        %v3568 = vpop.f32.mrf.mxu0
        %v3569 = vadd.f32 0.0, %v3568
        %3570 = vmatmul.bf16.gmra.mxu0 %v1244
        %v3571 = vpop.f32.mrf.mxu0
        %v3572 = vadd.f32 0.0, %v3571
        %v3573 = vpop.f32.mrf.mxu0
        %v3574 = vadd.f32 0.0, %v3573
        %3575 = vdwg.mxu0
        %v3576 = vadd.f32 %v3548, %v3567
        %v3577 = vadd.f32 %v3550, %v3569
        %v3578 = vadd.f32 %v3553, %v3572
        %v3579 = vadd.f32 %v3555, %v3574
        %v3580 = vmul.f32 %v3576, %v3576
        %v3581 = vmul.f32 %v3577, %v3577
        %v3582 = vmul.f32 %v3578, %v3578
        %v3583 = vmul.f32 %v3579, %v3579
        %v3584 = vadd.f32 %v3580, %v3582
        %v3585 = vadd.f32 %v3581, %v3583
        %v3586 = vadd.f32 %v3584, 1e-08
        %v3587 = vadd.f32 %v3585, 1e-08
        %v3588 = vlog2.pop %v3586
        %v3589 = vmul.f32 %v3588, 0.6931472
        %v3590 = vlog2.pop %v3587
        %v3591 = vmul.f32 %v3590, 0.6931472
        %v3592 = vadd.f32 %v3589, %v3591
        %3593 = vadd.xlane.f32.xlu0 %v3592
        %v3594 = vpop.xlane.xlu0 %3593
        %v3595 = vrot.slane %v3594, 4
        %v3596 = vadd.f32 %v3594, %v3595
        %v3597 = vrot.slane %v3596, 2
        %v3598 = vadd.f32 %v3596, %v3597
        %v3599 = vrot.slane %v3598, 1
        %v3600 = vadd.f32 %v3598, %v3599
        %s3601 = vtos %v3600
        %s3602 = ssub.f32 %s3601, -35072.977
        %s3603 = smul.f32 %s3602, 0.0069444445
        %v3604 = vstv %s3603
        %v3605 = vsub.f32 %v3589, %v3604
        %v3606 = vsub.f32 %v3591, %v3604
        %3607 = vst [vmem:[#allocation4] sm:$0xff] %v3605
        %3608 = vst [vmem:[#allocation4 + $0x8] sm:$0xff] %v3606
        %v3609 = vld [vmem:[#allocation4] sm:$0x1]
        %3610 = vst [vmem:[#allocation5] sm:$0x1] %v3609
        %v3611 = vld [vmem:[#allocation4 + $0x1] sm:$0x1]
        %3612 = vst [vmem:[#allocation5 + $0x8] sm:$0x1] %v3611
        %v3613 = vld [vmem:[#allocation4 + $0x2] sm:$0x1]
        %3614 = vst [vmem:[#allocation5 + $0x10] sm:$0x1] %v3613
        %v3615 = vld [vmem:[#allocation4 + $0x3] sm:$0x1]
        %3616 = vst [vmem:[#allocation5 + $0x18] sm:$0x1] %v3615
        %v3617 = vld [vmem:[#allocation4 + $0x4] sm:$0x1]
        %3618 = vst [vmem:[#allocation5 + $0x20] sm:$0x1] %v3617
        %v3619 = vld [vmem:[#allocation4 + $0x5] sm:$0x1]
        %3620 = vst [vmem:[#allocation5 + $0x28] sm:$0x1] %v3619
        %v3621 = vld [vmem:[#allocation4 + $0x6] sm:$0x1]
        %3622 = vst [vmem:[#allocation5 + $0x30] sm:$0x1] %v3621
        %v3623 = vld [vmem:[#allocation4 + $0x7] sm:$0x1]
        %3624 = vst [vmem:[#allocation5 + $0x38] sm:$0x1] %v3623
        %v3625 = vld [vmem:[#allocation4 + $0x8] sm:$0x1]
        %3626 = vst [vmem:[#allocation5 + $0x40] sm:$0x1] %v3625
        %v3627 = vld [vmem:[#allocation4 + $0x9] sm:$0x1]
        %3628 = vst [vmem:[#allocation5 + $0x48] sm:$0x1] %v3627
        %v3629 = vld [vmem:[#allocation4 + $0xa] sm:$0x1]
        %3630 = vst [vmem:[#allocation5 + $0x50] sm:$0x1] %v3629
        %v3631 = vld [vmem:[#allocation4 + $0xb] sm:$0x1]
        %3632 = vst [vmem:[#allocation5 + $0x58] sm:$0x1] %v3631
        %v3633 = vld [vmem:[#allocation4 + $0xc] sm:$0x1]
        %3634 = vst [vmem:[#allocation5 + $0x60] sm:$0x1] %v3633
        %v3635 = vld [vmem:[#allocation4 + $0xd] sm:$0x1]
        %3636 = vst [vmem:[#allocation5 + $0x68] sm:$0x1] %v3635
        %v3637 = vld [vmem:[#allocation4 + $0xe] sm:$0x1]
        %3638 = vst [vmem:[#allocation5 + $0x70] sm:$0x1] %v3637
        %v3639 = vld [vmem:[#allocation4 + $0xf] sm:$0x1]
        %3640 = vst [vmem:[#allocation5 + $0x78] sm:$0x1] %v3639
        %v3641 = vld [vmem:[#allocation5] sm:$0xff]
        %v3642 = vld [vmem:[#allocation5 + $0x8] sm:$0xff]
        %v3643 = vld [vmem:[#allocation5 + $0x10] sm:$0xff]
        %v3644 = vld [vmem:[#allocation5 + $0x18] sm:$0xff]
        %v3645 = vld [vmem:[#allocation5 + $0x20] sm:$0xff]
        %v3646 = vld [vmem:[#allocation5 + $0x28] sm:$0xff]
        %v3647 = vld [vmem:[#allocation5 + $0x30] sm:$0xff]
        %v3648 = vld [vmem:[#allocation5 + $0x38] sm:$0xff]
        %v3649 = vld [vmem:[#allocation5 + $0x40] sm:$0xff]
        %v3650 = vld [vmem:[#allocation5 + $0x48] sm:$0xff]
        %v3651 = vld [vmem:[#allocation5 + $0x50] sm:$0xff]
        %v3652 = vld [vmem:[#allocation5 + $0x58] sm:$0xff]
        %v3653 = vld [vmem:[#allocation5 + $0x60] sm:$0xff]
        %v3654 = vld [vmem:[#allocation5 + $0x68] sm:$0xff]
        %v3655 = vld [vmem:[#allocation5 + $0x70] sm:$0xff]
        %v3656 = vld [vmem:[#allocation5 + $0x78] sm:$0xff]
        %v3657 = vpack.c.bf16 %v3641, %v3641
        %v3658 = vpack.c.bf16 %v3642, %v3642
        %v3659 = vpack.c.bf16 %v3643, %v3643
        %v3660 = vpack.c.bf16 %v3644, %v3644
        %v3661 = vpack.c.bf16 %v3645, %v3645
        %v3662 = vpack.c.bf16 %v3646, %v3646
        %v3663 = vpack.c.bf16 %v3647, %v3647
        %v3664 = vpack.c.bf16 %v3648, %v3648
        %v3665 = vpack.c.bf16 %v3649, %v3649
        %v3666 = vpack.c.bf16 %v3650, %v3650
        %v3667 = vpack.c.bf16 %v3651, %v3651
        %v3668 = vpack.c.bf16 %v3652, %v3652
        %v3669 = vpack.c.bf16 %v3653, %v3653
        %v3670 = vpack.c.bf16 %v3654, %v3654
        %v3671 = vpack.c.bf16 %v3655, %v3655
        %v3672 = vpack.c.bf16 %v3656, %v3656
        %3673 = vmatpush.bf16.msra.mxu0 %v1900
        %3674 = vmatpush.bf16.msra.mxu0 %v1899
        %3675 = vmatpush.bf16.msra.mxu0 %v1898
        %3676 = vmatpush.bf16.msra.mxu0 %v1897
        %3677 = vmatpush.bf16.msra.mxu0 %v1896
        %3678 = vmatpush.bf16.msra.mxu0 %v1895
        %3679 = vmatpush.bf16.msra.mxu0 %v1894
        %3680 = vmatpush.bf16.msra.mxu0 %v1893
        %3681 = vmatmul.bf16.gmra.mxu0 %v3657
        %v3682 = vpop.f32.mrf.mxu0
        %v3683 = vadd.f32 0.0, %v3682
        %v3684 = vpop.f32.mrf.mxu0
        %3685 = vdwg.mxu0
        %3686 = vmatpush.bf16.msra.mxu0 %v1908
        %3687 = vmatpush.bf16.msra.mxu0 %v1907
        %3688 = vmatpush.bf16.msra.mxu0 %v1906
        %3689 = vmatpush.bf16.msra.mxu0 %v1905
        %3690 = vmatpush.bf16.msra.mxu0 %v1904
        %3691 = vmatpush.bf16.msra.mxu0 %v1903
        %3692 = vmatpush.bf16.msra.mxu0 %v1902
        %3693 = vmatpush.bf16.msra.mxu0 %v1901
        %3694 = vmatmul.bf16.gmra.mxu0 %v3658
        %v3695 = vpop.f32.mrf.mxu0
        %v3696 = vadd.f32 %v3683, %v3695
        %v3697 = vpop.f32.mrf.mxu0
        %3698 = vdwg.mxu0
        %3699 = vmatpush.bf16.msra.mxu0 %v1916
        %3700 = vmatpush.bf16.msra.mxu0 %v1915
        %3701 = vmatpush.bf16.msra.mxu0 %v1914
        %3702 = vmatpush.bf16.msra.mxu0 %v1913
        %3703 = vmatpush.bf16.msra.mxu0 %v1912
        %3704 = vmatpush.bf16.msra.mxu0 %v1911
        %3705 = vmatpush.bf16.msra.mxu0 %v1910
        %3706 = vmatpush.bf16.msra.mxu0 %v1909
        %3707 = vmatmul.bf16.gmra.mxu0 %v3659
        %v3708 = vpop.f32.mrf.mxu0
        %v3709 = vadd.f32 %v3696, %v3708
        %v3710 = vpop.f32.mrf.mxu0
        %3711 = vdwg.mxu0
        %3712 = vmatpush.bf16.msra.mxu0 %v1924
        %3713 = vmatpush.bf16.msra.mxu0 %v1923
        %3714 = vmatpush.bf16.msra.mxu0 %v1922
        %3715 = vmatpush.bf16.msra.mxu0 %v1921
        %3716 = vmatpush.bf16.msra.mxu0 %v1920
        %3717 = vmatpush.bf16.msra.mxu0 %v1919
        %3718 = vmatpush.bf16.msra.mxu0 %v1918
        %3719 = vmatpush.bf16.msra.mxu0 %v1917
        %3720 = vmatmul.bf16.gmra.mxu0 %v3660
        %v3721 = vpop.f32.mrf.mxu0
        %v3722 = vadd.f32 %v3709, %v3721
        %v3723 = vpop.f32.mrf.mxu0
        %3724 = vdwg.mxu0
        %3725 = vmatpush.bf16.msra.mxu0 %v1932
        %3726 = vmatpush.bf16.msra.mxu0 %v1931
        %3727 = vmatpush.bf16.msra.mxu0 %v1930
        %3728 = vmatpush.bf16.msra.mxu0 %v1929
        %3729 = vmatpush.bf16.msra.mxu0 %v1928
        %3730 = vmatpush.bf16.msra.mxu0 %v1927
        %3731 = vmatpush.bf16.msra.mxu0 %v1926
        %3732 = vmatpush.bf16.msra.mxu0 %v1925
        %3733 = vmatmul.bf16.gmra.mxu0 %v3661
        %v3734 = vpop.f32.mrf.mxu0
        %v3735 = vadd.f32 %v3722, %v3734
        %v3736 = vpop.f32.mrf.mxu0
        %3737 = vdwg.mxu0
        %3738 = vmatpush.bf16.msra.mxu0 %v1940
        %3739 = vmatpush.bf16.msra.mxu0 %v1939
        %3740 = vmatpush.bf16.msra.mxu0 %v1938
        %3741 = vmatpush.bf16.msra.mxu0 %v1937
        %3742 = vmatpush.bf16.msra.mxu0 %v1936
        %3743 = vmatpush.bf16.msra.mxu0 %v1935
        %3744 = vmatpush.bf16.msra.mxu0 %v1934
        %3745 = vmatpush.bf16.msra.mxu0 %v1933
        %3746 = vmatmul.bf16.gmra.mxu0 %v3662
        %v3747 = vpop.f32.mrf.mxu0
        %v3748 = vadd.f32 %v3735, %v3747
        %v3749 = vpop.f32.mrf.mxu0
        %3750 = vdwg.mxu0
        %3751 = vmatpush.bf16.msra.mxu0 %v1948
        %3752 = vmatpush.bf16.msra.mxu0 %v1947
        %3753 = vmatpush.bf16.msra.mxu0 %v1946
        %3754 = vmatpush.bf16.msra.mxu0 %v1945
        %3755 = vmatpush.bf16.msra.mxu0 %v1944
        %3756 = vmatpush.bf16.msra.mxu0 %v1943
        %3757 = vmatpush.bf16.msra.mxu0 %v1942
        %3758 = vmatpush.bf16.msra.mxu0 %v1941
        %3759 = vmatmul.bf16.gmra.mxu0 %v3663
        %v3760 = vpop.f32.mrf.mxu0
        %v3761 = vadd.f32 %v3748, %v3760
        %v3762 = vpop.f32.mrf.mxu0
        %3763 = vdwg.mxu0
        %3764 = vmatpush.bf16.msra.mxu0 %v1956
        %3765 = vmatpush.bf16.msra.mxu0 %v1955
        %3766 = vmatpush.bf16.msra.mxu0 %v1954
        %3767 = vmatpush.bf16.msra.mxu0 %v1953
        %3768 = vmatpush.bf16.msra.mxu0 %v1952
        %3769 = vmatpush.bf16.msra.mxu0 %v1951
        %3770 = vmatpush.bf16.msra.mxu0 %v1950
        %3771 = vmatpush.bf16.msra.mxu0 %v1949
        %3772 = vmatmul.bf16.gmra.mxu0 %v3664
        %v3773 = vpop.f32.mrf.mxu0
        %v3774 = vadd.f32 %v3761, %v3773
        %v3775 = vpop.f32.mrf.mxu0
        %3776 = vdwg.mxu0
        %3777 = vmatpush.bf16.msra.mxu0 %v1964
        %3778 = vmatpush.bf16.msra.mxu0 %v1963
        %3779 = vmatpush.bf16.msra.mxu0 %v1962
        %3780 = vmatpush.bf16.msra.mxu0 %v1961
        %3781 = vmatpush.bf16.msra.mxu0 %v1960
        %3782 = vmatpush.bf16.msra.mxu0 %v1959
        %3783 = vmatpush.bf16.msra.mxu0 %v1958
        %3784 = vmatpush.bf16.msra.mxu0 %v1957
        %3785 = vmatmul.bf16.gmra.mxu0 %v3665
        %v3786 = vpop.f32.mrf.mxu0
        %v3787 = vadd.f32 %v3774, %v3786
        %v3788 = vpop.f32.mrf.mxu0
        %3789 = vdwg.mxu0
        %3790 = vmatpush.bf16.msra.mxu0 %v1972
        %3791 = vmatpush.bf16.msra.mxu0 %v1971
        %3792 = vmatpush.bf16.msra.mxu0 %v1970
        %3793 = vmatpush.bf16.msra.mxu0 %v1969
        %3794 = vmatpush.bf16.msra.mxu0 %v1968
        %3795 = vmatpush.bf16.msra.mxu0 %v1967
        %3796 = vmatpush.bf16.msra.mxu0 %v1966
        %3797 = vmatpush.bf16.msra.mxu0 %v1965
        %3798 = vmatmul.bf16.gmra.mxu0 %v3666
        %v3799 = vpop.f32.mrf.mxu0
        %v3800 = vadd.f32 %v3787, %v3799
        %v3801 = vpop.f32.mrf.mxu0
        %3802 = vdwg.mxu0
        %3803 = vmatpush.bf16.msra.mxu0 %v1980
        %3804 = vmatpush.bf16.msra.mxu0 %v1979
        %3805 = vmatpush.bf16.msra.mxu0 %v1978
        %3806 = vmatpush.bf16.msra.mxu0 %v1977
        %3807 = vmatpush.bf16.msra.mxu0 %v1976
        %3808 = vmatpush.bf16.msra.mxu0 %v1975
        %3809 = vmatpush.bf16.msra.mxu0 %v1974
        %3810 = vmatpush.bf16.msra.mxu0 %v1973
        %3811 = vmatmul.bf16.gmra.mxu0 %v3667
        %v3812 = vpop.f32.mrf.mxu0
        %v3813 = vadd.f32 %v3800, %v3812
        %v3814 = vpop.f32.mrf.mxu0
        %3815 = vdwg.mxu0
        %3816 = vmatpush.bf16.msra.mxu0 %v1988
        %3817 = vmatpush.bf16.msra.mxu0 %v1987
        %3818 = vmatpush.bf16.msra.mxu0 %v1986
        %3819 = vmatpush.bf16.msra.mxu0 %v1985
        %3820 = vmatpush.bf16.msra.mxu0 %v1984
        %3821 = vmatpush.bf16.msra.mxu0 %v1983
        %3822 = vmatpush.bf16.msra.mxu0 %v1982
        %3823 = vmatpush.bf16.msra.mxu0 %v1981
        %3824 = vmatmul.bf16.gmra.mxu0 %v3668
        %v3825 = vpop.f32.mrf.mxu0
        %v3826 = vadd.f32 %v3813, %v3825
        %v3827 = vpop.f32.mrf.mxu0
        %3828 = vdwg.mxu0
        %3829 = vmatpush.bf16.msra.mxu0 %v1996
        %3830 = vmatpush.bf16.msra.mxu0 %v1995
        %3831 = vmatpush.bf16.msra.mxu0 %v1994
        %3832 = vmatpush.bf16.msra.mxu0 %v1993
        %3833 = vmatpush.bf16.msra.mxu0 %v1992
        %3834 = vmatpush.bf16.msra.mxu0 %v1991
        %3835 = vmatpush.bf16.msra.mxu0 %v1990
        %3836 = vmatpush.bf16.msra.mxu0 %v1989
        %3837 = vmatmul.bf16.gmra.mxu0 %v3669
        %v3838 = vpop.f32.mrf.mxu0
        %v3839 = vadd.f32 %v3826, %v3838
        %v3840 = vpop.f32.mrf.mxu0
        %3841 = vdwg.mxu0
        %3842 = vmatpush.bf16.msra.mxu0 %v2004
        %3843 = vmatpush.bf16.msra.mxu0 %v2003
        %3844 = vmatpush.bf16.msra.mxu0 %v2002
        %3845 = vmatpush.bf16.msra.mxu0 %v2001
        %3846 = vmatpush.bf16.msra.mxu0 %v2000
        %3847 = vmatpush.bf16.msra.mxu0 %v1999
        %3848 = vmatpush.bf16.msra.mxu0 %v1998
        %3849 = vmatpush.bf16.msra.mxu0 %v1997
        %3850 = vmatmul.bf16.gmra.mxu0 %v3670
        %v3851 = vpop.f32.mrf.mxu0
        %v3852 = vadd.f32 %v3839, %v3851
        %v3853 = vpop.f32.mrf.mxu0
        %3854 = vdwg.mxu0
        %3855 = vmatpush.bf16.msra.mxu0 %v2012
        %3856 = vmatpush.bf16.msra.mxu0 %v2011
        %3857 = vmatpush.bf16.msra.mxu0 %v2010
        %3858 = vmatpush.bf16.msra.mxu0 %v2009
        %3859 = vmatpush.bf16.msra.mxu0 %v2008
        %3860 = vmatpush.bf16.msra.mxu0 %v2007
        %3861 = vmatpush.bf16.msra.mxu0 %v2006
        %3862 = vmatpush.bf16.msra.mxu0 %v2005
        %3863 = vmatmul.bf16.gmra.mxu0 %v3671
        %v3864 = vpop.f32.mrf.mxu0
        %v3865 = vadd.f32 %v3852, %v3864
        %v3866 = vpop.f32.mrf.mxu0
        %3867 = vdwg.mxu0
        %3868 = vmatpush.bf16.msra.mxu0 %v2020
        %3869 = vmatpush.bf16.msra.mxu0 %v2019
        %3870 = vmatpush.bf16.msra.mxu0 %v2018
        %3871 = vmatpush.bf16.msra.mxu0 %v2017
        %3872 = vmatpush.bf16.msra.mxu0 %v2016
        %3873 = vmatpush.bf16.msra.mxu0 %v2015
        %3874 = vmatpush.bf16.msra.mxu0 %v2014
        %3875 = vmatpush.bf16.msra.mxu0 %v2013
        %3876 = vmatmul.bf16.gmra.mxu0 %v3672
        %v3877 = vpop.f32.mrf.mxu0
        %v3878 = vadd.f32 %v3865, %v3877
        %v3879 = vpop.f32.mrf.mxu0
        %3880 = vdwg.mxu0
        %3881 = vmatpush.bf16.msra.mxu0 %v2876
        %3882 = vmatpush.bf16.msra.mxu0 %v2875
        %3883 = vmatpush.bf16.msra.mxu0 %v2874
        %3884 = vmatpush.bf16.msra.mxu0 %v2873
        %3885 = vmatpush.bf16.msra.mxu0 %v2872
        %3886 = vmatpush.bf16.msra.mxu0 %v2871
        %3887 = vmatpush.bf16.msra.mxu0 %v2870
        %3888 = vmatpush.bf16.msra.mxu0 %v2869
        %3889 = vmatmul.bf16.gmra.mxu0 %v3657
        %v3890 = vpop.f32.mrf.mxu0
        %v3891 = vadd.f32 %v3878, %v3890
        %v3892 = vpop.f32.mrf.mxu0
        %3893 = vdwg.mxu0
        %3894 = vmatpush.bf16.msra.mxu0 %v2884
        %3895 = vmatpush.bf16.msra.mxu0 %v2883
        %3896 = vmatpush.bf16.msra.mxu0 %v2882
        %3897 = vmatpush.bf16.msra.mxu0 %v2881
        %3898 = vmatpush.bf16.msra.mxu0 %v2880
        %3899 = vmatpush.bf16.msra.mxu0 %v2879
        %3900 = vmatpush.bf16.msra.mxu0 %v2878
        %3901 = vmatpush.bf16.msra.mxu0 %v2877
        %3902 = vmatmul.bf16.gmra.mxu0 %v3658
        %v3903 = vpop.f32.mrf.mxu0
        %v3904 = vadd.f32 %v3891, %v3903
        %v3905 = vpop.f32.mrf.mxu0
        %3906 = vdwg.mxu0
        %3907 = vmatpush.bf16.msra.mxu0 %v2892
        %3908 = vmatpush.bf16.msra.mxu0 %v2891
        %3909 = vmatpush.bf16.msra.mxu0 %v2890
        %3910 = vmatpush.bf16.msra.mxu0 %v2889
        %3911 = vmatpush.bf16.msra.mxu0 %v2888
        %3912 = vmatpush.bf16.msra.mxu0 %v2887
        %3913 = vmatpush.bf16.msra.mxu0 %v2886
        %3914 = vmatpush.bf16.msra.mxu0 %v2885
        %3915 = vmatmul.bf16.gmra.mxu0 %v3659
        %v3916 = vpop.f32.mrf.mxu0
        %v3917 = vadd.f32 %v3904, %v3916
        %v3918 = vpop.f32.mrf.mxu0
        %3919 = vdwg.mxu0
        %3920 = vmatpush.bf16.msra.mxu0 %v2900
        %3921 = vmatpush.bf16.msra.mxu0 %v2899
        %3922 = vmatpush.bf16.msra.mxu0 %v2898
        %3923 = vmatpush.bf16.msra.mxu0 %v2897
        %3924 = vmatpush.bf16.msra.mxu0 %v2896
        %3925 = vmatpush.bf16.msra.mxu0 %v2895
        %3926 = vmatpush.bf16.msra.mxu0 %v2894
        %3927 = vmatpush.bf16.msra.mxu0 %v2893
        %3928 = vmatmul.bf16.gmra.mxu0 %v3660
        %v3929 = vpop.f32.mrf.mxu0
        %v3930 = vadd.f32 %v3917, %v3929
        %v3931 = vpop.f32.mrf.mxu0
        %3932 = vdwg.mxu0
        %3933 = vmatpush.bf16.msra.mxu0 %v2908
        %3934 = vmatpush.bf16.msra.mxu0 %v2907
        %3935 = vmatpush.bf16.msra.mxu0 %v2906
        %3936 = vmatpush.bf16.msra.mxu0 %v2905
        %3937 = vmatpush.bf16.msra.mxu0 %v2904
        %3938 = vmatpush.bf16.msra.mxu0 %v2903
        %3939 = vmatpush.bf16.msra.mxu0 %v2902
        %3940 = vmatpush.bf16.msra.mxu0 %v2901
        %3941 = vmatmul.bf16.gmra.mxu0 %v3661
        %v3942 = vpop.f32.mrf.mxu0
        %v3943 = vadd.f32 %v3930, %v3942
        %v3944 = vpop.f32.mrf.mxu0
        %3945 = vdwg.mxu0
        %3946 = vmatpush.bf16.msra.mxu0 %v2916
        %3947 = vmatpush.bf16.msra.mxu0 %v2915
        %3948 = vmatpush.bf16.msra.mxu0 %v2914
        %3949 = vmatpush.bf16.msra.mxu0 %v2913
        %3950 = vmatpush.bf16.msra.mxu0 %v2912
        %3951 = vmatpush.bf16.msra.mxu0 %v2911
        %3952 = vmatpush.bf16.msra.mxu0 %v2910
        %3953 = vmatpush.bf16.msra.mxu0 %v2909
        %3954 = vmatmul.bf16.gmra.mxu0 %v3662
        %v3955 = vpop.f32.mrf.mxu0
        %v3956 = vadd.f32 %v3943, %v3955
        %v3957 = vpop.f32.mrf.mxu0
        %3958 = vdwg.mxu0
        %3959 = vmatpush.bf16.msra.mxu0 %v2924
        %3960 = vmatpush.bf16.msra.mxu0 %v2923
        %3961 = vmatpush.bf16.msra.mxu0 %v2922
        %3962 = vmatpush.bf16.msra.mxu0 %v2921
        %3963 = vmatpush.bf16.msra.mxu0 %v2920
        %3964 = vmatpush.bf16.msra.mxu0 %v2919
        %3965 = vmatpush.bf16.msra.mxu0 %v2918
        %3966 = vmatpush.bf16.msra.mxu0 %v2917
        %3967 = vmatmul.bf16.gmra.mxu0 %v3663
        %v3968 = vpop.f32.mrf.mxu0
        %v3969 = vadd.f32 %v3956, %v3968
        %v3970 = vpop.f32.mrf.mxu0
        %3971 = vdwg.mxu0
        %3972 = vmatpush.bf16.msra.mxu0 %v2932
        %3973 = vmatpush.bf16.msra.mxu0 %v2931
        %3974 = vmatpush.bf16.msra.mxu0 %v2930
        %3975 = vmatpush.bf16.msra.mxu0 %v2929
        %3976 = vmatpush.bf16.msra.mxu0 %v2928
        %3977 = vmatpush.bf16.msra.mxu0 %v2927
        %3978 = vmatpush.bf16.msra.mxu0 %v2926
        %3979 = vmatpush.bf16.msra.mxu0 %v2925
        %3980 = vmatmul.bf16.gmra.mxu0 %v3664
        %v3981 = vpop.f32.mrf.mxu0
        %v3982 = vadd.f32 %v3969, %v3981
        %v3983 = vpop.f32.mrf.mxu0
        %3984 = vdwg.mxu0
        %3985 = vmatpush.bf16.msra.mxu0 %v2940
        %3986 = vmatpush.bf16.msra.mxu0 %v2939
        %3987 = vmatpush.bf16.msra.mxu0 %v2938
        %3988 = vmatpush.bf16.msra.mxu0 %v2937
        %3989 = vmatpush.bf16.msra.mxu0 %v2936
        %3990 = vmatpush.bf16.msra.mxu0 %v2935
        %3991 = vmatpush.bf16.msra.mxu0 %v2934
        %3992 = vmatpush.bf16.msra.mxu0 %v2933
        %3993 = vmatmul.bf16.gmra.mxu0 %v3665
        %v3994 = vpop.f32.mrf.mxu0
        %v3995 = vadd.f32 %v3982, %v3994
        %v3996 = vpop.f32.mrf.mxu0
        %3997 = vdwg.mxu0
        %3998 = vmatpush.bf16.msra.mxu0 %v2948
        %3999 = vmatpush.bf16.msra.mxu0 %v2947
        %4000 = vmatpush.bf16.msra.mxu0 %v2946
        %4001 = vmatpush.bf16.msra.mxu0 %v2945
        %4002 = vmatpush.bf16.msra.mxu0 %v2944
        %4003 = vmatpush.bf16.msra.mxu0 %v2943
        %4004 = vmatpush.bf16.msra.mxu0 %v2942
        %4005 = vmatpush.bf16.msra.mxu0 %v2941
        %4006 = vmatmul.bf16.gmra.mxu0 %v3666
        %v4007 = vpop.f32.mrf.mxu0
        %v4008 = vadd.f32 %v3995, %v4007
        %v4009 = vpop.f32.mrf.mxu0
        %4010 = vdwg.mxu0
        %4011 = vmatpush.bf16.msra.mxu0 %v2956
        %4012 = vmatpush.bf16.msra.mxu0 %v2955
        %4013 = vmatpush.bf16.msra.mxu0 %v2954
        %4014 = vmatpush.bf16.msra.mxu0 %v2953
        %4015 = vmatpush.bf16.msra.mxu0 %v2952
        %4016 = vmatpush.bf16.msra.mxu0 %v2951
        %4017 = vmatpush.bf16.msra.mxu0 %v2950
        %4018 = vmatpush.bf16.msra.mxu0 %v2949
        %4019 = vmatmul.bf16.gmra.mxu0 %v3667
        %v4020 = vpop.f32.mrf.mxu0
        %v4021 = vadd.f32 %v4008, %v4020
        %v4022 = vpop.f32.mrf.mxu0
        %4023 = vdwg.mxu0
        %4024 = vmatpush.bf16.msra.mxu0 %v2964
        %4025 = vmatpush.bf16.msra.mxu0 %v2963
        %4026 = vmatpush.bf16.msra.mxu0 %v2962
        %4027 = vmatpush.bf16.msra.mxu0 %v2961
        %4028 = vmatpush.bf16.msra.mxu0 %v2960
        %4029 = vmatpush.bf16.msra.mxu0 %v2959
        %4030 = vmatpush.bf16.msra.mxu0 %v2958
        %4031 = vmatpush.bf16.msra.mxu0 %v2957
        %4032 = vmatmul.bf16.gmra.mxu0 %v3668
        %v4033 = vpop.f32.mrf.mxu0
        %v4034 = vadd.f32 %v4021, %v4033
        %v4035 = vpop.f32.mrf.mxu0
        %4036 = vdwg.mxu0
        %4037 = vmatpush.bf16.msra.mxu0 %v2972
        %4038 = vmatpush.bf16.msra.mxu0 %v2971
        %4039 = vmatpush.bf16.msra.mxu0 %v2970
        %4040 = vmatpush.bf16.msra.mxu0 %v2969
        %4041 = vmatpush.bf16.msra.mxu0 %v2968
        %4042 = vmatpush.bf16.msra.mxu0 %v2967
        %4043 = vmatpush.bf16.msra.mxu0 %v2966
        %4044 = vmatpush.bf16.msra.mxu0 %v2965
        %4045 = vmatmul.bf16.gmra.mxu0 %v3669
        %v4046 = vpop.f32.mrf.mxu0
        %v4047 = vadd.f32 %v4034, %v4046
        %v4048 = vpop.f32.mrf.mxu0
        %4049 = vdwg.mxu0
        %4050 = vmatpush.bf16.msra.mxu0 %v2980
        %4051 = vmatpush.bf16.msra.mxu0 %v2979
        %4052 = vmatpush.bf16.msra.mxu0 %v2978
        %4053 = vmatpush.bf16.msra.mxu0 %v2977
        %4054 = vmatpush.bf16.msra.mxu0 %v2976
        %4055 = vmatpush.bf16.msra.mxu0 %v2975
        %4056 = vmatpush.bf16.msra.mxu0 %v2974
        %4057 = vmatpush.bf16.msra.mxu0 %v2973
        %4058 = vmatmul.bf16.gmra.mxu0 %v3670
        %v4059 = vpop.f32.mrf.mxu0
        %v4060 = vadd.f32 %v4047, %v4059
        %v4061 = vpop.f32.mrf.mxu0
        %4062 = vdwg.mxu0
        %4063 = vmatpush.bf16.msra.mxu0 %v2988
        %4064 = vmatpush.bf16.msra.mxu0 %v2987
        %4065 = vmatpush.bf16.msra.mxu0 %v2986
        %4066 = vmatpush.bf16.msra.mxu0 %v2985
        %4067 = vmatpush.bf16.msra.mxu0 %v2984
        %4068 = vmatpush.bf16.msra.mxu0 %v2983
        %4069 = vmatpush.bf16.msra.mxu0 %v2982
        %4070 = vmatpush.bf16.msra.mxu0 %v2981
        %4071 = vmatmul.bf16.gmra.mxu0 %v3671
        %v4072 = vpop.f32.mrf.mxu0
        %v4073 = vadd.f32 %v4060, %v4072
        %v4074 = vpop.f32.mrf.mxu0
        %4075 = vdwg.mxu0
        %4076 = vmatpush.bf16.msra.mxu0 %v2996
        %4077 = vmatpush.bf16.msra.mxu0 %v2995
        %4078 = vmatpush.bf16.msra.mxu0 %v2994
        %4079 = vmatpush.bf16.msra.mxu0 %v2993
        %4080 = vmatpush.bf16.msra.mxu0 %v2992
        %4081 = vmatpush.bf16.msra.mxu0 %v2991
        %4082 = vmatpush.bf16.msra.mxu0 %v2990
        %4083 = vmatpush.bf16.msra.mxu0 %v2989
        %4084 = vmatmul.bf16.gmra.mxu0 %v3672
        %v4085 = vpop.f32.mrf.mxu0
        %v4086 = vadd.f32 %v4073, %v4085
        %v4087 = vpop.f32.mrf.mxu0
        %4088 = vdwg.mxu0
        %v4089 = vsel %vm994, %v4086, 3e+38
        %4090 = vmin.xlane.f32.xlu0 %v4089
        %v4091 = vpop.xlane.xlu0 %4090
        %v4092 = vsub.f32 %v4086, %v4091
        %v4093 = vsel %vm994, %v4092, -3e+38
        %4094 = vmax.xlane.f32.xlu0 %v4093
        %v4095 = vpop.xlane.xlu0 %4094
        %v4096 = vmax.f32 %v4095, 1e-30
        %v4097 = vrcp.pop %v4096
        %v4098 = vmul.f32 %v4096, %v4097
        %v4099 = vsub.f32 1.0, %v4098
        %v4100 = vmul.f32 %v4097, %v4099
        %v4101 = vadd.f32 %v4097, %v4100
        %vm4102 = vweird.f32 %v4096
        %vm4103 = vweird.f32 %v4097
        %vm4104 = vmor %vm4102, %vm4103
        %v4105 = vsel %vm4104, %v4097, %v4101
        %v4106 = vand.u32 2147483647, %v4096
        %vm4107 = vcmp.eq.f32.partialorder %v4106, 8.507059e+37
        %v4108 = vand.u32 %v4096, 2147483648
        %v4109 = vor.u32 1.1754944e-38, %v4108
        %v4110 = vsel %vm4107, %v4109, %v4105
        %v4111 = vmul.f32 %v4092, %v4110
        %v4112 = vsel %vm994, %v4111, 0.0
        %v4113 = vsub.f32 %v3356, %v4112
        %v4114 = vmul.f32 %v4113, %v4113
        %4115 = vadd.xlane.f32.xlu0 %v4114
        %v4116 = vpop.xlane.xlu0 %4115
        %v4117 = vrot.slane %v4116, 4
        %v4118 = vadd.f32 %v4116, %v4117
        %v4119 = vrot.slane %v4118, 2
        %v4120 = vadd.f32 %v4118, %v4119
        %v4121 = vrot.slane %v4120, 1
        %v4122 = vadd.f32 %v4120, %v4121
        %s4123 = vtos %v4122
        %v4124 = vstv %s4123
        %4125 = vst [vmem:[%s466] sm:$0xff] %v4124
        %p4126 = scmp.lt.s32.totalorder %s28, 1
        %s4127 = scalar_select %p4126, %s28, 1
        %s4128 = smul.addr %s4127, 8
        %s4129 = scalar_lea.vmem %s8, %s4128
        // Predicated region
        $region85: #{_lambda_.1} parent=51 // pred_check
          %p4130 = pneg %p224
        $region86: #{_lambda_.1} parent=51 // pred_check_branch
          %4132 = sbr.rel (%p4130) target = $region88
        $region87: #{_lambda_.1} parent=51 // pred_region
          _
        $region88: #{_lambda_.1} parent=51 // pred_fallthru
          _
      $region52: #{_lambda_.1} parent=5 // pred_fallthru
        _
      %p4133 = scmp.le.s32.totalorder 2, %s23
      // Predicated region
      $region89: #{_lambda_.1} parent=5 // pred_check
        %p4134 = pneg %p4133
      $region90: #{_lambda_.1} parent=5 // pred_check_branch
        %4136 = sbr.rel (%p4134) target = $region92
      $region91: #{_lambda_.1} parent=5 // pred_region
        %s4137 = ssub.s32 %s23, 2
        // Predicated region
        $region93: #{_lambda_.1} parent=91 // pred_check
          %p4138 = pneg %p230
        $region94: #{_lambda_.1} parent=91 // pred_check_branch
          %4140 = sbr.rel (%p4138) target = $region96
        $region95: #{_lambda_.1} parent=91 // pred_region
          %p4141 = scmp.lt.s32.totalorder %s29, 1
          %s4142 = scalar_select %p4141, %s29, 1
          %s4143 = smul.addr %s4142, 8
          %s4144 = scalar_lea.vmem %s8, %s4143
        $region96: #{_lambda_.1} parent=91 // pred_fallthru
          _
      $region92: #{_lambda_.1} parent=5 // pred_fallthru
        _
    $region6: #{_lambda_.1} parent=1 // loop_footer
      %s27 = sadd.s32 1, %s23
    $region7: #{_lambda_.1} parent=1 // loop_footer_branch
      %22 = sbr.rel target = $region3
    $region8: #{_lambda_.1} parent=1 // loop_exit
      _
    %4145 = vsyncpa [#allocation7], 1
    %s4146 = scalar_lea.sflag [#allocation7], 1
    %4147 = vsyncpa %s4146, 1
    %4148 = vsyncpa [#allocation9], 1
    %s4149 = scalar_lea.sflag [#allocation9], 1
    %4150 = vsyncpa %s4149, 1
    %4151 = vsyncpa [#allocation12], 1
    %4152 = vsyncpa [#allocation15], 1
    %4153 = vsyncpa [#allocation18], 1

</llo_original>
